<compile_context>
chip_gen: v5e
topology: v5e:2x2
jax: 0.10.0
libtpu: 0.0.40
codegen_flags: <defaults>
</compile_context>

<pallas_src>
import math
import functools

import jax
import jax.numpy as jnp
from jax.experimental import pallas as pl
from jax.experimental.pallas import tpu as pltpu


def _encoder_layer_kernel(n_heads, head_dim, kv_chunk, eps, emit_weights,
                          x_full_ref, x_tile_ref, bias_ref,
                          ln1_g_ref, ln1_b_ref,
                          wq_ref, bq_ref, wkv_ref, bkv_ref,
                          wo_ref, bo_ref,
                          ln2_g_ref, ln2_b_ref,
                          w1_ref, b1_ref, w2_ref, b2_ref,
                          *rest):
    """Grid = (batch, query-tile)."""
    if emit_weights:
        out_ref, attw_ref, k_scratch, v_scratch, ctx_scratch = rest
    else:
        out_ref, k_scratch, v_scratch, ctx_scratch = rest
        attw_ref = None

    cd = wq_ref.dtype                       # matmul operand dtype (bf16 or f32)
    qt = pl.program_id(1)
    seq = x_full_ref.shape[1]
    hidden = x_full_ref.shape[2]

    def layernorm(v, g, b):
        mu = jnp.mean(v, axis=-1, keepdims=True)
        var = jnp.mean((v - mu) ** 2, axis=-1, keepdims=True)
        return (v - mu) * jax.lax.rsqrt(var + eps) * g + b

    # ---- once per batch element: K / V for the full sequence (flat (S, H)) ----
    @pl.when(qt == 0)
    def _():
        for c in range(seq // kv_chunk):            # static, short unrolled loop
            r0 = c * kv_chunk
            xc = x_full_ref[0, r0:r0 + kv_chunk, :].astype(jnp.float32)
            yc = layernorm(xc, ln1_g_ref[...], ln1_b_ref[...])
            kv = jnp.dot(yc.astype(cd), wkv_ref[...],
                         preferred_element_type=jnp.float32) + bkv_ref[...]
            k_scratch[r0:r0 + kv_chunk, :] = kv[:, :hidden].astype(k_scratch.dtype)
            v_scratch[r0:r0 + kv_chunk, :] = kv[:, hidden:].astype(v_scratch.dtype)

    # ---- per query tile ----
    x_t = x_tile_ref[0].astype(jnp.float32)                     # (TQ, H)
    y_t = layernorm(x_t, ln1_g_ref[...], ln1_b_ref[...])
    scale = 1.0 / math.sqrt(head_dim)
    q_flat = (jnp.dot(y_t.astype(cd), wq_ref[...],
                      preferred_element_type=jnp.float32) + bq_ref[...]) * scale
    q_flat = q_flat.astype(cd)                                  # (TQ, H)
    bias_row = bias_ref[0, 0]                                   # (1, S), f32

    for h in range(n_heads):                                    # static unrolled
        sl = slice(h * head_dim, (h + 1) * head_dim)
        # logits_h = Q_h @ K_h^T via dot_general (contract both minor dims).
        logits = jax.lax.dot_general(
            q_flat[:, sl], k_scratch[:, sl],
            (((1,), (1,)), ((), ())),
            preferred_element_type=jnp.float32) + bias_row       # (TQ, S)
        m = jnp.max(logits, axis=-1, keepdims=True)
        e = jnp.exp(logits - m)
        inv = 1.0 / jnp.sum(e, axis=-1, keepdims=True)           # exact: rows sum to 1
        p = e * inv
        if emit_weights:
            attw_ref[0, h] = p.astype(attw_ref.dtype)
        ctx_h = jnp.dot(p.astype(cd), v_scratch[:, sl],
                        preferred_element_type=jnp.float32)      # (TQ, hd)
        ctx_scratch[:, sl] = ctx_h.astype(ctx_scratch.dtype)

    # Fused output projection: one H-deep contraction does the head sum.
    att = jnp.dot(ctx_scratch[...], wo_ref[...],
                  preferred_element_type=jnp.float32) + bo_ref[...]
    x2 = att + x_t                                # residual (eval-mode dropout = id)

    y2 = layernorm(x2, ln2_g_ref[...], ln2_b_ref[...])
    h1 = jnp.maximum(jnp.dot(y2.astype(cd), w1_ref[...],
                             preferred_element_type=jnp.float32) + b1_ref[...],
                     0.0)                                        # ReLU (dropout = id)
    ffn = jnp.dot(h1.astype(cd), w2_ref[...],
                  preferred_element_type=jnp.float32) + b2_ref[...]
    out_ref[0] = (ffn + x2).astype(out_ref.dtype)


def _pick_q_tile(S, vmem_cap):
    if S <= 512:
        return S
    cands = (1024, 512, 256, 128) if vmem_cap >= 100 * 2**20 else (512, 256, 128)
    for t in cands:
        if S % t == 0:
            return t
    return S


def _pick_kv_chunk(S):
    if S <= 512:
        return S
    for t in (512, 256, 128):
        if S % t == 0:
            return t
    return S


def encoder_layer_pallas(x, bias, params, n_heads, *,
                         compute_dtype=jnp.bfloat16, q_tile=None, kv_chunk=None,
                         weights_dtype=jnp.float32, return_weights=True,
                         single_buffer_weights=True, eps=1e-5):
    B, S, H = x.shape
    F = params["w1"].shape[1]
    assert H % n_heads == 0
    hd = H // n_heads

    if bias is None:
        bias = jnp.zeros((B, 1, 1, S), jnp.float32)
    bias = bias.astype(jnp.float32)

    # Generation-aware VMEM capacity (64 MiB on v7x, 128 MiB on v5e/v6e).
    try:
        vmem_cap = int(pltpu.get_tpu_info().vmem_capacity_bytes)
    except Exception:
        vmem_cap = 128 * 2**20

    if q_tile is None:
        q_tile = _pick_q_tile(S, vmem_cap)
    assert S % q_tile == 0 and (q_tile == S or q_tile % 8 == 0)
    nqt = S // q_tile
    if kv_chunk is None:
        kv_chunk = _pick_kv_chunk(S)
    assert S % kv_chunk == 0 and (kv_chunk == S or kv_chunk % 8 == 0)

    cd = jnp.dtype(compute_dtype)
    wdt = jnp.dtype(weights_dtype)

    # Fused / cast weight layouts, prepared once outside the kernel (pure JAX).
    wq = params["wq"].astype(cd)
    bq = params["bq"].astype(jnp.float32)
    wkv = jnp.concatenate([params["wk"], params["wv"]], axis=1).astype(cd)
    bkv = jnp.concatenate([params["bk"], params["bv"]], axis=1).astype(jnp.float32)
    wo = params["wo"].astype(cd)
    bo = params["bo"].astype(jnp.float32)
    w1 = params["w1"].astype(cd)
    b1 = params["b1"].astype(jnp.float32)
    w2 = params["w2"].astype(cd)
    b2 = params["b2"].astype(jnp.float32)
    ln1_g = params["ln1_g"].astype(jnp.float32)
    ln1_b = params["ln1_b"].astype(jnp.float32)
    ln2_g = params["ln2_g"].astype(jnp.float32)
    ln2_b = params["ln2_b"].astype(jnp.float32)

    kernel = functools.partial(_encoder_layer_kernel, n_heads, hd, kv_chunk, eps,
                               return_weights)

    isz = cd.itemsize
    xsz = jnp.dtype(x.dtype).itemsize

    def vmem_estimate(wbuf):
        weight_bytes = (4 * H * H + 2 * H * F) * isz + (11 * H + F) * 4
        blocks = 2 * (S * H * xsz + 2 * q_tile * H * xsz + S * 4)
        if return_weights:
            blocks += 2 * n_heads * q_tile * S * wdt.itemsize
        scratch = (2 * S * H + q_tile * H) * isz
        interm = 3 * q_tile * S * 4 + q_tile * (4 * H + F) * 4 + kv_chunk * 5 * H * 4
        return wbuf * weight_bytes + blocks + scratch + interm

    cost = pl.CostEstimate(
        flops=int(B * (8 * S * H * H + 4 * S * S * H + 4 * S * H * F)),
        transcendentals=int(B * n_heads * S * S + 2 * B * S),
        bytes_accessed=int((4 * H * H + 2 * H * F) * isz + (11 * H + F) * 4
                           + 3 * B * S * H * xsz + B * S * 4
                           + (B * n_heads * S * S * wdt.itemsize
                              if return_weights else 0)),
    )

    x_args = (x, x, bias, ln1_g, ln1_b, wq, bq, wkv, bkv, wo, bo,
              ln2_g, ln2_b, w1, b1, w2, b2)

    def build(single_buf):
        const_kwargs = {}
        if single_buf:
            const_kwargs["pipeline_mode"] = pl.Buffered(1)   # weights: 1 buffer

        def const_spec(shape):
            z = (0,) * len(shape)
            return pl.BlockSpec(shape, lambda b, q, _z=z: _z, **const_kwargs)

        in_specs = [
            pl.BlockSpec((1, S, H), lambda b, q: (b, 0, 0)),        # x (full seq, K/V)
            pl.BlockSpec((1, q_tile, H), lambda b, q: (b, q, 0)),   # x (query tile)
            pl.BlockSpec((1, 1, 1, S), lambda b, q: (b, 0, 0, 0)),  # additive bias
            const_spec((1, H)), const_spec((1, H)),                 # ln1 g, b
            const_spec((H, H)), const_spec((1, H)),                 # Wq, bq
            const_spec((H, 2 * H)), const_spec((1, 2 * H)),         # Wk|Wv, bk|bv
            const_spec((H, H)), const_spec((1, H)),                 # Wo, bo
            const_spec((1, H)), const_spec((1, H)),                 # ln2 g, b
            const_spec((H, F)), const_spec((1, F)),                 # W1, b1
            const_spec((F, H)), const_spec((1, H)),                 # W2, b2
        ]
        out_specs = [pl.BlockSpec((1, q_tile, H), lambda b, q: (b, q, 0))]
        out_shape = [jax.ShapeDtypeStruct((B, S, H), x.dtype)]
        if return_weights:
            out_specs.append(pl.BlockSpec((1, n_heads, q_tile, S),
                                          lambda b, q: (b, 0, q, 0)))
            out_shape.append(jax.ShapeDtypeStruct((B, n_heads, S, S), wdt))

        wbuf = 1 if single_buf else 2
        est = vmem_estimate(wbuf)
        vmem_limit = int(min(max(32 * 2**20, 1.4 * est + 4 * 2**20),
                             vmem_cap - 8 * 2**20))
        vmem_limit = max(vmem_limit, 16 * 2**20)

        return pl.pallas_call(
            kernel,
            grid=(B, nqt),
            in_specs=in_specs,
            out_specs=out_specs,
            out_shape=out_shape,
            scratch_shapes=[pltpu.VMEM((S, H), cd),        # K (flat, per batch)
                            pltpu.VMEM((S, H), cd),        # V (flat, per batch)
                            pltpu.VMEM((q_tile, H), cd)],  # per-tile context
            compiler_params=pltpu.CompilerParams(
                # NOTE: q-tile axis must stay "arbitrary": every q-tile of a
                # batch element reuses the K/V scratch filled at qt == 0.
                dimension_semantics=("parallel", "arbitrary"),
                vmem_limit_bytes=vmem_limit),
            cost_estimate=cost,
        )

    def run(single_buf):
        res = build(single_buf)(*x_args)
        jax.block_until_ready(res)
        return res

    if single_buffer_weights and hasattr(pl, "Buffered"):
        try:
            res = run(True)
        except Exception:
            res = run(False)      # fall back to default double-buffered weights
    else:
        res = run(False)

    if return_weights:
        return res[0], res[1]
    return res[0]


def encoder_layer_ref(x, bias, p, n_heads):
    """Pure-JAX f32 reference of the same forward pass (eval mode)."""
    B, S, H = x.shape
    dh = H // n_heads

    def ln(v, g, b):
        mu = v.mean(-1, keepdims=True)
        var = ((v - mu) ** 2).mean(-1, keepdims=True)
        return (v - mu) / jnp.sqrt(var + 1e-5) * g + b

    y = ln(x, p["ln1_g"], p["ln1_b"])
    q = y @ p["wq"] + p["bq"]
    k = y @ p["wk"] + p["bk"]
    v = y @ p["wv"] + p["bv"]

    def split(t):
        return t.reshape(B, S, n_heads, dh).transpose(0, 2, 1, 3)

    qh, kh, vh = split(q), split(k), split(v)
    logits = jnp.einsum("bhqd,bhkd->bhqk", qh / math.sqrt(dh), kh) + bias
    w = jax.nn.softmax(logits, axis=-1)
    ctx = jnp.einsum("bhqk,bhkd->bhqd", w, vh).transpose(0, 2, 1, 3).reshape(B, S, H)
    att = ctx @ p["wo"] + p["bo"]
    x2 = att + x
    y2 = ln(x2, p["ln2_g"], p["ln2_b"])
    ffn = jnp.maximum(y2 @ p["w1"] + p["b1"], 0.0) @ p["w2"] + p["b2"]
    return ffn + x2, w


if __name__ == "__main__":
    B, S, H, NH, F = 2, 8, 32, 4, 64

    key = jax.random.PRNGKey(0)
    kp, kx = jax.random.split(key)
    ks = jax.random.split(kp, 12)
    s = 0.05
    params = {
        "ln1_g": jnp.ones((1, H), jnp.float32),
        "ln1_b": jnp.zeros((1, H), jnp.float32),
        "wq": s * jax.random.normal(ks[0], (H, H), jnp.float32),
        "bq": s * jax.random.normal(ks[1], (1, H), jnp.float32),
        "wk": s * jax.random.normal(ks[2], (H, H), jnp.float32),
        "bk": s * jax.random.normal(ks[3], (1, H), jnp.float32),
        "wv": s * jax.random.normal(ks[4], (H, H), jnp.float32),
        "bv": s * jax.random.normal(ks[5], (1, H), jnp.float32),
        "wo": s * jax.random.normal(ks[6], (H, H), jnp.float32),
        "bo": s * jax.random.normal(ks[7], (1, H), jnp.float32),
        "ln2_g": jnp.ones((1, H), jnp.float32),
        "ln2_b": jnp.zeros((1, H), jnp.float32),
        "w1": s * jax.random.normal(ks[8], (H, F), jnp.float32),
        "b1": s * jax.random.normal(ks[9], (1, F), jnp.float32),
        "w2": s * jax.random.normal(ks[10], (F, H), jnp.float32),
        "b2": s * jax.random.normal(ks[11], (1, H), jnp.float32),
    }

    x = jax.random.normal(kx, (B, S, H), jnp.float32)
    # forward(x, bias=None) -> zero additive attention bias (T2T shape).
    bias = jnp.zeros((B, 1, 1, S), jnp.float32)

    out_ref_val, w_ref_val = encoder_layer_ref(x, bias, params, NH)

    # 1) f32-operand path: near-exact vs the f32 reference.
    out32, w32 = encoder_layer_pallas(x, bias, params, NH,
                                      compute_dtype=jnp.float32)
    jax.block_until_ready((out32, w32))
    assert out32.shape == (B, S, H) and w32.shape == (B, NH, S, S)
    assert jnp.allclose(out32, out_ref_val, atol=2e-3, rtol=2e-3)
    assert jnp.allclose(w32, w_ref_val, atol=1e-3, rtol=1e-3)

    # 2) bf16-operand path (MXU fast path on v6e/v7x), f32 accumulation.
    out16, w16 = encoder_layer_pallas(x, bias, params, NH,
                                      compute_dtype=jnp.bfloat16)
    jax.block_until_ready((out16, w16))
    assert jnp.allclose(out16, out_ref_val, atol=3e-2, rtol=3e-2)
    assert jnp.allclose(w16, w_ref_val, atol=1e-2, rtol=1e-2)

    # 3) Exercise the multi-tile / chunked-K-V path (q_tile < S, kv_chunk < S).
    S2 = 16
    x2 = jax.random.normal(jax.random.fold_in(kx, 1), (B, S2, H), jnp.float32)
    bias2 = jnp.zeros((B, 1, 1, S2), jnp.float32)
    ref2_out, ref2_w = encoder_layer_ref(x2, bias2, params, NH)
    outt, wt = encoder_layer_pallas(x2, bias2, params, NH,
                                    compute_dtype=jnp.float32,
                                    q_tile=8, kv_chunk=8)
    jax.block_until_ready((outt, wt))
    assert jnp.allclose(outt, ref2_out, atol=2e-3, rtol=2e-3)
    assert jnp.allclose(wt, ref2_w, atol=1e-3, rtol=1e-3)

    # 4) Fast path without the attention-weights output.
    out_nw = encoder_layer_pallas(x, bias, params, NH,
                                  compute_dtype=jnp.float32,
                                  return_weights=False)
    jax.block_until_ready(out_nw)
    assert jnp.allclose(out_nw, out_ref_val, atol=2e-3, rtol=2e-3)

    print("KERNEL_OK")
</pallas_src>

<mosaic_0001>
module attributes {stable_mosaic.version = 11 : i64} {
  func.func @_encoder_layer_kernel(%arg0: i32, %arg1: i32, %arg2: memref<1x8x32xf32, #tpu.memory_space<vmem>>, %arg3: memref<1x8x32xf32, #tpu.memory_space<vmem>>, %arg4: memref<1x1x1x8xf32, #tpu.memory_space<vmem>>, %arg5: memref<1x32xf32, #tpu.memory_space<vmem>>, %arg6: memref<1x32xf32, #tpu.memory_space<vmem>>, %arg7: memref<32x32xf32, #tpu.memory_space<vmem>>, %arg8: memref<1x32xf32, #tpu.memory_space<vmem>>, %arg9: memref<32x64xf32, #tpu.memory_space<vmem>>, %arg10: memref<1x64xf32, #tpu.memory_space<vmem>>, %arg11: memref<32x32xf32, #tpu.memory_space<vmem>>, %arg12: memref<1x32xf32, #tpu.memory_space<vmem>>, %arg13: memref<1x32xf32, #tpu.memory_space<vmem>>, %arg14: memref<1x32xf32, #tpu.memory_space<vmem>>, %arg15: memref<32x64xf32, #tpu.memory_space<vmem>>, %arg16: memref<1x64xf32, #tpu.memory_space<vmem>>, %arg17: memref<64x32xf32, #tpu.memory_space<vmem>>, %arg18: memref<1x32xf32, #tpu.memory_space<vmem>>, %arg19: memref<1x8x32xf32, #tpu.memory_space<vmem>>, %arg20: memref<1x4x8x8xf32, #tpu.memory_space<vmem>>, %arg21: memref<8x32xf32, #tpu.memory_space<vmem>>, %arg22: memref<8x32xf32, #tpu.memory_space<vmem>>, %arg23: memref<8x32xf32, #tpu.memory_space<vmem>>) attributes {dimension_semantics = [#tpu.dimension_semantics<parallel>, #tpu.dimension_semantics<arbitrary>], iteration_bounds = array<i64: 2, 1>, scalar_prefetch = 0 : i64, scratch_operands = 3 : i64, tpu.core_type = #tpu.core_type<tc>, window_params = [{transform_indices = @transform_0, window_bounds = array<i64: 1, 8, 32>}, {transform_indices = @transform_1, window_bounds = array<i64: 1, 8, 32>}, {transform_indices = @transform_2, window_bounds = array<i64: 1, 1, 1, 8>}, {pipeline_mode = #tpu.pipeline_mode<synchronous>, transform_indices = @transform_3, window_bounds = array<i64: 1, 32>}, {pipeline_mode = #tpu.pipeline_mode<synchronous>, transform_indices = @transform_4, window_bounds = array<i64: 1, 32>}, {pipeline_mode = #tpu.pipeline_mode<synchronous>, transform_indices = @transform_5, window_bounds = array<i64: 32, 32>}, {pipeline_mode = #tpu.pipeline_mode<synchronous>, transform_indices = @transform_6, window_bounds = array<i64: 1, 32>}, {pipeline_mode = #tpu.pipeline_mode<synchronous>, transform_indices = @transform_7, window_bounds = array<i64: 32, 64>}, {pipeline_mode = #tpu.pipeline_mode<synchronous>, transform_indices = @transform_8, window_bounds = array<i64: 1, 64>}, {pipeline_mode = #tpu.pipeline_mode<synchronous>, transform_indices = @transform_9, window_bounds = array<i64: 32, 32>}, {pipeline_mode = #tpu.pipeline_mode<synchronous>, transform_indices = @transform_10, window_bounds = array<i64: 1, 32>}, {pipeline_mode = #tpu.pipeline_mode<synchronous>, transform_indices = @transform_11, window_bounds = array<i64: 1, 32>}, {pipeline_mode = #tpu.pipeline_mode<synchronous>, transform_indices = @transform_12, window_bounds = array<i64: 1, 32>}, {pipeline_mode = #tpu.pipeline_mode<synchronous>, transform_indices = @transform_13, window_bounds = array<i64: 32, 64>}, {pipeline_mode = #tpu.pipeline_mode<synchronous>, transform_indices = @transform_14, window_bounds = array<i64: 1, 64>}, {pipeline_mode = #tpu.pipeline_mode<synchronous>, transform_indices = @transform_15, window_bounds = array<i64: 64, 32>}, {pipeline_mode = #tpu.pipeline_mode<synchronous>, transform_indices = @transform_16, window_bounds = array<i64: 1, 32>}, {transform_indices = @transform_17, window_bounds = array<i64: 1, 8, 32>}, {transform_indices = @transform_18, window_bounds = array<i64: 1, 4, 8, 8>}]} {
    %c0_i32 = arith.constant 0 : i32
    %0 = arith.cmpi eq, %arg1, %c0_i32 : i32
    %1 = arith.extui %0 : i1 to i32
    %c0_i32_0 = arith.constant 0 : i32
    %2 = arith.cmpi ne, %1, %c0_i32_0 : i32
    scf.if %2 {
      %c0_105 = arith.constant 0 : index
      %c0_106 = arith.constant 0 : index
      %c0_107 = arith.constant 0 : index
      %173 = vector.load %arg2[%c0_105, %c0_106, %c0_107] : memref<1x8x32xf32, #tpu.memory_space<vmem>>, vector<1x8x32xf32>
      %174 = vector.shape_cast %173 : vector<1x8x32xf32> to vector<8x32xf32>
      %c0_108 = arith.constant 0 : index
      %c0_109 = arith.constant 0 : index
      %175 = vector.load %arg5[%c0_108, %c0_109] : memref<1x32xf32, #tpu.memory_space<vmem>>, vector<1x32xf32>
      %c0_110 = arith.constant 0 : index
      %c0_111 = arith.constant 0 : index
      %176 = vector.load %arg6[%c0_110, %c0_111] : memref<1x32xf32, #tpu.memory_space<vmem>>, vector<1x32xf32>
      %cst_112 = arith.constant dense<0.000000e+00> : vector<8xf32>
      %177 = vector.multi_reduction <add>, %174, %cst_112 [1] : vector<8x32xf32> to vector<8xf32>
      %178 = vector.shape_cast %177 : vector<8xf32> to vector<8x1xf32>
      %cst_113 = arith.constant 3.200000e+01 : f32
      %179 = vector.broadcast %cst_113 : f32 to vector<8x1xf32>
      %180 = arith.divf %178, %179 : vector<8x1xf32>
      %181 = vector.broadcast %180 : vector<8x1xf32> to vector<8x32xf32>
      %182 = arith.subf %174, %181 : vector<8x32xf32>
      %183 = arith.mulf %182, %182 : vector<8x32xf32>
      %cst_114 = arith.constant dense<0.000000e+00> : vector<8xf32>
      %184 = vector.multi_reduction <add>, %183, %cst_114 [1] : vector<8x32xf32> to vector<8xf32>
      %185 = vector.shape_cast %184 : vector<8xf32> to vector<8x1xf32>
      %cst_115 = arith.constant 3.200000e+01 : f32
      %186 = vector.broadcast %cst_115 : f32 to vector<8x1xf32>
      %187 = arith.divf %185, %186 : vector<8x1xf32>
      %188 = vector.broadcast %180 : vector<8x1xf32> to vector<8x32xf32>
      %189 = arith.subf %174, %188 : vector<8x32xf32>
      %cst_116 = arith.constant 9.99999974E-6 : f32
      %190 = vector.broadcast %cst_116 : f32 to vector<8x1xf32>
      %191 = arith.addf %187, %190 : vector<8x1xf32>
      %192 = math.rsqrt %191 : vector<8x1xf32>
      %193 = vector.broadcast %192 : vector<8x1xf32> to vector<8x32xf32>
      %194 = arith.mulf %189, %193 : vector<8x32xf32>
      %195 = vector.broadcast %175 : vector<1x32xf32> to vector<8x32xf32>
      %196 = arith.mulf %194, %195 : vector<8x32xf32>
      %197 = vector.broadcast %176 : vector<1x32xf32> to vector<8x32xf32>
      %198 = arith.addf %196, %197 : vector<8x32xf32>
      %c0_117 = arith.constant 0 : index
      %c0_118 = arith.constant 0 : index
      %199 = vector.load %arg9[%c0_117, %c0_118] : memref<32x64xf32, #tpu.memory_space<vmem>>, vector<32x64xf32>
      %cst_119 = arith.constant dense<0.000000e+00> : vector<8x64xf32>
      %200 = tpu.matmul %198, %199, %cst_119 {dimension_numbers = #tpu.dot_dimension_numbers<[1], [0], [0], [1], [0, 0, 1, 1], [], []>} : vector<8x32xf32>, vector<32x64xf32>, vector<8x64xf32> -> vector<8x64xf32>
      %c0_120 = arith.constant 0 : index
      %c0_121 = arith.constant 0 : index
      %201 = vector.load %arg10[%c0_120, %c0_121] : memref<1x64xf32, #tpu.memory_space<vmem>>, vector<1x64xf32>
      %202 = vector.broadcast %201 : vector<1x64xf32> to vector<8x64xf32>
      %203 = arith.addf %200, %202 : vector<8x64xf32>
      %204 = vector.extract_strided_slice %203 {offsets = [0, 0], sizes = [8, 32], strides = [1, 1]} : vector<8x64xf32> to vector<8x32xf32>
      %c0_122 = arith.constant 0 : index
      %c0_123 = arith.constant 0 : index
      %205 = vector.load %arg21[%c0_122, %c0_123] : memref<8x32xf32, #tpu.memory_space<vmem>>, vector<8x32xf32>
      tpu.vector_store %arg21[%c0_122, %c0_123], %204 {strides = array<i32>} : memref<8x32xf32, #tpu.memory_space<vmem>>, vector<8x32xf32>,
      %206 = vector.extract_strided_slice %203 {offsets = [0, 32], sizes = [8, 32], strides = [1, 1]} : vector<8x64xf32> to vector<8x32xf32>
      %c0_124 = arith.constant 0 : index
      %c0_125 = arith.constant 0 : index
      %207 = vector.load %arg22[%c0_124, %c0_125] : memref<8x32xf32, #tpu.memory_space<vmem>>, vector<8x32xf32>
      tpu.vector_store %arg22[%c0_124, %c0_125], %206 {strides = array<i32>} : memref<8x32xf32, #tpu.memory_space<vmem>>, vector<8x32xf32>,
    } else {
    }
    %c0 = arith.constant 0 : index
    %c0_1 = arith.constant 0 : index
    %c0_2 = arith.constant 0 : index
    %3 = vector.load %arg3[%c0, %c0_1, %c0_2] : memref<1x8x32xf32, #tpu.memory_space<vmem>>, vector<1x8x32xf32>
    %4 = vector.shape_cast %3 : vector<1x8x32xf32> to vector<8x32xf32>
    %c0_3 = arith.constant 0 : index
    %c0_4 = arith.constant 0 : index
    %5 = vector.load %arg5[%c0_3, %c0_4] : memref<1x32xf32, #tpu.memory_space<vmem>>, vector<1x32xf32>
    %c0_5 = arith.constant 0 : index
    %c0_6 = arith.constant 0 : index
    %6 = vector.load %arg6[%c0_5, %c0_6] : memref<1x32xf32, #tpu.memory_space<vmem>>, vector<1x32xf32>
    %cst = arith.constant dense<0.000000e+00> : vector<8xf32>
    %7 = vector.multi_reduction <add>, %4, %cst [1] : vector<8x32xf32> to vector<8xf32>
    %8 = vector.shape_cast %7 : vector<8xf32> to vector<8x1xf32>
    %cst_7 = arith.constant 3.200000e+01 : f32
    %9 = vector.broadcast %cst_7 : f32 to vector<8x1xf32>
    %10 = arith.divf %8, %9 : vector<8x1xf32>
    %11 = vector.broadcast %10 : vector<8x1xf32> to vector<8x32xf32>
    %12 = arith.subf %4, %11 : vector<8x32xf32>
    %13 = arith.mulf %12, %12 : vector<8x32xf32>
    %cst_8 = arith.constant dense<0.000000e+00> : vector<8xf32>
    %14 = vector.multi_reduction <add>, %13, %cst_8 [1] : vector<8x32xf32> to vector<8xf32>
    %15 = vector.shape_cast %14 : vector<8xf32> to vector<8x1xf32>
    %cst_9 = arith.constant 3.200000e+01 : f32
    %16 = vector.broadcast %cst_9 : f32 to vector<8x1xf32>
    %17 = arith.divf %15, %16 : vector<8x1xf32>
    %18 = vector.broadcast %10 : vector<8x1xf32> to vector<8x32xf32>
    %19 = arith.subf %4, %18 : vector<8x32xf32>
    %cst_10 = arith.constant 9.99999974E-6 : f32
    %20 = vector.broadcast %cst_10 : f32 to vector<8x1xf32>
    %21 = arith.addf %17, %20 : vector<8x1xf32>
    %22 = math.rsqrt %21 : vector<8x1xf32>
    %23 = vector.broadcast %22 : vector<8x1xf32> to vector<8x32xf32>
    %24 = arith.mulf %19, %23 : vector<8x32xf32>
    %25 = vector.broadcast %5 : vector<1x32xf32> to vector<8x32xf32>
    %26 = arith.mulf %24, %25 : vector<8x32xf32>
    %27 = vector.broadcast %6 : vector<1x32xf32> to vector<8x32xf32>
    %28 = arith.addf %26, %27 : vector<8x32xf32>
    %c0_11 = arith.constant 0 : index
    %c0_12 = arith.constant 0 : index
    %29 = vector.load %arg7[%c0_11, %c0_12] : memref<32x32xf32, #tpu.memory_space<vmem>>, vector<32x32xf32>
    %cst_13 = arith.constant dense<0.000000e+00> : vector<8x32xf32>
    %30 = tpu.matmul %28, %29, %cst_13 {dimension_numbers = #tpu.dot_dimension_numbers<[1], [0], [0], [1], [0, 0, 1, 1], [], []>} : vector<8x32xf32>, vector<32x32xf32>, vector<8x32xf32> -> vector<8x32xf32>
    %c0_14 = arith.constant 0 : index
    %c0_15 = arith.constant 0 : index
    %31 = vector.load %arg8[%c0_14, %c0_15] : memref<1x32xf32, #tpu.memory_space<vmem>>, vector<1x32xf32>
    %32 = vector.broadcast %31 : vector<1x32xf32> to vector<8x32xf32>
    %33 = arith.addf %30, %32 : vector<8x32xf32>
    %cst_16 = arith.constant 0.353553385 : f32
    %34 = vector.broadcast %cst_16 : f32 to vector<8x32xf32>
    %35 = arith.mulf %33, %34 : vector<8x32xf32>
    %c0_17 = arith.constant 0 : index
    %c0_18 = arith.constant 0 : index
    %c0_19 = arith.constant 0 : index
    %c0_20 = arith.constant 0 : index
    %36 = vector.load %arg4[%c0_17, %c0_18, %c0_19, %c0_20] : memref<1x1x1x8xf32, #tpu.memory_space<vmem>>, vector<1x1x1x8xf32>
    %37 = vector.shape_cast %36 : vector<1x1x1x8xf32> to vector<1x8xf32>
    %38 = vector.extract_strided_slice %35 {offsets = [0, 0], sizes = [8, 8], strides = [1, 1]} : vector<8x32xf32> to vector<8x8xf32>
    %c0_21 = arith.constant 0 : index
    %c0_22 = arith.constant 0 : index
    %39 = vector.load %arg21[%c0_21, %c0_22] : memref<8x32xf32, #tpu.memory_space<vmem>>, vector<8x8xf32>
    %cst_23 = arith.constant dense<0.000000e+00> : vector<8x8xf32>
    %40 = tpu.matmul %38, %39, %cst_23 {dimension_numbers = #tpu.dot_dimension_numbers<[1], [1], [0], [0], [0, 0, 1, 0], [], []>} : vector<8x8xf32>, vector<8x8xf32>, vector<8x8xf32> -> vector<8x8xf32>
    %41 = vector.broadcast %37 : vector<1x8xf32> to vector<8x8xf32>
    %42 = arith.addf %40, %41 : vector<8x8xf32>
    %cst_24 = arith.constant dense<0xFF800000> : vector<8xf32>
    %43 = vector.multi_reduction <maximumf>, %42, %cst_24 [1] : vector<8x8xf32> to vector<8xf32>
    %44 = vector.shape_cast %43 : vector<8xf32> to vector<8x1xf32>
    %45 = vector.broadcast %44 : vector<8x1xf32> to vector<8x8xf32>
    %46 = arith.subf %42, %45 : vector<8x8xf32>
    %47 = math.exp %46 : vector<8x8xf32>
    %cst_25 = arith.constant dense<0.000000e+00> : vector<8xf32>
    %48 = vector.multi_reduction <add>, %47, %cst_25 [1] : vector<8x8xf32> to vector<8xf32>
    %49 = vector.shape_cast %48 : vector<8xf32> to vector<8x1xf32>
    %cst_26 = arith.constant 1.000000e+00 : f32
    %50 = vector.broadcast %cst_26 : f32 to vector<8x1xf32>
    %51 = arith.divf %50, %49 : vector<8x1xf32>
    %52 = vector.broadcast %51 : vector<8x1xf32> to vector<8x8xf32>
    %53 = arith.mulf %47, %52 : vector<8x8xf32>
    %c0_27 = arith.constant 0 : index
    %c0_28 = arith.constant 0 : index
    %c0_29 = arith.constant 0 : index
    %c0_30 = arith.constant 0 : index
    %54 = vector.load %arg20[%c0_27, %c0_28, %c0_29, %c0_30] : memref<1x4x8x8xf32, #tpu.memory_space<vmem>>, vector<1x1x8x8xf32>
    %55 = vector.shape_cast %54 : vector<1x1x8x8xf32> to vector<8x8xf32>
    %56 = vector.shape_cast %53 : vector<8x8xf32> to vector<1x1x8x8xf32>
    tpu.vector_store %arg20[%c0_27, %c0_28, %c0_29, %c0_30], %56 {strides = array<i32>} : memref<1x4x8x8xf32, #tpu.memory_space<vmem>>, vector<1x1x8x8xf32>,
    %c0_31 = arith.constant 0 : index
    %c0_32 = arith.constant 0 : index
    %57 = vector.load %arg22[%c0_31, %c0_32] : memref<8x32xf32, #tpu.memory_space<vmem>>, vector<8x8xf32>
    %cst_33 = arith.constant dense<0.000000e+00> : vector<8x8xf32>
    %58 = tpu.matmul %53, %57, %cst_33 {dimension_numbers = #tpu.dot_dimension_numbers<[1], [0], [0], [1], [0, 0, 1, 1], [], []>} : vector<8x8xf32>, vector<8x8xf32>, vector<8x8xf32> -> vector<8x8xf32>
    %c0_34 = arith.constant 0 : index
    %c0_35 = arith.constant 0 : index
    %59 = vector.load %arg23[%c0_34, %c0_35] : memref<8x32xf32, #tpu.memory_space<vmem>>, vector<8x8xf32>
    tpu.vector_store %arg23[%c0_34, %c0_35], %58 {strides = array<i32>} : memref<8x32xf32, #tpu.memory_space<vmem>>, vector<8x8xf32>,
    %60 = vector.extract_strided_slice %35 {offsets = [0, 8], sizes = [8, 8], strides = [1, 1]} : vector<8x32xf32> to vector<8x8xf32>
    %c0_36 = arith.constant 0 : index
    %c8 = arith.constant 8 : index
    %61 = vector.load %arg21[%c0_36, %c8] : memref<8x32xf32, #tpu.memory_space<vmem>>, vector<8x8xf32>
    %cst_37 = arith.constant dense<0.000000e+00> : vector<8x8xf32>
    %62 = tpu.matmul %60, %61, %cst_37 {dimension_numbers = #tpu.dot_dimension_numbers<[1], [1], [0], [0], [0, 0, 1, 0], [], []>} : vector<8x8xf32>, vector<8x8xf32>, vector<8x8xf32> -> vector<8x8xf32>
    %63 = vector.broadcast %37 : vector<1x8xf32> to vector<8x8xf32>
    %64 = arith.addf %62, %63 : vector<8x8xf32>
    %cst_38 = arith.constant dense<0xFF800000> : vector<8xf32>
    %65 = vector.multi_reduction <maximumf>, %64, %cst_38 [1] : vector<8x8xf32> to vector<8xf32>
    %66 = vector.shape_cast %65 : vector<8xf32> to vector<8x1xf32>
    %67 = vector.broadcast %66 : vector<8x1xf32> to vector<8x8xf32>
    %68 = arith.subf %64, %67 : vector<8x8xf32>
    %69 = math.exp %68 : vector<8x8xf32>
    %cst_39 = arith.constant dense<0.000000e+00> : vector<8xf32>
    %70 = vector.multi_reduction <add>, %69, %cst_39 [1] : vector<8x8xf32> to vector<8xf32>
    %71 = vector.shape_cast %70 : vector<8xf32> to vector<8x1xf32>
    %cst_40 = arith.constant 1.000000e+00 : f32
    %72 = vector.broadcast %cst_40 : f32 to vector<8x1xf32>
    %73 = arith.divf %72, %71 : vector<8x1xf32>
    %74 = vector.broadcast %73 : vector<8x1xf32> to vector<8x8xf32>
    %75 = arith.mulf %69, %74 : vector<8x8xf32>
    %c0_41 = arith.constant 0 : index
    %c1 = arith.constant 1 : index
    %c0_42 = arith.constant 0 : index
    %c0_43 = arith.constant 0 : index
    %76 = vector.load %arg20[%c0_41, %c1, %c0_42, %c0_43] : memref<1x4x8x8xf32, #tpu.memory_space<vmem>>, vector<1x1x8x8xf32>
    %77 = vector.shape_cast %76 : vector<1x1x8x8xf32> to vector<8x8xf32>
    %78 = vector.shape_cast %75 : vector<8x8xf32> to vector<1x1x8x8xf32>
    tpu.vector_store %arg20[%c0_41, %c1, %c0_42, %c0_43], %78 {strides = array<i32>} : memref<1x4x8x8xf32, #tpu.memory_space<vmem>>, vector<1x1x8x8xf32>,
    %c0_44 = arith.constant 0 : index
    %c8_45 = arith.constant 8 : index
    %79 = vector.load %arg22[%c0_44, %c8_45] : memref<8x32xf32, #tpu.memory_space<vmem>>, vector<8x8xf32>
    %cst_46 = arith.constant dense<0.000000e+00> : vector<8x8xf32>
    %80 = tpu.matmul %75, %79, %cst_46 {dimension_numbers = #tpu.dot_dimension_numbers<[1], [0], [0], [1], [0, 0, 1, 1], [], []>} : vector<8x8xf32>, vector<8x8xf32>, vector<8x8xf32> -> vector<8x8xf32>
    %c0_47 = arith.constant 0 : index
    %c8_48 = arith.constant 8 : index
    %81 = vector.load %arg23[%c0_47, %c8_48] : memref<8x32xf32, #tpu.memory_space<vmem>>, vector<8x8xf32>
    tpu.vector_store %arg23[%c0_47, %c8_48], %80 {strides = array<i32>} : memref<8x32xf32, #tpu.memory_space<vmem>>, vector<8x8xf32>,
    %82 = vector.extract_strided_slice %35 {offsets = [0, 16], sizes = [8, 8], strides = [1, 1]} : vector<8x32xf32> to vector<8x8xf32>
    %c0_49 = arith.constant 0 : index
    %c16 = arith.constant 16 : index
    %83 = vector.load %arg21[%c0_49, %c16] : memref<8x32xf32, #tpu.memory_space<vmem>>, vector<8x8xf32>
    %cst_50 = arith.constant dense<0.000000e+00> : vector<8x8xf32>
    %84 = tpu.matmul %82, %83, %cst_50 {dimension_numbers = #tpu.dot_dimension_numbers<[1], [1], [0], [0], [0, 0, 1, 0], [], []>} : vector<8x8xf32>, vector<8x8xf32>, vector<8x8xf32> -> vector<8x8xf32>
    %85 = vector.broadcast %37 : vector<1x8xf32> to vector<8x8xf32>
    %86 = arith.addf %84, %85 : vector<8x8xf32>
    %cst_51 = arith.constant dense<0xFF800000> : vector<8xf32>
    %87 = vector.multi_reduction <maximumf>, %86, %cst_51 [1] : vector<8x8xf32> to vector<8xf32>
    %88 = vector.shape_cast %87 : vector<8xf32> to vector<8x1xf32>
    %89 = vector.broadcast %88 : vector<8x1xf32> to vector<8x8xf32>
    %90 = arith.subf %86, %89 : vector<8x8xf32>
    %91 = math.exp %90 : vector<8x8xf32>
    %cst_52 = arith.constant dense<0.000000e+00> : vector<8xf32>
    %92 = vector.multi_reduction <add>, %91, %cst_52 [1] : vector<8x8xf32> to vector<8xf32>
    %93 = vector.shape_cast %92 : vector<8xf32> to vector<8x1xf32>
    %cst_53 = arith.constant 1.000000e+00 : f32
    %94 = vector.broadcast %cst_53 : f32 to vector<8x1xf32>
    %95 = arith.divf %94, %93 : vector<8x1xf32>
    %96 = vector.broadcast %95 : vector<8x1xf32> to vector<8x8xf32>
    %97 = arith.mulf %91, %96 : vector<8x8xf32>
    %c0_54 = arith.constant 0 : index
    %c2 = arith.constant 2 : index
    %c0_55 = arith.constant 0 : index
    %c0_56 = arith.constant 0 : index
    %98 = vector.load %arg20[%c0_54, %c2, %c0_55, %c0_56] : memref<1x4x8x8xf32, #tpu.memory_space<vmem>>, vector<1x1x8x8xf32>
    %99 = vector.shape_cast %98 : vector<1x1x8x8xf32> to vector<8x8xf32>
    %100 = vector.shape_cast %97 : vector<8x8xf32> to vector<1x1x8x8xf32>
    tpu.vector_store %arg20[%c0_54, %c2, %c0_55, %c0_56], %100 {strides = array<i32>} : memref<1x4x8x8xf32, #tpu.memory_space<vmem>>, vector<1x1x8x8xf32>,
    %c0_57 = arith.constant 0 : index
    %c16_58 = arith.constant 16 : index
    %101 = vector.load %arg22[%c0_57, %c16_58] : memref<8x32xf32, #tpu.memory_space<vmem>>, vector<8x8xf32>
    %cst_59 = arith.constant dense<0.000000e+00> : vector<8x8xf32>
    %102 = tpu.matmul %97, %101, %cst_59 {dimension_numbers = #tpu.dot_dimension_numbers<[1], [0], [0], [1], [0, 0, 1, 1], [], []>} : vector<8x8xf32>, vector<8x8xf32>, vector<8x8xf32> -> vector<8x8xf32>
    %c0_60 = arith.constant 0 : index
    %c16_61 = arith.constant 16 : index
    %103 = vector.load %arg23[%c0_60, %c16_61] : memref<8x32xf32, #tpu.memory_space<vmem>>, vector<8x8xf32>
    tpu.vector_store %arg23[%c0_60, %c16_61], %102 {strides = array<i32>} : memref<8x32xf32, #tpu.memory_space<vmem>>, vector<8x8xf32>,
    %104 = vector.extract_strided_slice %35 {offsets = [0, 24], sizes = [8, 8], strides = [1, 1]} : vector<8x32xf32> to vector<8x8xf32>
    %c0_62 = arith.constant 0 : index
    %c24 = arith.constant 24 : index
    %105 = vector.load %arg21[%c0_62, %c24] : memref<8x32xf32, #tpu.memory_space<vmem>>, vector<8x8xf32>
    %cst_63 = arith.constant dense<0.000000e+00> : vector<8x8xf32>
    %106 = tpu.matmul %104, %105, %cst_63 {dimension_numbers = #tpu.dot_dimension_numbers<[1], [1], [0], [0], [0, 0, 1, 0], [], []>} : vector<8x8xf32>, vector<8x8xf32>, vector<8x8xf32> -> vector<8x8xf32>
    %107 = vector.broadcast %37 : vector<1x8xf32> to vector<8x8xf32>
    %108 = arith.addf %106, %107 : vector<8x8xf32>
    %cst_64 = arith.constant dense<0xFF800000> : vector<8xf32>
    %109 = vector.multi_reduction <maximumf>, %108, %cst_64 [1] : vector<8x8xf32> to vector<8xf32>
    %110 = vector.shape_cast %109 : vector<8xf32> to vector<8x1xf32>
    %111 = vector.broadcast %110 : vector<8x1xf32> to vector<8x8xf32>
    %112 = arith.subf %108, %111 : vector<8x8xf32>
    %113 = math.exp %112 : vector<8x8xf32>
    %cst_65 = arith.constant dense<0.000000e+00> : vector<8xf32>
    %114 = vector.multi_reduction <add>, %113, %cst_65 [1] : vector<8x8xf32> to vector<8xf32>
    %115 = vector.shape_cast %114 : vector<8xf32> to vector<8x1xf32>
    %cst_66 = arith.constant 1.000000e+00 : f32
    %116 = vector.broadcast %cst_66 : f32 to vector<8x1xf32>
    %117 = arith.divf %116, %115 : vector<8x1xf32>
    %118 = vector.broadcast %117 : vector<8x1xf32> to vector<8x8xf32>
    %119 = arith.mulf %113, %118 : vector<8x8xf32>
    %c0_67 = arith.constant 0 : index
    %c3 = arith.constant 3 : index
    %c0_68 = arith.constant 0 : index
    %c0_69 = arith.constant 0 : index
    %120 = vector.load %arg20[%c0_67, %c3, %c0_68, %c0_69] : memref<1x4x8x8xf32, #tpu.memory_space<vmem>>, vector<1x1x8x8xf32>
    %121 = vector.shape_cast %120 : vector<1x1x8x8xf32> to vector<8x8xf32>
    %122 = vector.shape_cast %119 : vector<8x8xf32> to vector<1x1x8x8xf32>
    tpu.vector_store %arg20[%c0_67, %c3, %c0_68, %c0_69], %122 {strides = array<i32>} : memref<1x4x8x8xf32, #tpu.memory_space<vmem>>, vector<1x1x8x8xf32>,
    %c0_70 = arith.constant 0 : index
    %c24_71 = arith.constant 24 : index
    %123 = vector.load %arg22[%c0_70, %c24_71] : memref<8x32xf32, #tpu.memory_space<vmem>>, vector<8x8xf32>
    %cst_72 = arith.constant dense<0.000000e+00> : vector<8x8xf32>
    %124 = tpu.matmul %119, %123, %cst_72 {dimension_numbers = #tpu.dot_dimension_numbers<[1], [0], [0], [1], [0, 0, 1, 1], [], []>} : vector<8x8xf32>, vector<8x8xf32>, vector<8x8xf32> -> vector<8x8xf32>
    %c0_73 = arith.constant 0 : index
    %c24_74 = arith.constant 24 : index
    %125 = vector.load %arg23[%c0_73, %c24_74] : memref<8x32xf32, #tpu.memory_space<vmem>>, vector<8x8xf32>
    tpu.vector_store %arg23[%c0_73, %c24_74], %124 {strides = array<i32>} : memref<8x32xf32, #tpu.memory_space<vmem>>, vector<8x8xf32>,
    %c0_75 = arith.constant 0 : index
    %c0_76 = arith.constant 0 : index
    %126 = vector.load %arg23[%c0_75, %c0_76] : memref<8x32xf32, #tpu.memory_space<vmem>>, vector<8x32xf32>
    %c0_77 = arith.constant 0 : index
    %c0_78 = arith.constant 0 : index
    %127 = vector.load %arg11[%c0_77, %c0_78] : memref<32x32xf32, #tpu.memory_space<vmem>>, vector<32x32xf32>
    %cst_79 = arith.constant dense<0.000000e+00> : vector<8x32xf32>
    %128 = tpu.matmul %126, %127, %cst_79 {dimension_numbers = #tpu.dot_dimension_numbers<[1], [0], [0], [1], [0, 0, 1, 1], [], []>} : vector<8x32xf32>, vector<32x32xf32>, vector<8x32xf32> -> vector<8x32xf32>
    %c0_80 = arith.constant 0 : index
    %c0_81 = arith.constant 0 : index
    %129 = vector.load %arg12[%c0_80, %c0_81] : memref<1x32xf32, #tpu.memory_space<vmem>>, vector<1x32xf32>
    %130 = vector.broadcast %129 : vector<1x32xf32> to vector<8x32xf32>
    %131 = arith.addf %128, %130 : vector<8x32xf32>
    %132 = arith.addf %131, %4 : vector<8x32xf32>
    %c0_82 = arith.constant 0 : index
    %c0_83 = arith.constant 0 : index
    %133 = vector.load %arg13[%c0_82, %c0_83] : memref<1x32xf32, #tpu.memory_space<vmem>>, vector<1x32xf32>
    %c0_84 = arith.constant 0 : index
    %c0_85 = arith.constant 0 : index
    %134 = vector.load %arg14[%c0_84, %c0_85] : memref<1x32xf32, #tpu.memory_space<vmem>>, vector<1x32xf32>
    %cst_86 = arith.constant dense<0.000000e+00> : vector<8xf32>
    %135 = vector.multi_reduction <add>, %132, %cst_86 [1] : vector<8x32xf32> to vector<8xf32>
    %136 = vector.shape_cast %135 : vector<8xf32> to vector<8x1xf32>
    %cst_87 = arith.constant 3.200000e+01 : f32
    %137 = vector.broadcast %cst_87 : f32 to vector<8x1xf32>
    %138 = arith.divf %136, %137 : vector<8x1xf32>
    %139 = vector.broadcast %138 : vector<8x1xf32> to vector<8x32xf32>
    %140 = arith.subf %132, %139 : vector<8x32xf32>
    %141 = arith.mulf %140, %140 : vector<8x32xf32>
    %cst_88 = arith.constant dense<0.000000e+00> : vector<8xf32>
    %142 = vector.multi_reduction <add>, %141, %cst_88 [1] : vector<8x32xf32> to vector<8xf32>
    %143 = vector.shape_cast %142 : vector<8xf32> to vector<8x1xf32>
    %cst_89 = arith.constant 3.200000e+01 : f32
    %144 = vector.broadcast %cst_89 : f32 to vector<8x1xf32>
    %145 = arith.divf %143, %144 : vector<8x1xf32>
    %146 = vector.broadcast %138 : vector<8x1xf32> to vector<8x32xf32>
    %147 = arith.subf %132, %146 : vector<8x32xf32>
    %cst_90 = arith.constant 9.99999974E-6 : f32
    %148 = vector.broadcast %cst_90 : f32 to vector<8x1xf32>
    %149 = arith.addf %145, %148 : vector<8x1xf32>
    %150 = math.rsqrt %149 : vector<8x1xf32>
    %151 = vector.broadcast %150 : vector<8x1xf32> to vector<8x32xf32>
    %152 = arith.mulf %147, %151 : vector<8x32xf32>
    %153 = vector.broadcast %133 : vector<1x32xf32> to vector<8x32xf32>
    %154 = arith.mulf %152, %153 : vector<8x32xf32>
    %155 = vector.broadcast %134 : vector<1x32xf32> to vector<8x32xf32>
    %156 = arith.addf %154, %155 : vector<8x32xf32>
    %c0_91 = arith.constant 0 : index
    %c0_92 = arith.constant 0 : index
    %157 = vector.load %arg15[%c0_91, %c0_92] : memref<32x64xf32, #tpu.memory_space<vmem>>, vector<32x64xf32>
    %cst_93 = arith.constant dense<0.000000e+00> : vector<8x64xf32>
    %158 = tpu.matmul %156, %157, %cst_93 {dimension_numbers = #tpu.dot_dimension_numbers<[1], [0], [0], [1], [0, 0, 1, 1], [], []>} : vector<8x32xf32>, vector<32x64xf32>, vector<8x64xf32> -> vector<8x64xf32>
    %c0_94 = arith.constant 0 : index
    %c0_95 = arith.constant 0 : index
    %159 = vector.load %arg16[%c0_94, %c0_95] : memref<1x64xf32, #tpu.memory_space<vmem>>, vector<1x64xf32>
    %160 = vector.broadcast %159 : vector<1x64xf32> to vector<8x64xf32>
    %161 = arith.addf %158, %160 : vector<8x64xf32>
    %cst_96 = arith.constant 0.000000e+00 : f32
    %162 = vector.broadcast %cst_96 : f32 to vector<8x64xf32>
    %163 = arith.maximumf %161, %162 : vector<8x64xf32>
    %c0_97 = arith.constant 0 : index
    %c0_98 = arith.constant 0 : index
    %164 = vector.load %arg17[%c0_97, %c0_98] : memref<64x32xf32, #tpu.memory_space<vmem>>, vector<64x32xf32>
    %cst_99 = arith.constant dense<0.000000e+00> : vector<8x32xf32>
    %165 = tpu.matmul %163, %164, %cst_99 {dimension_numbers = #tpu.dot_dimension_numbers<[1], [0], [0], [1], [0, 0, 1, 1], [], []>} : vector<8x64xf32>, vector<64x32xf32>, vector<8x32xf32> -> vector<8x32xf32>
    %c0_100 = arith.constant 0 : index
    %c0_101 = arith.constant 0 : index
    %166 = vector.load %arg18[%c0_100, %c0_101] : memref<1x32xf32, #tpu.memory_space<vmem>>, vector<1x32xf32>
    %167 = vector.broadcast %166 : vector<1x32xf32> to vector<8x32xf32>
    %168 = arith.addf %165, %167 : vector<8x32xf32>
    %169 = arith.addf %168, %132 : vector<8x32xf32>
    %c0_102 = arith.constant 0 : index
    %c0_103 = arith.constant 0 : index
    %c0_104 = arith.constant 0 : index
    %170 = vector.load %arg19[%c0_102, %c0_103, %c0_104] : memref<1x8x32xf32, #tpu.memory_space<vmem>>, vector<1x8x32xf32>
    %171 = vector.shape_cast %170 : vector<1x8x32xf32> to vector<8x32xf32>
    %172 = vector.shape_cast %169 : vector<8x32xf32> to vector<1x8x32xf32>
    tpu.vector_store %arg19[%c0_102, %c0_103, %c0_104], %172 {strides = array<i32>} : memref<1x8x32xf32, #tpu.memory_space<vmem>>, vector<1x8x32xf32>,
    return
  }
  func.func @transform_0(%arg0: i32, %arg1: i32) -> (i32, i32, i32) {
    %c0_i32 = arith.constant 0 : i32
    %c0_i32_0 = arith.constant 0 : i32
    %c0_i32_1 = arith.constant 0 : i32
    return %arg0, %c0_i32, %c0_i32_0 : i32, i32, i32
  }
  func.func @transform_1(%arg0: i32, %arg1: i32) -> (i32, i32, i32) {
    %c0_i32 = arith.constant 0 : i32
    %c0_i32_0 = arith.constant 0 : i32
    return %arg0, %arg1, %c0_i32 : i32, i32, i32
  }
  func.func @transform_2(%arg0: i32, %arg1: i32) -> (i32, i32, i32, i32) {
    %c0_i32 = arith.constant 0 : i32
    %c0_i32_0 = arith.constant 0 : i32
    %c0_i32_1 = arith.constant 0 : i32
    %c0_i32_2 = arith.constant 0 : i32
    return %arg0, %c0_i32, %c0_i32_0, %c0_i32_1 : i32, i32, i32, i32
  }
  func.func @transform_3(%arg0: i32, %arg1: i32) -> (i32, i32) {
    %c0_i32 = arith.constant 0 : i32
    %c0_i32_0 = arith.constant 0 : i32
    %c0_i32_1 = arith.constant 0 : i32
    return %c0_i32, %c0_i32_0 : i32, i32
  }
  func.func @transform_4(%arg0: i32, %arg1: i32) -> (i32, i32) {
    %c0_i32 = arith.constant 0 : i32
    %c0_i32_0 = arith.constant 0 : i32
    %c0_i32_1 = arith.constant 0 : i32
    return %c0_i32, %c0_i32_0 : i32, i32
  }
  func.func @transform_5(%arg0: i32, %arg1: i32) -> (i32, i32) {
    %c0_i32 = arith.constant 0 : i32
    %c0_i32_0 = arith.constant 0 : i32
    %c0_i32_1 = arith.constant 0 : i32
    return %c0_i32, %c0_i32_0 : i32, i32
  }
  func.func @transform_6(%arg0: i32, %arg1: i32) -> (i32, i32) {
    %c0_i32 = arith.constant 0 : i32
    %c0_i32_0 = arith.constant 0 : i32
    %c0_i32_1 = arith.constant 0 : i32
    return %c0_i32, %c0_i32_0 : i32, i32
  }
  func.func @transform_7(%arg0: i32, %arg1: i32) -> (i32, i32) {
    %c0_i32 = arith.constant 0 : i32
    %c0_i32_0 = arith.constant 0 : i32
    %c0_i32_1 = arith.constant 0 : i32
    return %c0_i32, %c0_i32_0 : i32, i32
  }
  func.func @transform_8(%arg0: i32, %arg1: i32) -> (i32, i32) {
    %c0_i32 = arith.constant 0 : i32
    %c0_i32_0 = arith.constant 0 : i32
    %c0_i32_1 = arith.constant 0 : i32
    return %c0_i32, %c0_i32_0 : i32, i32
  }
  func.func @transform_9(%arg0: i32, %arg1: i32) -> (i32, i32) {
    %c0_i32 = arith.constant 0 : i32
    %c0_i32_0 = arith.constant 0 : i32
    %c0_i32_1 = arith.constant 0 : i32
    return %c0_i32, %c0_i32_0 : i32, i32
  }
  func.func @transform_10(%arg0: i32, %arg1: i32) -> (i32, i32) {
    %c0_i32 = arith.constant 0 : i32
    %c0_i32_0 = arith.constant 0 : i32
    %c0_i32_1 = arith.constant 0 : i32
    return %c0_i32, %c0_i32_0 : i32, i32
  }
  func.func @transform_11(%arg0: i32, %arg1: i32) -> (i32, i32) {
    %c0_i32 = arith.constant 0 : i32
    %c0_i32_0 = arith.constant 0 : i32
    %c0_i32_1 = arith.constant 0 : i32
    return %c0_i32, %c0_i32_0 : i32, i32
  }
  func.func @transform_12(%arg0: i32, %arg1: i32) -> (i32, i32) {
    %c0_i32 = arith.constant 0 : i32
    %c0_i32_0 = arith.constant 0 : i32
    %c0_i32_1 = arith.constant 0 : i32
    return %c0_i32, %c0_i32_0 : i32, i32
  }
  func.func @transform_13(%arg0: i32, %arg1: i32) -> (i32, i32) {
    %c0_i32 = arith.constant 0 : i32
    %c0_i32_0 = arith.constant 0 : i32
    %c0_i32_1 = arith.constant 0 : i32
    return %c0_i32, %c0_i32_0 : i32, i32
  }
  func.func @transform_14(%arg0: i32, %arg1: i32) -> (i32, i32) {
    %c0_i32 = arith.constant 0 : i32
    %c0_i32_0 = arith.constant 0 : i32
    %c0_i32_1 = arith.constant 0 : i32
    return %c0_i32, %c0_i32_0 : i32, i32
  }
  func.func @transform_15(%arg0: i32, %arg1: i32) -> (i32, i32) {
    %c0_i32 = arith.constant 0 : i32
    %c0_i32_0 = arith.constant 0 : i32
    %c0_i32_1 = arith.constant 0 : i32
    return %c0_i32, %c0_i32_0 : i32, i32
  }
  func.func @transform_16(%arg0: i32, %arg1: i32) -> (i32, i32) {
    %c0_i32 = arith.constant 0 : i32
    %c0_i32_0 = arith.constant 0 : i32
    %c0_i32_1 = arith.constant 0 : i32
    return %c0_i32, %c0_i32_0 : i32, i32
  }
  func.func @transform_17(%arg0: i32, %arg1: i32) -> (i32, i32, i32) {
    %c0_i32 = arith.constant 0 : i32
    %c0_i32_0 = arith.constant 0 : i32
    return %arg0, %arg1, %c0_i32 : i32, i32, i32
  }
  func.func @transform_18(%arg0: i32, %arg1: i32) -> (i32, i32, i32, i32) {
    %c0_i32 = arith.constant 0 : i32
    %c0_i32_0 = arith.constant 0 : i32
    %c0_i32_1 = arith.constant 0 : i32
    return %arg0, %c0_i32, %arg1, %c0_i32_0 : i32, i32, i32, i32
  }
}

module attributes {stable_mosaic.version = 11 : i64} {
  func.func @_encoder_layer_kernel(%arg0: i32, %arg1: i32, %arg2: memref<1x8x32xf32, #tpu.memory_space<vmem>>, %arg3: memref<1x8x32xf32, #tpu.memory_space<vmem>>, %arg4: memref<1x1x1x8xf32, #tpu.memory_space<vmem>>, %arg5: memref<1x32xf32, #tpu.memory_space<vmem>>, %arg6: memref<1x32xf32, #tpu.memory_space<vmem>>, %arg7: memref<32x32xf32, #tpu.memory_space<vmem>>, %arg8: memref<1x32xf32, #tpu.memory_space<vmem>>, %arg9: memref<32x64xf32, #tpu.memory_space<vmem>>, %arg10: memref<1x64xf32, #tpu.memory_space<vmem>>, %arg11: memref<32x32xf32, #tpu.memory_space<vmem>>, %arg12: memref<1x32xf32, #tpu.memory_space<vmem>>, %arg13: memref<1x32xf32, #tpu.memory_space<vmem>>, %arg14: memref<1x32xf32, #tpu.memory_space<vmem>>, %arg15: memref<32x64xf32, #tpu.memory_space<vmem>>, %arg16: memref<1x64xf32, #tpu.memory_space<vmem>>, %arg17: memref<64x32xf32, #tpu.memory_space<vmem>>, %arg18: memref<1x32xf32, #tpu.memory_space<vmem>>, %arg19: memref<1x8x32xf32, #tpu.memory_space<vmem>>, %arg20: memref<1x4x8x8xf32, #tpu.memory_space<vmem>>, %arg21: memref<8x32xf32, #tpu.memory_space<vmem>>, %arg22: memref<8x32xf32, #tpu.memory_space<vmem>>, %arg23: memref<8x32xf32, #tpu.memory_space<vmem>>) attributes {dimension_semantics = [#tpu.dimension_semantics<parallel>, #tpu.dimension_semantics<arbitrary>], iteration_bounds = array<i64: 2, 1>, scalar_prefetch = 0 : i64, scratch_operands = 3 : i64, tpu.core_type = #tpu.core_type<tc>, window_params = [{transform_indices = @transform_0, window_bounds = array<i64: 1, 8, 32>}, {transform_indices = @transform_1, window_bounds = array<i64: 1, 8, 32>}, {transform_indices = @transform_2, window_bounds = array<i64: 1, 1, 1, 8>}, {pipeline_mode = #tpu.pipeline_mode<synchronous>, transform_indices = @transform_3, window_bounds = array<i64: 1, 32>}, {pipeline_mode = #tpu.pipeline_mode<synchronous>, transform_indices = @transform_4, window_bounds = array<i64: 1, 32>}, {pipeline_mode = #tpu.pipeline_mode<synchronous>, transform_indices = @transform_5, window_bounds = array<i64: 32, 32>}, {pipeline_mode = #tpu.pipeline_mode<synchronous>, transform_indices = @transform_6, window_bounds = array<i64: 1, 32>}, {pipeline_mode = #tpu.pipeline_mode<synchronous>, transform_indices = @transform_7, window_bounds = array<i64: 32, 64>}, {pipeline_mode = #tpu.pipeline_mode<synchronous>, transform_indices = @transform_8, window_bounds = array<i64: 1, 64>}, {pipeline_mode = #tpu.pipeline_mode<synchronous>, transform_indices = @transform_9, window_bounds = array<i64: 32, 32>}, {pipeline_mode = #tpu.pipeline_mode<synchronous>, transform_indices = @transform_10, window_bounds = array<i64: 1, 32>}, {pipeline_mode = #tpu.pipeline_mode<synchronous>, transform_indices = @transform_11, window_bounds = array<i64: 1, 32>}, {pipeline_mode = #tpu.pipeline_mode<synchronous>, transform_indices = @transform_12, window_bounds = array<i64: 1, 32>}, {pipeline_mode = #tpu.pipeline_mode<synchronous>, transform_indices = @transform_13, window_bounds = array<i64: 32, 64>}, {pipeline_mode = #tpu.pipeline_mode<synchronous>, transform_indices = @transform_14, window_bounds = array<i64: 1, 64>}, {pipeline_mode = #tpu.pipeline_mode<synchronous>, transform_indices = @transform_15, window_bounds = array<i64: 64, 32>}, {pipeline_mode = #tpu.pipeline_mode<synchronous>, transform_indices = @transform_16, window_bounds = array<i64: 1, 32>}, {transform_indices = @transform_17, window_bounds = array<i64: 1, 8, 32>}, {transform_indices = @transform_18, window_bounds = array<i64: 1, 4, 8, 8>}]} {
    %c0_i32 = arith.constant 0 : i32
    %0 = arith.cmpi eq, %arg1, %c0_i32 : i32
    %1 = arith.extui %0 : i1 to i32
    %c0_i32_0 = arith.constant 0 : i32
    %2 = arith.cmpi ne, %1, %c0_i32_0 : i32
    scf.if %2 {
      %c0_105 = arith.constant 0 : index
      %c0_106 = arith.constant 0 : index
      %c0_107 = arith.constant 0 : index
      %173 = vector.load %arg2[%c0_105, %c0_106, %c0_107] : memref<1x8x32xf32, #tpu.memory_space<vmem>>, vector<1x8x32xf32>
      %174 = vector.shape_cast %173 : vector<1x8x32xf32> to vector<8x32xf32>
      %c0_108 = arith.constant 0 : index
      %c0_109 = arith.constant 0 : index
      %175 = vector.load %arg5[%c0_108, %c0_109] : memref<1x32xf32, #tpu.memory_space<vmem>>, vector<1x32xf32>
      %c0_110 = arith.constant 0 : index
      %c0_111 = arith.constant 0 : index
      %176 = vector.load %arg6[%c0_110, %c0_111] : memref<1x32xf32, #tpu.memory_space<vmem>>, vector<1x32xf32>
      %cst_112 = arith.constant dense<0.000000e+00> : vector<8xf32>
      %177 = vector.multi_reduction <add>, %174, %cst_112 [1] : vector<8x32xf32> to vector<8xf32>
      %178 = vector.shape_cast %177 : vector<8xf32> to vector<8x1xf32>
      %cst_113 = arith.constant 3.200000e+01 : f32
      %179 = vector.broadcast %cst_113 : f32 to vector<8x1xf32>
      %180 = arith.divf %178, %179 : vector<8x1xf32>
      %181 = vector.broadcast %180 : vector<8x1xf32> to vector<8x32xf32>
      %182 = arith.subf %174, %181 : vector<8x32xf32>
      %183 = arith.mulf %182, %182 : vector<8x32xf32>
      %cst_114 = arith.constant dense<0.000000e+00> : vector<8xf32>
      %184 = vector.multi_reduction <add>, %183, %cst_114 [1] : vector<8x32xf32> to vector<8xf32>
      %185 = vector.shape_cast %184 : vector<8xf32> to vector<8x1xf32>
      %cst_115 = arith.constant 3.200000e+01 : f32
      %186 = vector.broadcast %cst_115 : f32 to vector<8x1xf32>
      %187 = arith.divf %185, %186 : vector<8x1xf32>
      %188 = vector.broadcast %180 : vector<8x1xf32> to vector<8x32xf32>
      %189 = arith.subf %174, %188 : vector<8x32xf32>
      %cst_116 = arith.constant 9.99999974E-6 : f32
      %190 = vector.broadcast %cst_116 : f32 to vector<8x1xf32>
      %191 = arith.addf %187, %190 : vector<8x1xf32>
      %192 = math.rsqrt %191 : vector<8x1xf32>
      %193 = vector.broadcast %192 : vector<8x1xf32> to vector<8x32xf32>
      %194 = arith.mulf %189, %193 : vector<8x32xf32>
      %195 = vector.broadcast %175 : vector<1x32xf32> to vector<8x32xf32>
      %196 = arith.mulf %194, %195 : vector<8x32xf32>
      %197 = vector.broadcast %176 : vector<1x32xf32> to vector<8x32xf32>
      %198 = arith.addf %196, %197 : vector<8x32xf32>
      %c0_117 = arith.constant 0 : index
      %c0_118 = arith.constant 0 : index
      %199 = vector.load %arg9[%c0_117, %c0_118] : memref<32x64xf32, #tpu.memory_space<vmem>>, vector<32x64xf32>
      %cst_119 = arith.constant dense<0.000000e+00> : vector<8x64xf32>
      %200 = tpu.matmul %198, %199, %cst_119 {dimension_numbers = #tpu.dot_dimension_numbers<[1], [0], [0], [1], [0, 0, 1, 1], [], []>} : vector<8x32xf32>, vector<32x64xf32>, vector<8x64xf32> -> vector<8x64xf32>
      %c0_120 = arith.constant 0 : index
      %c0_121 = arith.constant 0 : index
      %201 = vector.load %arg10[%c0_120, %c0_121] : memref<1x64xf32, #tpu.memory_space<vmem>>, vector<1x64xf32>
      %202 = vector.broadcast %201 : vector<1x64xf32> to vector<8x64xf32>
      %203 = arith.addf %200, %202 : vector<8x64xf32>
      %204 = vector.extract_strided_slice %203 {offsets = [0, 0], sizes = [8, 32], strides = [1, 1]} : vector<8x64xf32> to vector<8x32xf32>
      %c0_122 = arith.constant 0 : index
      %c0_123 = arith.constant 0 : index
      %205 = vector.load %arg21[%c0_122, %c0_123] : memref<8x32xf32, #tpu.memory_space<vmem>>, vector<8x32xf32>
      tpu.vector_store %arg21[%c0_122, %c0_123], %204 {strides = array<i32>} : memref<8x32xf32, #tpu.memory_space<vmem>>, vector<8x32xf32>,
      %206 = vector.extract_strided_slice %203 {offsets = [0, 32], sizes = [8, 32], strides = [1, 1]} : vector<8x64xf32> to vector<8x32xf32>
      %c0_124 = arith.constant 0 : index
      %c0_125 = arith.constant 0 : index
      %207 = vector.load %arg22[%c0_124, %c0_125] : memref<8x32xf32, #tpu.memory_space<vmem>>, vector<8x32xf32>
      tpu.vector_store %arg22[%c0_124, %c0_125], %206 {strides = array<i32>} : memref<8x32xf32, #tpu.memory_space<vmem>>, vector<8x32xf32>,
    } else {
    }
    %c0 = arith.constant 0 : index
    %c0_1 = arith.constant 0 : index
    %c0_2 = arith.constant 0 : index
    %3 = vector.load %arg3[%c0, %c0_1, %c0_2] : memref<1x8x32xf32, #tpu.memory_space<vmem>>, vector<1x8x32xf32>
    %4 = vector.shape_cast %3 : vector<1x8x32xf32> to vector<8x32xf32>
    %c0_3 = arith.constant 0 : index
    %c0_4 = arith.constant 0 : index
    %5 = vector.load %arg5[%c0_3, %c0_4] : memref<1x32xf32, #tpu.memory_space<vmem>>, vector<1x32xf32>
    %c0_5 = arith.constant 0 : index
    %c0_6 = arith.constant 0 : index
    %6 = vector.load %arg6[%c0_5, %c0_6] : memref<1x32xf32, #tpu.memory_space<vmem>>, vector<1x32xf32>
    %cst = arith.constant dense<0.000000e+00> : vector<8xf32>
    %7 = vector.multi_reduction <add>, %4, %cst [1] : vector<8x32xf32> to vector<8xf32>
    %8 = vector.shape_cast %7 : vector<8xf32> to vector<8x1xf32>
    %cst_7 = arith.constant 3.200000e+01 : f32
    %9 = vector.broadcast %cst_7 : f32 to vector<8x1xf32>
    %10 = arith.divf %8, %9 : vector<8x1xf32>
    %11 = vector.broadcast %10 : vector<8x1xf32> to vector<8x32xf32>
    %12 = arith.subf %4, %11 : vector<8x32xf32>
    %13 = arith.mulf %12, %12 : vector<8x32xf32>
    %cst_8 = arith.constant dense<0.000000e+00> : vector<8xf32>
    %14 = vector.multi_reduction <add>, %13, %cst_8 [1] : vector<8x32xf32> to vector<8xf32>
    %15 = vector.shape_cast %14 : vector<8xf32> to vector<8x1xf32>
    %cst_9 = arith.constant 3.200000e+01 : f32
    %16 = vector.broadcast %cst_9 : f32 to vector<8x1xf32>
    %17 = arith.divf %15, %16 : vector<8x1xf32>
    %18 = vector.broadcast %10 : vector<8x1xf32> to vector<8x32xf32>
    %19 = arith.subf %4, %18 : vector<8x32xf32>
    %cst_10 = arith.constant 9.99999974E-6 : f32
    %20 = vector.broadcast %cst_10 : f32 to vector<8x1xf32>
    %21 = arith.addf %17, %20 : vector<8x1xf32>
    %22 = math.rsqrt %21 : vector<8x1xf32>
    %23 = vector.broadcast %22 : vector<8x1xf32> to vector<8x32xf32>
    %24 = arith.mulf %19, %23 : vector<8x32xf32>
    %25 = vector.broadcast %5 : vector<1x32xf32> to vector<8x32xf32>
    %26 = arith.mulf %24, %25 : vector<8x32xf32>
    %27 = vector.broadcast %6 : vector<1x32xf32> to vector<8x32xf32>
    %28 = arith.addf %26, %27 : vector<8x32xf32>
    %c0_11 = arith.constant 0 : index
    %c0_12 = arith.constant 0 : index
    %29 = vector.load %arg7[%c0_11, %c0_12] : memref<32x32xf32, #tpu.memory_space<vmem>>, vector<32x32xf32>
    %cst_13 = arith.constant dense<0.000000e+00> : vector<8x32xf32>
    %30 = tpu.matmul %28, %29, %cst_13 {dimension_numbers = #tpu.dot_dimension_numbers<[1], [0], [0], [1], [0, 0, 1, 1], [], []>} : vector<8x32xf32>, vector<32x32xf32>, vector<8x32xf32> -> vector<8x32xf32>
    %c0_14 = arith.constant 0 : index
    %c0_15 = arith.constant 0 : index
    %31 = vector.load %arg8[%c0_14, %c0_15] : memref<1x32xf32, #tpu.memory_space<vmem>>, vector<1x32xf32>
    %32 = vector.broadcast %31 : vector<1x32xf32> to vector<8x32xf32>
    %33 = arith.addf %30, %32 : vector<8x32xf32>
    %cst_16 = arith.constant 0.353553385 : f32
    %34 = vector.broadcast %cst_16 : f32 to vector<8x32xf32>
    %35 = arith.mulf %33, %34 : vector<8x32xf32>
    %c0_17 = arith.constant 0 : index
    %c0_18 = arith.constant 0 : index
    %c0_19 = arith.constant 0 : index
    %c0_20 = arith.constant 0 : index
    %36 = vector.load %arg4[%c0_17, %c0_18, %c0_19, %c0_20] : memref<1x1x1x8xf32, #tpu.memory_space<vmem>>, vector<1x1x1x8xf32>
    %37 = vector.shape_cast %36 : vector<1x1x1x8xf32> to vector<1x8xf32>
    %38 = vector.extract_strided_slice %35 {offsets = [0, 0], sizes = [8, 8], strides = [1, 1]} : vector<8x32xf32> to vector<8x8xf32>
    %c0_21 = arith.constant 0 : index
    %c0_22 = arith.constant 0 : index
    %39 = vector.load %arg21[%c0_21, %c0_22] : memref<8x32xf32, #tpu.memory_space<vmem>>, vector<8x8xf32>
    %cst_23 = arith.constant dense<0.000000e+00> : vector<8x8xf32>
    %40 = tpu.matmul %38, %39, %cst_23 {dimension_numbers = #tpu.dot_dimension_numbers<[1], [1], [0], [0], [0, 0, 1, 0], [], []>} : vector<8x8xf32>, vector<8x8xf32>, vector<8x8xf32> -> vector<8x8xf32>
    %41 = vector.broadcast %37 : vector<1x8xf32> to vector<8x8xf32>
    %42 = arith.addf %40, %41 : vector<8x8xf32>
    %cst_24 = arith.constant dense<0xFF800000> : vector<8xf32>
    %43 = vector.multi_reduction <maximumf>, %42, %cst_24 [1] : vector<8x8xf32> to vector<8xf32>
    %44 = vector.shape_cast %43 : vector<8xf32> to vector<8x1xf32>
    %45 = vector.broadcast %44 : vector<8x1xf32> to vector<8x8xf32>
    %46 = arith.subf %42, %45 : vector<8x8xf32>
    %47 = math.exp %46 : vector<8x8xf32>
    %cst_25 = arith.constant dense<0.000000e+00> : vector<8xf32>
    %48 = vector.multi_reduction <add>, %47, %cst_25 [1] : vector<8x8xf32> to vector<8xf32>
    %49 = vector.shape_cast %48 : vector<8xf32> to vector<8x1xf32>
    %cst_26 = arith.constant 1.000000e+00 : f32
    %50 = vector.broadcast %cst_26 : f32 to vector<8x1xf32>
    %51 = arith.divf %50, %49 : vector<8x1xf32>
    %52 = vector.broadcast %51 : vector<8x1xf32> to vector<8x8xf32>
    %53 = arith.mulf %47, %52 : vector<8x8xf32>
    %c0_27 = arith.constant 0 : index
    %c0_28 = arith.constant 0 : index
    %c0_29 = arith.constant 0 : index
    %c0_30 = arith.constant 0 : index
    %54 = vector.load %arg20[%c0_27, %c0_28, %c0_29, %c0_30] : memref<1x4x8x8xf32, #tpu.memory_space<vmem>>, vector<1x1x8x8xf32>
    %55 = vector.shape_cast %54 : vector<1x1x8x8xf32> to vector<8x8xf32>
    %56 = vector.shape_cast %53 : vector<8x8xf32> to vector<1x1x8x8xf32>
    tpu.vector_store %arg20[%c0_27, %c0_28, %c0_29, %c0_30], %56 {strides = array<i32>} : memref<1x4x8x8xf32, #tpu.memory_space<vmem>>, vector<1x1x8x8xf32>,
    %c0_31 = arith.constant 0 : index
    %c0_32 = arith.constant 0 : index
    %57 = vector.load %arg22[%c0_31, %c0_32] : memref<8x32xf32, #tpu.memory_space<vmem>>, vector<8x8xf32>
    %cst_33 = arith.constant dense<0.000000e+00> : vector<8x8xf32>
    %58 = tpu.matmul %53, %57, %cst_33 {dimension_numbers = #tpu.dot_dimension_numbers<[1], [0], [0], [1], [0, 0, 1, 1], [], []>} : vector<8x8xf32>, vector<8x8xf32>, vector<8x8xf32> -> vector<8x8xf32>
    %c0_34 = arith.constant 0 : index
    %c0_35 = arith.constant 0 : index
    %59 = vector.load %arg23[%c0_34, %c0_35] : memref<8x32xf32, #tpu.memory_space<vmem>>, vector<8x8xf32>
    tpu.vector_store %arg23[%c0_34, %c0_35], %58 {strides = array<i32>} : memref<8x32xf32, #tpu.memory_space<vmem>>, vector<8x8xf32>,
    %60 = vector.extract_strided_slice %35 {offsets = [0, 8], sizes = [8, 8], strides = [1, 1]} : vector<8x32xf32> to vector<8x8xf32>
    %c0_36 = arith.constant 0 : index
    %c8 = arith.constant 8 : index
    %61 = vector.load %arg21[%c0_36, %c8] : memref<8x32xf32, #tpu.memory_space<vmem>>, vector<8x8xf32>
    %cst_37 = arith.constant dense<0.000000e+00> : vector<8x8xf32>
    %62 = tpu.matmul %60, %61, %cst_37 {dimension_numbers = #tpu.dot_dimension_numbers<[1], [1], [0], [0], [0, 0, 1, 0], [], []>} : vector<8x8xf32>, vector<8x8xf32>, vector<8x8xf32> -> vector<8x8xf32>
    %63 = vector.broadcast %37 : vector<1x8xf32> to vector<8x8xf32>
    %64 = arith.addf %62, %63 : vector<8x8xf32>
    %cst_38 = arith.constant dense<0xFF800000> : vector<8xf32>
    %65 = vector.multi_reduction <maximumf>, %64, %cst_38 [1] : vector<8x8xf32> to vector<8xf32>
    %66 = vector.shape_cast %65 : vector<8xf32> to vector<8x1xf32>
    %67 = vector.broadcast %66 : vector<8x1xf32> to vector<8x8xf32>
    %68 = arith.subf %64, %67 : vector<8x8xf32>
    %69 = math.exp %68 : vector<8x8xf32>
    %cst_39 = arith.constant dense<0.000000e+00> : vector<8xf32>
    %70 = vector.multi_reduction <add>, %69, %cst_39 [1] : vector<8x8xf32> to vector<8xf32>
    %71 = vector.shape_cast %70 : vector<8xf32> to vector<8x1xf32>
    %cst_40 = arith.constant 1.000000e+00 : f32
    %72 = vector.broadcast %cst_40 : f32 to vector<8x1xf32>
    %73 = arith.divf %72, %71 : vector<8x1xf32>
    %74 = vector.broadcast %73 : vector<8x1xf32> to vector<8x8xf32>
    %75 = arith.mulf %69, %74 : vector<8x8xf32>
    %c0_41 = arith.constant 0 : index
    %c1 = arith.constant 1 : index
    %c0_42 = arith.constant 0 : index
    %c0_43 = arith.constant 0 : index
    %76 = vector.load %arg20[%c0_41, %c1, %c0_42, %c0_43] : memref<1x4x8x8xf32, #tpu.memory_space<vmem>>, vector<1x1x8x8xf32>
    %77 = vector.shape_cast %76 : vector<1x1x8x8xf32> to vector<8x8xf32>
    %78 = vector.shape_cast %75 : vector<8x8xf32> to vector<1x1x8x8xf32>
    tpu.vector_store %arg20[%c0_41, %c1, %c0_42, %c0_43], %78 {strides = array<i32>} : memref<1x4x8x8xf32, #tpu.memory_space<vmem>>, vector<1x1x8x8xf32>,
    %c0_44 = arith.constant 0 : index
    %c8_45 = arith.constant 8 : index
    %79 = vector.load %arg22[%c0_44, %c8_45] : memref<8x32xf32, #tpu.memory_space<vmem>>, vector<8x8xf32>
    %cst_46 = arith.constant dense<0.000000e+00> : vector<8x8xf32>
    %80 = tpu.matmul %75, %79, %cst_46 {dimension_numbers = #tpu.dot_dimension_numbers<[1], [0], [0], [1], [0, 0, 1, 1], [], []>} : vector<8x8xf32>, vector<8x8xf32>, vector<8x8xf32> -> vector<8x8xf32>
    %c0_47 = arith.constant 0 : index
    %c8_48 = arith.constant 8 : index
    %81 = vector.load %arg23[%c0_47, %c8_48] : memref<8x32xf32, #tpu.memory_space<vmem>>, vector<8x8xf32>
    tpu.vector_store %arg23[%c0_47, %c8_48], %80 {strides = array<i32>} : memref<8x32xf32, #tpu.memory_space<vmem>>, vector<8x8xf32>,
    %82 = vector.extract_strided_slice %35 {offsets = [0, 16], sizes = [8, 8], strides = [1, 1]} : vector<8x32xf32> to vector<8x8xf32>
    %c0_49 = arith.constant 0 : index
    %c16 = arith.constant 16 : index
    %83 = vector.load %arg21[%c0_49, %c16] : memref<8x32xf32, #tpu.memory_space<vmem>>, vector<8x8xf32>
    %cst_50 = arith.constant dense<0.000000e+00> : vector<8x8xf32>
    %84 = tpu.matmul %82, %83, %cst_50 {dimension_numbers = #tpu.dot_dimension_numbers<[1], [1], [0], [0], [0, 0, 1, 0], [], []>} : vector<8x8xf32>, vector<8x8xf32>, vector<8x8xf32> -> vector<8x8xf32>
    %85 = vector.broadcast %37 : vector<1x8xf32> to vector<8x8xf32>
    %86 = arith.addf %84, %85 : vector<8x8xf32>
    %cst_51 = arith.constant dense<0xFF800000> : vector<8xf32>
    %87 = vector.multi_reduction <maximumf>, %86, %cst_51 [1] : vector<8x8xf32> to vector<8xf32>
    %88 = vector.shape_cast %87 : vector<8xf32> to vector<8x1xf32>
    %89 = vector.broadcast %88 : vector<8x1xf32> to vector<8x8xf32>
    %90 = arith.subf %86, %89 : vector<8x8xf32>
    %91 = math.exp %90 : vector<8x8xf32>
    %cst_52 = arith.constant dense<0.000000e+00> : vector<8xf32>
    %92 = vector.multi_reduction <add>, %91, %cst_52 [1] : vector<8x8xf32> to vector<8xf32>
    %93 = vector.shape_cast %92 : vector<8xf32> to vector<8x1xf32>
    %cst_53 = arith.constant 1.000000e+00 : f32
    %94 = vector.broadcast %cst_53 : f32 to vector<8x1xf32>
    %95 = arith.divf %94, %93 : vector<8x1xf32>
    %96 = vector.broadcast %95 : vector<8x1xf32> to vector<8x8xf32>
    %97 = arith.mulf %91, %96 : vector<8x8xf32>
    %c0_54 = arith.constant 0 : index
    %c2 = arith.constant 2 : index
    %c0_55 = arith.constant 0 : index
    %c0_56 = arith.constant 0 : index
    %98 = vector.load %arg20[%c0_54, %c2, %c0_55, %c0_56] : memref<1x4x8x8xf32, #tpu.memory_space<vmem>>, vector<1x1x8x8xf32>
    %99 = vector.shape_cast %98 : vector<1x1x8x8xf32> to vector<8x8xf32>
    %100 = vector.shape_cast %97 : vector<8x8xf32> to vector<1x1x8x8xf32>
    tpu.vector_store %arg20[%c0_54, %c2, %c0_55, %c0_56], %100 {strides = array<i32>} : memref<1x4x8x8xf32, #tpu.memory_space<vmem>>, vector<1x1x8x8xf32>,
    %c0_57 = arith.constant 0 : index
    %c16_58 = arith.constant 16 : index
    %101 = vector.load %arg22[%c0_57, %c16_58] : memref<8x32xf32, #tpu.memory_space<vmem>>, vector<8x8xf32>
    %cst_59 = arith.constant dense<0.000000e+00> : vector<8x8xf32>
    %102 = tpu.matmul %97, %101, %cst_59 {dimension_numbers = #tpu.dot_dimension_numbers<[1], [0], [0], [1], [0, 0, 1, 1], [], []>} : vector<8x8xf32>, vector<8x8xf32>, vector<8x8xf32> -> vector<8x8xf32>
    %c0_60 = arith.constant 0 : index
    %c16_61 = arith.constant 16 : index
    %103 = vector.load %arg23[%c0_60, %c16_61] : memref<8x32xf32, #tpu.memory_space<vmem>>, vector<8x8xf32>
    tpu.vector_store %arg23[%c0_60, %c16_61], %102 {strides = array<i32>} : memref<8x32xf32, #tpu.memory_space<vmem>>, vector<8x8xf32>,
    %104 = vector.extract_strided_slice %35 {offsets = [0, 24], sizes = [8, 8], strides = [1, 1]} : vector<8x32xf32> to vector<8x8xf32>
    %c0_62 = arith.constant 0 : index
    %c24 = arith.constant 24 : index
    %105 = vector.load %arg21[%c0_62, %c24] : memref<8x32xf32, #tpu.memory_space<vmem>>, vector<8x8xf32>
    %cst_63 = arith.constant dense<0.000000e+00> : vector<8x8xf32>
    %106 = tpu.matmul %104, %105, %cst_63 {dimension_numbers = #tpu.dot_dimension_numbers<[1], [1], [0], [0], [0, 0, 1, 0], [], []>} : vector<8x8xf32>, vector<8x8xf32>, vector<8x8xf32> -> vector<8x8xf32>
    %107 = vector.broadcast %37 : vector<1x8xf32> to vector<8x8xf32>
    %108 = arith.addf %106, %107 : vector<8x8xf32>
    %cst_64 = arith.constant dense<0xFF800000> : vector<8xf32>
    %109 = vector.multi_reduction <maximumf>, %108, %cst_64 [1] : vector<8x8xf32> to vector<8xf32>
    %110 = vector.shape_cast %109 : vector<8xf32> to vector<8x1xf32>
    %111 = vector.broadcast %110 : vector<8x1xf32> to vector<8x8xf32>
    %112 = arith.subf %108, %111 : vector<8x8xf32>
    %113 = math.exp %112 : vector<8x8xf32>
    %cst_65 = arith.constant dense<0.000000e+00> : vector<8xf32>
    %114 = vector.multi_reduction <add>, %113, %cst_65 [1] : vector<8x8xf32> to vector<8xf32>
    %115 = vector.shape_cast %114 : vector<8xf32> to vector<8x1xf32>
    %cst_66 = arith.constant 1.000000e+00 : f32
    %116 = vector.broadcast %cst_66 : f32 to vector<8x1xf32>
    %117 = arith.divf %116, %115 : vector<8x1xf32>
    %118 = vector.broadcast %117 : vector<8x1xf32> to vector<8x8xf32>
    %119 = arith.mulf %113, %118 : vector<8x8xf32>
    %c0_67 = arith.constant 0 : index
    %c3 = arith.constant 3 : index
    %c0_68 = arith.constant 0 : index
    %c0_69 = arith.constant 0 : index
    %120 = vector.load %arg20[%c0_67, %c3, %c0_68, %c0_69] : memref<1x4x8x8xf32, #tpu.memory_space<vmem>>, vector<1x1x8x8xf32>
    %121 = vector.shape_cast %120 : vector<1x1x8x8xf32> to vector<8x8xf32>
    %122 = vector.shape_cast %119 : vector<8x8xf32> to vector<1x1x8x8xf32>
    tpu.vector_store %arg20[%c0_67, %c3, %c0_68, %c0_69], %122 {strides = array<i32>} : memref<1x4x8x8xf32, #tpu.memory_space<vmem>>, vector<1x1x8x8xf32>,
    %c0_70 = arith.constant 0 : index
    %c24_71 = arith.constant 24 : index
    %123 = vector.load %arg22[%c0_70, %c24_71] : memref<8x32xf32, #tpu.memory_space<vmem>>, vector<8x8xf32>
    %cst_72 = arith.constant dense<0.000000e+00> : vector<8x8xf32>
    %124 = tpu.matmul %119, %123, %cst_72 {dimension_numbers = #tpu.dot_dimension_numbers<[1], [0], [0], [1], [0, 0, 1, 1], [], []>} : vector<8x8xf32>, vector<8x8xf32>, vector<8x8xf32> -> vector<8x8xf32>
    %c0_73 = arith.constant 0 : index
    %c24_74 = arith.constant 24 : index
    %125 = vector.load %arg23[%c0_73, %c24_74] : memref<8x32xf32, #tpu.memory_space<vmem>>, vector<8x8xf32>
    tpu.vector_store %arg23[%c0_73, %c24_74], %124 {strides = array<i32>} : memref<8x32xf32, #tpu.memory_space<vmem>>, vector<8x8xf32>,
    %c0_75 = arith.constant 0 : index
    %c0_76 = arith.constant 0 : index
    %126 = vector.load %arg23[%c0_75, %c0_76] : memref<8x32xf32, #tpu.memory_space<vmem>>, vector<8x32xf32>
    %c0_77 = arith.constant 0 : index
    %c0_78 = arith.constant 0 : index
    %127 = vector.load %arg11[%c0_77, %c0_78] : memref<32x32xf32, #tpu.memory_space<vmem>>, vector<32x32xf32>
    %cst_79 = arith.constant dense<0.000000e+00> : vector<8x32xf32>
    %128 = tpu.matmul %126, %127, %cst_79 {dimension_numbers = #tpu.dot_dimension_numbers<[1], [0], [0], [1], [0, 0, 1, 1], [], []>} : vector<8x32xf32>, vector<32x32xf32>, vector<8x32xf32> -> vector<8x32xf32>
    %c0_80 = arith.constant 0 : index
    %c0_81 = arith.constant 0 : index
    %129 = vector.load %arg12[%c0_80, %c0_81] : memref<1x32xf32, #tpu.memory_space<vmem>>, vector<1x32xf32>
    %130 = vector.broadcast %129 : vector<1x32xf32> to vector<8x32xf32>
    %131 = arith.addf %128, %130 : vector<8x32xf32>
    %132 = arith.addf %131, %4 : vector<8x32xf32>
    %c0_82 = arith.constant 0 : index
    %c0_83 = arith.constant 0 : index
    %133 = vector.load %arg13[%c0_82, %c0_83] : memref<1x32xf32, #tpu.memory_space<vmem>>, vector<1x32xf32>
    %c0_84 = arith.constant 0 : index
    %c0_85 = arith.constant 0 : index
    %134 = vector.load %arg14[%c0_84, %c0_85] : memref<1x32xf32, #tpu.memory_space<vmem>>, vector<1x32xf32>
    %cst_86 = arith.constant dense<0.000000e+00> : vector<8xf32>
    %135 = vector.multi_reduction <add>, %132, %cst_86 [1] : vector<8x32xf32> to vector<8xf32>
    %136 = vector.shape_cast %135 : vector<8xf32> to vector<8x1xf32>
    %cst_87 = arith.constant 3.200000e+01 : f32
    %137 = vector.broadcast %cst_87 : f32 to vector<8x1xf32>
    %138 = arith.divf %136, %137 : vector<8x1xf32>
    %139 = vector.broadcast %138 : vector<8x1xf32> to vector<8x32xf32>
    %140 = arith.subf %132, %139 : vector<8x32xf32>
    %141 = arith.mulf %140, %140 : vector<8x32xf32>
    %cst_88 = arith.constant dense<0.000000e+00> : vector<8xf32>
    %142 = vector.multi_reduction <add>, %141, %cst_88 [1] : vector<8x32xf32> to vector<8xf32>
    %143 = vector.shape_cast %142 : vector<8xf32> to vector<8x1xf32>
    %cst_89 = arith.constant 3.200000e+01 : f32
    %144 = vector.broadcast %cst_89 : f32 to vector<8x1xf32>
    %145 = arith.divf %143, %144 : vector<8x1xf32>
    %146 = vector.broadcast %138 : vector<8x1xf32> to vector<8x32xf32>
    %147 = arith.subf %132, %146 : vector<8x32xf32>
    %cst_90 = arith.constant 9.99999974E-6 : f32
    %148 = vector.broadcast %cst_90 : f32 to vector<8x1xf32>
    %149 = arith.addf %145, %148 : vector<8x1xf32>
    %150 = math.rsqrt %149 : vector<8x1xf32>
    %151 = vector.broadcast %150 : vector<8x1xf32> to vector<8x32xf32>
    %152 = arith.mulf %147, %151 : vector<8x32xf32>
    %153 = vector.broadcast %133 : vector<1x32xf32> to vector<8x32xf32>
    %154 = arith.mulf %152, %153 : vector<8x32xf32>
    %155 = vector.broadcast %134 : vector<1x32xf32> to vector<8x32xf32>
    %156 = arith.addf %154, %155 : vector<8x32xf32>
    %c0_91 = arith.constant 0 : index
    %c0_92 = arith.constant 0 : index
    %157 = vector.load %arg15[%c0_91, %c0_92] : memref<32x64xf32, #tpu.memory_space<vmem>>, vector<32x64xf32>
    %cst_93 = arith.constant dense<0.000000e+00> : vector<8x64xf32>
    %158 = tpu.matmul %156, %157, %cst_93 {dimension_numbers = #tpu.dot_dimension_numbers<[1], [0], [0], [1], [0, 0, 1, 1], [], []>} : vector<8x32xf32>, vector<32x64xf32>, vector<8x64xf32> -> vector<8x64xf32>
    %c0_94 = arith.constant 0 : index
    %c0_95 = arith.constant 0 : index
    %159 = vector.load %arg16[%c0_94, %c0_95] : memref<1x64xf32, #tpu.memory_space<vmem>>, vector<1x64xf32>
    %160 = vector.broadcast %159 : vector<1x64xf32> to vector<8x64xf32>
    %161 = arith.addf %158, %160 : vector<8x64xf32>
    %cst_96 = arith.constant 0.000000e+00 : f32
    %162 = vector.broadcast %cst_96 : f32 to vector<8x64xf32>
    %163 = arith.maximumf %161, %162 : vector<8x64xf32>
    %c0_97 = arith.constant 0 : index
    %c0_98 = arith.constant 0 : index
    %164 = vector.load %arg17[%c0_97, %c0_98] : memref<64x32xf32, #tpu.memory_space<vmem>>, vector<64x32xf32>
    %cst_99 = arith.constant dense<0.000000e+00> : vector<8x32xf32>
    %165 = tpu.matmul %163, %164, %cst_99 {dimension_numbers = #tpu.dot_dimension_numbers<[1], [0], [0], [1], [0, 0, 1, 1], [], []>} : vector<8x64xf32>, vector<64x32xf32>, vector<8x32xf32> -> vector<8x32xf32>
    %c0_100 = arith.constant 0 : index
    %c0_101 = arith.constant 0 : index
    %166 = vector.load %arg18[%c0_100, %c0_101] : memref<1x32xf32, #tpu.memory_space<vmem>>, vector<1x32xf32>
    %167 = vector.broadcast %166 : vector<1x32xf32> to vector<8x32xf32>
    %168 = arith.addf %165, %167 : vector<8x32xf32>
    %169 = arith.addf %168, %132 : vector<8x32xf32>
    %c0_102 = arith.constant 0 : index
    %c0_103 = arith.constant 0 : index
    %c0_104 = arith.constant 0 : index
    %170 = vector.load %arg19[%c0_102, %c0_103, %c0_104] : memref<1x8x32xf32, #tpu.memory_space<vmem>>, vector<1x8x32xf32>
    %171 = vector.shape_cast %170 : vector<1x8x32xf32> to vector<8x32xf32>
    %172 = vector.shape_cast %169 : vector<8x32xf32> to vector<1x8x32xf32>
    tpu.vector_store %arg19[%c0_102, %c0_103, %c0_104], %172 {strides = array<i32>} : memref<1x8x32xf32, #tpu.memory_space<vmem>>, vector<1x8x32xf32>,
    return
  }
  func.func @transform_0(%arg0: i32, %arg1: i32) -> (i32, i32, i32) {
    %c0_i32 = arith.constant 0 : i32
    %c0_i32_0 = arith.constant 0 : i32
    %c0_i32_1 = arith.constant 0 : i32
    return %arg0, %c0_i32, %c0_i32_0 : i32, i32, i32
  }
  func.func @transform_1(%arg0: i32, %arg1: i32) -> (i32, i32, i32) {
    %c0_i32 = arith.constant 0 : i32
    %c0_i32_0 = arith.constant 0 : i32
    return %arg0, %arg1, %c0_i32 : i32, i32, i32
  }
  func.func @transform_2(%arg0: i32, %arg1: i32) -> (i32, i32, i32, i32) {
    %c0_i32 = arith.constant 0 : i32
    %c0_i32_0 = arith.constant 0 : i32
    %c0_i32_1 = arith.constant 0 : i32
    %c0_i32_2 = arith.constant 0 : i32
    return %arg0, %c0_i32, %c0_i32_0, %c0_i32_1 : i32, i32, i32, i32
  }
  func.func @transform_3(%arg0: i32, %arg1: i32) -> (i32, i32) {
    %c0_i32 = arith.constant 0 : i32
    %c0_i32_0 = arith.constant 0 : i32
    %c0_i32_1 = arith.constant 0 : i32
    return %c0_i32, %c0_i32_0 : i32, i32
  }
  func.func @transform_4(%arg0: i32, %arg1: i32) -> (i32, i32) {
    %c0_i32 = arith.constant 0 : i32
    %c0_i32_0 = arith.constant 0 : i32
    %c0_i32_1 = arith.constant 0 : i32
    return %c0_i32, %c0_i32_0 : i32, i32
  }
  func.func @transform_5(%arg0: i32, %arg1: i32) -> (i32, i32) {
    %c0_i32 = arith.constant 0 : i32
    %c0_i32_0 = arith.constant 0 : i32
    %c0_i32_1 = arith.constant 0 : i32
    return %c0_i32, %c0_i32_0 : i32, i32
  }
  func.func @transform_6(%arg0: i32, %arg1: i32) -> (i32, i32) {
    %c0_i32 = arith.constant 0 : i32
    %c0_i32_0 = arith.constant 0 : i32
    %c0_i32_1 = arith.constant 0 : i32
    return %c0_i32, %c0_i32_0 : i32, i32
  }
  func.func @transform_7(%arg0: i32, %arg1: i32) -> (i32, i32) {
    %c0_i32 = arith.constant 0 : i32
    %c0_i32_0 = arith.constant 0 : i32
    %c0_i32_1 = arith.constant 0 : i32
    return %c0_i32, %c0_i32_0 : i32, i32
  }
  func.func @transform_8(%arg0: i32, %arg1: i32) -> (i32, i32) {
    %c0_i32 = arith.constant 0 : i32
    %c0_i32_0 = arith.constant 0 : i32
    %c0_i32_1 = arith.constant 0 : i32
    return %c0_i32, %c0_i32_0 : i32, i32
  }
  func.func @transform_9(%arg0: i32, %arg1: i32) -> (i32, i32) {
    %c0_i32 = arith.constant 0 : i32
    %c0_i32_0 = arith.constant 0 : i32
    %c0_i32_1 = arith.constant 0 : i32
    return %c0_i32, %c0_i32_0 : i32, i32
  }
  func.func @transform_10(%arg0: i32, %arg1: i32) -> (i32, i32) {
    %c0_i32 = arith.constant 0 : i32
    %c0_i32_0 = arith.constant 0 : i32
    %c0_i32_1 = arith.constant 0 : i32
    return %c0_i32, %c0_i32_0 : i32, i32
  }
  func.func @transform_11(%arg0: i32, %arg1: i32) -> (i32, i32) {
    %c0_i32 = arith.constant 0 : i32
    %c0_i32_0 = arith.constant 0 : i32
    %c0_i32_1 = arith.constant 0 : i32
    return %c0_i32, %c0_i32_0 : i32, i32
  }
  func.func @transform_12(%arg0: i32, %arg1: i32) -> (i32, i32) {
    %c0_i32 = arith.constant 0 : i32
    %c0_i32_0 = arith.constant 0 : i32
    %c0_i32_1 = arith.constant 0 : i32
    return %c0_i32, %c0_i32_0 : i32, i32
  }
  func.func @transform_13(%arg0: i32, %arg1: i32) -> (i32, i32) {
    %c0_i32 = arith.constant 0 : i32
    %c0_i32_0 = arith.constant 0 : i32
    %c0_i32_1 = arith.constant 0 : i32
    return %c0_i32, %c0_i32_0 : i32, i32
  }
  func.func @transform_14(%arg0: i32, %arg1: i32) -> (i32, i32) {
    %c0_i32 = arith.constant 0 : i32
    %c0_i32_0 = arith.constant 0 : i32
    %c0_i32_1 = arith.constant 0 : i32
    return %c0_i32, %c0_i32_0 : i32, i32
  }
  func.func @transform_15(%arg0: i32, %arg1: i32) -> (i32, i32) {
    %c0_i32 = arith.constant 0 : i32
    %c0_i32_0 = arith.constant 0 : i32
    %c0_i32_1 = arith.constant 0 : i32
    return %c0_i32, %c0_i32_0 : i32, i32
  }
  func.func @transform_16(%arg0: i32, %arg1: i32) -> (i32, i32) {
    %c0_i32 = arith.constant 0 : i32
    %c0_i32_0 = arith.constant 0 : i32
    %c0_i32_1 = arith.constant 0 : i32
    return %c0_i32, %c0_i32_0 : i32, i32
  }
  func.func @transform_17(%arg0: i32, %arg1: i32) -> (i32, i32, i32) {
    %c0_i32 = arith.constant 0 : i32
    %c0_i32_0 = arith.constant 0 : i32
    return %arg0, %arg1, %c0_i32 : i32, i32, i32
  }
  func.func @transform_18(%arg0: i32, %arg1: i32) -> (i32, i32, i32, i32) {
    %c0_i32 = arith.constant 0 : i32
    %c0_i32_0 = arith.constant 0 : i32
    %c0_i32_1 = arith.constant 0 : i32
    return %arg0, %c0_i32, %arg1, %c0_i32_0 : i32, i32, i32, i32
  }
}

</mosaic_0001>

<llo_original>
// kernel: tpu_custom_call.1
$region0: #{tpu_custom_call.1}
  #allocation0 [shape = 'u32[]', space=smem, size = 0x4, offset = 0x4, fixed_abs, tag = 'smem constant byte address 0x4 - core index']
  #allocation1 [shape = 'u32[72,128]{1,0:T(1,128)}', space=vmem, size = 0x9000, scoped, tag = 'internal scratch']
  #allocation2 [shape = 'f32[8,32]{1,0:T(8,128)}', space=vmem, size = 0x1000, scoped, tag = 'scratch operand']
  #allocation3 [shape = 'f32[8,32]{1,0:T(8,128)}', space=vmem, size = 0x1000, scoped, tag = 'scratch operand']
  #allocation4 [shape = 'f32[8,32]{1,0:T(8,128)}', space=vmem, size = 0x1000, scoped, tag = 'scratch operand']
  %s0 = inlined_call_operand.hbm [shape: f32[2,8,32], index: 0, kind: input, shape index: {}]
  %s1 = inlined_call_operand.hbm [shape: f32[2,8,32], index: 1, kind: input, shape index: {}]
  %s2 = inlined_call_operand.hbm [shape: f32[2,1,1,8], index: 2, kind: input, shape index: {}]
  %s3 = inlined_call_operand.vmem [shape: f32[1,32], index: 3, kind: input, shape index: {}]
  %s4 = inlined_call_operand.vmem [shape: f32[1,32], index: 4, kind: input, shape index: {}]
  %s5 = inlined_call_operand.vmem [shape: f32[32,32], index: 5, kind: input, shape index: {}]
  %s6 = inlined_call_operand.vmem [shape: f32[1,32], index: 6, kind: input, shape index: {}]
  %s7 = inlined_call_operand.vmem [shape: f32[32,64], index: 7, kind: input, shape index: {}]
  %s8 = inlined_call_operand.vmem [shape: f32[1,64], index: 8, kind: input, shape index: {}]
  %s9 = inlined_call_operand.vmem [shape: f32[32,32], index: 9, kind: input, shape index: {}]
  %s10 = inlined_call_operand.vmem [shape: f32[1,32], index: 10, kind: input, shape index: {}]
  %s11 = inlined_call_operand.vmem [shape: f32[1,32], index: 11, kind: input, shape index: {}]
  %s12 = inlined_call_operand.vmem [shape: f32[1,32], index: 12, kind: input, shape index: {}]
  %s13 = inlined_call_operand.hbm [shape: f32[32,64], index: 13, kind: input, shape index: {}]
  %s14 = inlined_call_operand.vmem [shape: f32[1,64], index: 14, kind: input, shape index: {}]
  %s15 = inlined_call_operand.vmem [shape: f32[64,32], index: 15, kind: input, shape index: {}]
  %s16 = inlined_call_operand.vmem [shape: f32[1,32], index: 16, kind: input, shape index: {}]
  %s17 = inlined_call_operand.hbm [shape: f32[2,8,32], index: 17, kind: output, shape index: {0}]
  %s18 = inlined_call_operand.hbm [shape: f32[2,4,8,8], index: 18, kind: output, shape index: {1}]
  %19 = xla_tuple %s17, %s18
  %s20 = sld [smem:[#allocation0]]
  $region129: #{tpu_custom_call.1} parent=0
    _
  %s22 = ssub.s32 1, %s20
  %s23 = scalar_select 0, %s22, %s20
  $region1: #{tpu_custom_call.1} parent=0
    #allocation5 [shape = 'u8[8192]{0}', space=vmem, size = 0x2000, scoped, tag = 'input window, operand 0']
    #allocation6 [shape = 's32[2]{0}', space=sflag, size = 0x8, scoped, tag = 'scoped memory for tpu_custom_call.1']
    #allocation7 [shape = 's32[2]{0}', space=sflag, size = 0x8, scoped, tag = 'scoped memory for tpu_custom_call.1']
    #allocation8 [shape = 'u8[8192]{0}', space=vmem, size = 0x2000, scoped, tag = 'input window, operand 1']
    #allocation9 [shape = 's32[2]{0}', space=sflag, size = 0x8, scoped, tag = 'scoped memory for tpu_custom_call.1']
    #allocation10 [shape = 'u8[1024]{0}', space=vmem, size = 0x400, scoped, tag = 'input window, operand 2']
    #allocation11 [shape = 'u8[16384]{0}', space=vmem, size = 0x4000, scoped, tag = 'input window, operand 13, single buffered']
    #allocation12 [shape = 's32[1]{0}', space=sflag, size = 0x4, scoped, tag = 'scoped memory for tpu_custom_call.1']
    #allocation13 [shape = 'u8[8192]{0}', space=vmem, size = 0x2000, scoped, tag = 'output window, operand 0']
    #allocation14 [shape = 'u8[32768]{0}', space=vmem, size = 0x8000, scoped, tag = 'output window, operand 1']
    #allocation15 [shape = 's32[2]{0}', space=sflag, size = 0x8, scoped, tag = 'scoped memory for tpu_custom_call.1']
    %24 = vsyncpa [#allocation6], 0
    %s25 = scalar_lea.sflag [#allocation6], 1
    %26 = vsyncpa %s25, 0
    %27 = vsyncpa [#allocation9], 0
    %s28 = scalar_lea.sflag [#allocation9], 1
    %29 = vsyncpa %s28, 0
    %30 = vsyncpa [#allocation12], 0
    %31 = vsyncpa [#allocation7], 0
    %s32 = scalar_lea.sflag [#allocation7], 1
    %33 = vsyncpa %s32, 0
    %34 = vsyncpa [#allocation15], 0
    %s35 = scalar_lea.sflag [#allocation15], 1
    %36 = vsyncpa %s35, 0
    loop: start=0, step=1, limit=4
    $region2: #{tpu_custom_call.1} parent=1 // loop_pre_header
      _
    $region3: #{tpu_custom_call.1} parent=1 // loop_header
      %s38 = sphi 0, %s42
      %p39 = scmp.ge.s32.totalorder %s38, 4
      %s45 = sphi 0, %s57
      %s46 = sphi 0, %s53
      %s47 = sphi 0, %s45
      %s48 = sphi 0, %s46
      %s49 = sphi 0, %s47
      %s50 = sphi 0, %s48
      %s60 = sphi 0, %s62
      %s63 = sphi 0, %s60
      %s64 = sphi 0, %s63
      %s80 = sphi 0, %s64
      %s88 = sphi 0, %s90
      %s91 = sphi 0, %s88
      %s92 = sphi 0, %s91
      %s108 = sphi 0, %s92
      %s114 = sphi 0, %s116
      %s117 = sphi 0, %s114
      %s118 = sphi 0, %s117
      %s134 = sphi 0, %s118
      %s138 = sphi 0, %s138
      %s140 = sphi 0, %s138
      %s141 = sphi 0, %s140
      %s155 = sphi 0, %s141
      %s159 = sphi 0, %s159
      %s161 = sphi 0, %s159
      %s162 = sphi 0, %s161
      %s176 = sphi 0, %s162
      %s180 = sphi 0, %s180
      %s182 = sphi 0, %s180
      %s183 = sphi 0, %s182
      %s197 = sphi 0, %s183
      %s201 = sphi 0, %s201
      %s203 = sphi 0, %s201
      %s204 = sphi 0, %s203
      %s218 = sphi 0, %s204
      %s222 = sphi 0, %s222
      %s224 = sphi 0, %s222
      %s225 = sphi 0, %s224
      %s239 = sphi 0, %s225
      %s243 = sphi 0, %s243
      %s245 = sphi 0, %s243
      %s246 = sphi 0, %s245
      %s260 = sphi 0, %s246
      %s264 = sphi 0, %s264
      %s266 = sphi 0, %s264
      %s267 = sphi 0, %s266
      %s281 = sphi 0, %s267
      %s285 = sphi 0, %s285
      %s287 = sphi 0, %s285
      %s288 = sphi 0, %s287
      %s302 = sphi 0, %s288
      %s306 = sphi 0, %s306
      %s308 = sphi 0, %s306
      %s309 = sphi 0, %s308
      %s323 = sphi 0, %s309
      %s327 = sphi 0, %s327
      %s329 = sphi 0, %s327
      %s330 = sphi 0, %s329
      %s344 = sphi 0, %s330
      %s348 = sphi 0, %s348
      %s350 = sphi 0, %s348
      %s351 = sphi 0, %s350
      %s365 = sphi 0, %s351
      %s369 = sphi 0, %s369
      %s371 = sphi 0, %s369
      %s372 = sphi 0, %s371
      %s386 = sphi 0, %s372
      %s390 = sphi 0, %s390
      %s392 = sphi 0, %s390
      %s393 = sphi 0, %s392
      %s407 = sphi 0, %s393
      %s411 = sphi 0, %s411
      %s413 = sphi 0, %s411
      %s414 = sphi 0, %s413
      %s428 = sphi 0, %s414
      %s436 = sphi 0, %s438
      %s439 = sphi 0, %s436
      %s440 = sphi 0, %s439
      %s456 = sphi 0, %s440
      %s464 = sphi 0, %s466
      %s467 = sphi 0, %s464
      %s468 = sphi 0, %s467
      %s484 = sphi 0, %s468
    $region4: #{tpu_custom_call.1} parent=1 // loop_header_branch
      %41 = sbr.rel (%p39) target = $region8
    $region5: #{tpu_custom_call.1} parent=1 // loop_body
      %s43 = ssub.s32 %s38, 1
      %s44 = ssub.s32 %s38, 2
      %s51 = sadd.s32 1, %s46
      %p52 = scmp.ge.s32.totalorder %s51, 1
      %s53 = scalar_select %p52, 0, %s51
      %s54 = sadd.s32 1, %s45
      %s55 = scalar_select %p52, %s54, %s45
      %p56 = scmp.ge.s32.totalorder %s55, 2
      %s57 = scalar_select %p56, 0, %s55
      %s58 = ssub.s32 %s45, %s57
      %p59 = scmp.eq.s32.totalorder %s58, 0
      %s61 = sadd.s32 %s60, 1
      %s62 = scalar_select %p59, %s60, %s61
      %p65 = pneg %p59
      %p66 = scmp.eq.s32.totalorder %s38, 1
      %p67 = por %p65, %p66
      %p68 = scmp.ne.s32.totalorder %s60, %s63
      %p69 = scmp.eq.s32.totalorder %s38, 0
      %p70 = por %p68, %p69
      %p71 = scmp.ne.s32.totalorder %s60, %s63
      %p72 = scmp.eq.s32.totalorder %s43, 1
      %p73 = por %p71, %p72
      %p74 = scmp.ne.s32.totalorder %s63, %s64
      %p75 = scmp.eq.s32.totalorder %s43, 0
      %p76 = por %p74, %p75
      %p77 = scmp.ne.s32.totalorder %s63, %s64
      %p78 = scmp.eq.s32.totalorder %s44, 1
      %p79 = por %p77, %p78
      %p81 = scmp.ne.s32.totalorder %s64, %s80
      %p82 = scmp.eq.s32.totalorder %s44, 0
      %p83 = por %p81, %p82
      %s84 = ssub.s32 %s45, %s57
      %s85 = ssub.s32 %s46, %s53
      %s86 = sor.u32 %s84, %s85
      %p87 = scmp.eq.s32.totalorder %s86, 0
      %s89 = sadd.s32 %s88, 1
      %s90 = scalar_select %p87, %s88, %s89
      %p93 = pneg %p87
      %p94 = scmp.eq.s32.totalorder %s38, 1
      %p95 = por %p93, %p94
      %p96 = scmp.ne.s32.totalorder %s88, %s91
      %p97 = scmp.eq.s32.totalorder %s38, 0
      %p98 = por %p96, %p97
      %p99 = scmp.ne.s32.totalorder %s88, %s91
      %p100 = scmp.eq.s32.totalorder %s43, 1
      %p101 = por %p99, %p100
      %p102 = scmp.ne.s32.totalorder %s91, %s92
      %p103 = scmp.eq.s32.totalorder %s43, 0
      %p104 = por %p102, %p103
      %p105 = scmp.ne.s32.totalorder %s91, %s92
      %p106 = scmp.eq.s32.totalorder %s44, 1
      %p107 = por %p105, %p106
      %p109 = scmp.ne.s32.totalorder %s92, %s108
      %p110 = scmp.eq.s32.totalorder %s44, 0
      %p111 = por %p109, %p110
      %s112 = ssub.s32 %s45, %s57
      %p113 = scmp.eq.s32.totalorder %s112, 0
      %s115 = sadd.s32 %s114, 1
      %s116 = scalar_select %p113, %s114, %s115
      %p119 = pneg %p113
      %p120 = scmp.eq.s32.totalorder %s38, 1
      %p121 = por %p119, %p120
      %p122 = scmp.ne.s32.totalorder %s114, %s117
      %p123 = scmp.eq.s32.totalorder %s38, 0
      %p124 = por %p122, %p123
      %p125 = scmp.ne.s32.totalorder %s114, %s117
      %p126 = scmp.eq.s32.totalorder %s43, 1
      %p127 = por %p125, %p126
      %p128 = scmp.ne.s32.totalorder %s117, %s118
      %p129 = scmp.eq.s32.totalorder %s43, 0
      %p130 = por %p128, %p129
      %p131 = scmp.ne.s32.totalorder %s117, %s118
      %p132 = scmp.eq.s32.totalorder %s44, 1
      %p133 = por %p131, %p132
      %p135 = scmp.ne.s32.totalorder %s118, %s134
      %p136 = scmp.eq.s32.totalorder %s44, 0
      %p137 = por %p135, %p136
      %s139 = sadd.s32 %s138, 1
      %p142 = scmp.eq.s32.totalorder %s38, 1
      %p143 = scmp.ne.s32.totalorder %s138, %s140
      %p144 = scmp.eq.s32.totalorder %s38, 0
      %p145 = por %p143, %p144
      %p146 = scmp.ne.s32.totalorder %s138, %s140
      %p147 = scmp.eq.s32.totalorder %s43, 1
      %p148 = por %p146, %p147
      %p149 = scmp.ne.s32.totalorder %s140, %s141
      %p150 = scmp.eq.s32.totalorder %s43, 0
      %p151 = por %p149, %p150
      %p152 = scmp.ne.s32.totalorder %s140, %s141
      %p153 = scmp.eq.s32.totalorder %s44, 1
      %p154 = por %p152, %p153
      %p156 = scmp.ne.s32.totalorder %s141, %s155
      %p157 = scmp.eq.s32.totalorder %s44, 0
      %p158 = por %p156, %p157
      %s160 = sadd.s32 %s159, 1
      %p163 = scmp.eq.s32.totalorder %s38, 1
      %p164 = scmp.ne.s32.totalorder %s159, %s161
      %p165 = scmp.eq.s32.totalorder %s38, 0
      %p166 = por %p164, %p165
      %p167 = scmp.ne.s32.totalorder %s159, %s161
      %p168 = scmp.eq.s32.totalorder %s43, 1
      %p169 = por %p167, %p168
      %p170 = scmp.ne.s32.totalorder %s161, %s162
      %p171 = scmp.eq.s32.totalorder %s43, 0
      %p172 = por %p170, %p171
      %p173 = scmp.ne.s32.totalorder %s161, %s162
      %p174 = scmp.eq.s32.totalorder %s44, 1
      %p175 = por %p173, %p174
      %p177 = scmp.ne.s32.totalorder %s162, %s176
      %p178 = scmp.eq.s32.totalorder %s44, 0
      %p179 = por %p177, %p178
      %s181 = sadd.s32 %s180, 1
      %p184 = scmp.eq.s32.totalorder %s38, 1
      %p185 = scmp.ne.s32.totalorder %s180, %s182
      %p186 = scmp.eq.s32.totalorder %s38, 0
      %p187 = por %p185, %p186
      %p188 = scmp.ne.s32.totalorder %s180, %s182
      %p189 = scmp.eq.s32.totalorder %s43, 1
      %p190 = por %p188, %p189
      %p191 = scmp.ne.s32.totalorder %s182, %s183
      %p192 = scmp.eq.s32.totalorder %s43, 0
      %p193 = por %p191, %p192
      %p194 = scmp.ne.s32.totalorder %s182, %s183
      %p195 = scmp.eq.s32.totalorder %s44, 1
      %p196 = por %p194, %p195
      %p198 = scmp.ne.s32.totalorder %s183, %s197
      %p199 = scmp.eq.s32.totalorder %s44, 0
      %p200 = por %p198, %p199
      %s202 = sadd.s32 %s201, 1
      %p205 = scmp.eq.s32.totalorder %s38, 1
      %p206 = scmp.ne.s32.totalorder %s201, %s203
      %p207 = scmp.eq.s32.totalorder %s38, 0
      %p208 = por %p206, %p207
      %p209 = scmp.ne.s32.totalorder %s201, %s203
      %p210 = scmp.eq.s32.totalorder %s43, 1
      %p211 = por %p209, %p210
      %p212 = scmp.ne.s32.totalorder %s203, %s204
      %p213 = scmp.eq.s32.totalorder %s43, 0
      %p214 = por %p212, %p213
      %p215 = scmp.ne.s32.totalorder %s203, %s204
      %p216 = scmp.eq.s32.totalorder %s44, 1
      %p217 = por %p215, %p216
      %p219 = scmp.ne.s32.totalorder %s204, %s218
      %p220 = scmp.eq.s32.totalorder %s44, 0
      %p221 = por %p219, %p220
      %s223 = sadd.s32 %s222, 1
      %p226 = scmp.eq.s32.totalorder %s38, 1
      %p227 = scmp.ne.s32.totalorder %s222, %s224
      %p228 = scmp.eq.s32.totalorder %s38, 0
      %p229 = por %p227, %p228
      %p230 = scmp.ne.s32.totalorder %s222, %s224
      %p231 = scmp.eq.s32.totalorder %s43, 1
      %p232 = por %p230, %p231
      %p233 = scmp.ne.s32.totalorder %s224, %s225
      %p234 = scmp.eq.s32.totalorder %s43, 0
      %p235 = por %p233, %p234
      %p236 = scmp.ne.s32.totalorder %s224, %s225
      %p237 = scmp.eq.s32.totalorder %s44, 1
      %p238 = por %p236, %p237
      %p240 = scmp.ne.s32.totalorder %s225, %s239
      %p241 = scmp.eq.s32.totalorder %s44, 0
      %p242 = por %p240, %p241
      %s244 = sadd.s32 %s243, 1
      %p247 = scmp.eq.s32.totalorder %s38, 1
      %p248 = scmp.ne.s32.totalorder %s243, %s245
      %p249 = scmp.eq.s32.totalorder %s38, 0
      %p250 = por %p248, %p249
      %p251 = scmp.ne.s32.totalorder %s243, %s245
      %p252 = scmp.eq.s32.totalorder %s43, 1
      %p253 = por %p251, %p252
      %p254 = scmp.ne.s32.totalorder %s245, %s246
      %p255 = scmp.eq.s32.totalorder %s43, 0
      %p256 = por %p254, %p255
      %p257 = scmp.ne.s32.totalorder %s245, %s246
      %p258 = scmp.eq.s32.totalorder %s44, 1
      %p259 = por %p257, %p258
      %p261 = scmp.ne.s32.totalorder %s246, %s260
      %p262 = scmp.eq.s32.totalorder %s44, 0
      %p263 = por %p261, %p262
      %s265 = sadd.s32 %s264, 1
      %p268 = scmp.eq.s32.totalorder %s38, 1
      %p269 = scmp.ne.s32.totalorder %s264, %s266
      %p270 = scmp.eq.s32.totalorder %s38, 0
      %p271 = por %p269, %p270
      %p272 = scmp.ne.s32.totalorder %s264, %s266
      %p273 = scmp.eq.s32.totalorder %s43, 1
      %p274 = por %p272, %p273
      %p275 = scmp.ne.s32.totalorder %s266, %s267
      %p276 = scmp.eq.s32.totalorder %s43, 0
      %p277 = por %p275, %p276
      %p278 = scmp.ne.s32.totalorder %s266, %s267
      %p279 = scmp.eq.s32.totalorder %s44, 1
      %p280 = por %p278, %p279
      %p282 = scmp.ne.s32.totalorder %s267, %s281
      %p283 = scmp.eq.s32.totalorder %s44, 0
      %p284 = por %p282, %p283
      %s286 = sadd.s32 %s285, 1
      %p289 = scmp.eq.s32.totalorder %s38, 1
      %p290 = scmp.ne.s32.totalorder %s285, %s287
      %p291 = scmp.eq.s32.totalorder %s38, 0
      %p292 = por %p290, %p291
      %p293 = scmp.ne.s32.totalorder %s285, %s287
      %p294 = scmp.eq.s32.totalorder %s43, 1
      %p295 = por %p293, %p294
      %p296 = scmp.ne.s32.totalorder %s287, %s288
      %p297 = scmp.eq.s32.totalorder %s43, 0
      %p298 = por %p296, %p297
      %p299 = scmp.ne.s32.totalorder %s287, %s288
      %p300 = scmp.eq.s32.totalorder %s44, 1
      %p301 = por %p299, %p300
      %p303 = scmp.ne.s32.totalorder %s288, %s302
      %p304 = scmp.eq.s32.totalorder %s44, 0
      %p305 = por %p303, %p304
      %s307 = sadd.s32 %s306, 1
      %p310 = scmp.eq.s32.totalorder %s38, 1
      %p311 = scmp.ne.s32.totalorder %s306, %s308
      %p312 = scmp.eq.s32.totalorder %s38, 0
      %p313 = por %p311, %p312
      %p314 = scmp.ne.s32.totalorder %s306, %s308
      %p315 = scmp.eq.s32.totalorder %s43, 1
      %p316 = por %p314, %p315
      %p317 = scmp.ne.s32.totalorder %s308, %s309
      %p318 = scmp.eq.s32.totalorder %s43, 0
      %p319 = por %p317, %p318
      %p320 = scmp.ne.s32.totalorder %s308, %s309
      %p321 = scmp.eq.s32.totalorder %s44, 1
      %p322 = por %p320, %p321
      %p324 = scmp.ne.s32.totalorder %s309, %s323
      %p325 = scmp.eq.s32.totalorder %s44, 0
      %p326 = por %p324, %p325
      %s328 = sadd.s32 %s327, 1
      %p331 = scmp.eq.s32.totalorder %s38, 1
      %p332 = scmp.ne.s32.totalorder %s327, %s329
      %p333 = scmp.eq.s32.totalorder %s38, 0
      %p334 = por %p332, %p333
      %p335 = scmp.ne.s32.totalorder %s327, %s329
      %p336 = scmp.eq.s32.totalorder %s43, 1
      %p337 = por %p335, %p336
      %p338 = scmp.ne.s32.totalorder %s329, %s330
      %p339 = scmp.eq.s32.totalorder %s43, 0
      %p340 = por %p338, %p339
      %p341 = scmp.ne.s32.totalorder %s329, %s330
      %p342 = scmp.eq.s32.totalorder %s44, 1
      %p343 = por %p341, %p342
      %p345 = scmp.ne.s32.totalorder %s330, %s344
      %p346 = scmp.eq.s32.totalorder %s44, 0
      %p347 = por %p345, %p346
      %s349 = sadd.s32 %s348, 1
      %p352 = scmp.eq.s32.totalorder %s38, 1
      %p353 = scmp.ne.s32.totalorder %s348, %s350
      %p354 = scmp.eq.s32.totalorder %s38, 0
      %p355 = por %p353, %p354
      %p356 = scmp.ne.s32.totalorder %s348, %s350
      %p357 = scmp.eq.s32.totalorder %s43, 1
      %p358 = por %p356, %p357
      %p359 = scmp.ne.s32.totalorder %s350, %s351
      %p360 = scmp.eq.s32.totalorder %s43, 0
      %p361 = por %p359, %p360
      %p362 = scmp.ne.s32.totalorder %s350, %s351
      %p363 = scmp.eq.s32.totalorder %s44, 1
      %p364 = por %p362, %p363
      %p366 = scmp.ne.s32.totalorder %s351, %s365
      %p367 = scmp.eq.s32.totalorder %s44, 0
      %p368 = por %p366, %p367
      %s370 = sadd.s32 %s369, 1
      %p373 = scmp.eq.s32.totalorder %s38, 1
      %p374 = scmp.ne.s32.totalorder %s369, %s371
      %p375 = scmp.eq.s32.totalorder %s38, 0
      %p376 = por %p374, %p375
      %p377 = scmp.ne.s32.totalorder %s369, %s371
      %p378 = scmp.eq.s32.totalorder %s43, 1
      %p379 = por %p377, %p378
      %p380 = scmp.ne.s32.totalorder %s371, %s372
      %p381 = scmp.eq.s32.totalorder %s43, 0
      %p382 = por %p380, %p381
      %p383 = scmp.ne.s32.totalorder %s371, %s372
      %p384 = scmp.eq.s32.totalorder %s44, 1
      %p385 = por %p383, %p384
      %p387 = scmp.ne.s32.totalorder %s372, %s386
      %p388 = scmp.eq.s32.totalorder %s44, 0
      %p389 = por %p387, %p388
      %s391 = sadd.s32 %s390, 1
      %p394 = scmp.eq.s32.totalorder %s38, 1
      %p395 = scmp.ne.s32.totalorder %s390, %s392
      %p396 = scmp.eq.s32.totalorder %s38, 0
      %p397 = por %p395, %p396
      %p398 = scmp.ne.s32.totalorder %s390, %s392
      %p399 = scmp.eq.s32.totalorder %s43, 1
      %p400 = por %p398, %p399
      %p401 = scmp.ne.s32.totalorder %s392, %s393
      %p402 = scmp.eq.s32.totalorder %s43, 0
      %p403 = por %p401, %p402
      %p404 = scmp.ne.s32.totalorder %s392, %s393
      %p405 = scmp.eq.s32.totalorder %s44, 1
      %p406 = por %p404, %p405
      %p408 = scmp.ne.s32.totalorder %s393, %s407
      %p409 = scmp.eq.s32.totalorder %s44, 0
      %p410 = por %p408, %p409
      %s412 = sadd.s32 %s411, 1
      %p415 = scmp.eq.s32.totalorder %s38, 1
      %p416 = scmp.ne.s32.totalorder %s411, %s413
      %p417 = scmp.eq.s32.totalorder %s38, 0
      %p418 = por %p416, %p417
      %p419 = scmp.ne.s32.totalorder %s411, %s413
      %p420 = scmp.eq.s32.totalorder %s43, 1
      %p421 = por %p419, %p420
      %p422 = scmp.ne.s32.totalorder %s413, %s414
      %p423 = scmp.eq.s32.totalorder %s43, 0
      %p424 = por %p422, %p423
      %p425 = scmp.ne.s32.totalorder %s413, %s414
      %p426 = scmp.eq.s32.totalorder %s44, 1
      %p427 = por %p425, %p426
      %p429 = scmp.ne.s32.totalorder %s414, %s428
      %p430 = scmp.eq.s32.totalorder %s44, 0
      %p431 = por %p429, %p430
      %s432 = ssub.s32 %s45, %s57
      %s433 = ssub.s32 %s46, %s53
      %s434 = sor.u32 %s432, %s433
      %p435 = scmp.eq.s32.totalorder %s434, 0
      %s437 = sadd.s32 %s436, 1
      %s438 = scalar_select %p435, %s436, %s437
      %p441 = pneg %p435
      %p442 = scmp.eq.s32.totalorder %s38, 1
      %p443 = por %p441, %p442
      %p444 = scmp.ne.s32.totalorder %s436, %s439
      %p445 = scmp.eq.s32.totalorder %s38, 0
      %p446 = por %p444, %p445
      %p447 = scmp.ne.s32.totalorder %s436, %s439
      %p448 = scmp.eq.s32.totalorder %s43, 1
      %p449 = por %p447, %p448
      %p450 = scmp.ne.s32.totalorder %s439, %s440
      %p451 = scmp.eq.s32.totalorder %s43, 0
      %p452 = por %p450, %p451
      %p453 = scmp.ne.s32.totalorder %s439, %s440
      %p454 = scmp.eq.s32.totalorder %s44, 1
      %p455 = por %p453, %p454
      %p457 = scmp.ne.s32.totalorder %s440, %s456
      %p458 = scmp.eq.s32.totalorder %s44, 0
      %p459 = por %p457, %p458
      %s460 = ssub.s32 %s45, %s57
      %s461 = ssub.s32 %s46, %s53
      %s462 = sor.u32 %s460, %s461
      %p463 = scmp.eq.s32.totalorder %s462, 0
      %s465 = sadd.s32 %s464, 1
      %s466 = scalar_select %p463, %s464, %s465
      %p469 = pneg %p463
      %p470 = scmp.eq.s32.totalorder %s38, 1
      %p471 = por %p469, %p470
      %p472 = scmp.ne.s32.totalorder %s464, %s467
      %p473 = scmp.eq.s32.totalorder %s38, 0
      %p474 = por %p472, %p473
      %p475 = scmp.ne.s32.totalorder %s464, %s467
      %p476 = scmp.eq.s32.totalorder %s43, 1
      %p477 = por %p475, %p476
      %p478 = scmp.ne.s32.totalorder %s467, %s468
      %p479 = scmp.eq.s32.totalorder %s43, 0
      %p480 = por %p478, %p479
      %p481 = scmp.ne.s32.totalorder %s467, %s468
      %p482 = scmp.eq.s32.totalorder %s44, 1
      %p483 = por %p481, %p482
      %p485 = scmp.ne.s32.totalorder %s468, %s484
      %p486 = scmp.eq.s32.totalorder %s44, 0
      %p487 = por %p485, %p486
      %p488 = scmp.le.s32.totalorder 1, %s38
      %p489 = scmp.lt.s32.totalorder %s38, 3
      %p490 = pnand %p488, %p489
      %p491 = pneg %p490
      // Predicated region
      $region9: #{tpu_custom_call.1} parent=5 // pred_check
        _
      $region10: #{tpu_custom_call.1} parent=5 // pred_check_branch
        %493 = sbr.rel (%p490) target = $region12
      $region11: #{tpu_custom_call.1} parent=5 // pred_region
        %s494 = ssub.s32 %s38, 1
        // Predicated region
        $region13: #{tpu_custom_call.1} parent=11 // pred_check
          %p495 = pneg %p151
        $region14: #{tpu_custom_call.1} parent=11 // pred_check_branch
          %497 = sbr.rel (%p495) target = $region16
        $region15: #{tpu_custom_call.1} parent=11 // pred_region
          _
        $region16: #{tpu_custom_call.1} parent=11 // pred_fallthru
          _
        // Predicated region
        $region17: #{tpu_custom_call.1} parent=11 // pred_check
          %p498 = pneg %p172
        $region18: #{tpu_custom_call.1} parent=11 // pred_check_branch
          %500 = sbr.rel (%p498) target = $region20
        $region19: #{tpu_custom_call.1} parent=11 // pred_region
          _
        $region20: #{tpu_custom_call.1} parent=11 // pred_fallthru
          _
        // Predicated region
        $region21: #{tpu_custom_call.1} parent=11 // pred_check
          %p501 = pneg %p193
        $region22: #{tpu_custom_call.1} parent=11 // pred_check_branch
          %503 = sbr.rel (%p501) target = $region24
        $region23: #{tpu_custom_call.1} parent=11 // pred_region
          _
        $region24: #{tpu_custom_call.1} parent=11 // pred_fallthru
          _
        // Predicated region
        $region25: #{tpu_custom_call.1} parent=11 // pred_check
          %p504 = pneg %p214
        $region26: #{tpu_custom_call.1} parent=11 // pred_check_branch
          %506 = sbr.rel (%p504) target = $region28
        $region27: #{tpu_custom_call.1} parent=11 // pred_region
          _
        $region28: #{tpu_custom_call.1} parent=11 // pred_fallthru
          _
        // Predicated region
        $region29: #{tpu_custom_call.1} parent=11 // pred_check
          %p507 = pneg %p235
        $region30: #{tpu_custom_call.1} parent=11 // pred_check_branch
          %509 = sbr.rel (%p507) target = $region32
        $region31: #{tpu_custom_call.1} parent=11 // pred_region
          _
        $region32: #{tpu_custom_call.1} parent=11 // pred_fallthru
          _
        // Predicated region
        $region33: #{tpu_custom_call.1} parent=11 // pred_check
          %p510 = pneg %p256
        $region34: #{tpu_custom_call.1} parent=11 // pred_check_branch
          %512 = sbr.rel (%p510) target = $region36
        $region35: #{tpu_custom_call.1} parent=11 // pred_region
          _
        $region36: #{tpu_custom_call.1} parent=11 // pred_fallthru
          _
        // Predicated region
        $region37: #{tpu_custom_call.1} parent=11 // pred_check
          %p513 = pneg %p277
        $region38: #{tpu_custom_call.1} parent=11 // pred_check_branch
          %515 = sbr.rel (%p513) target = $region40
        $region39: #{tpu_custom_call.1} parent=11 // pred_region
          _
        $region40: #{tpu_custom_call.1} parent=11 // pred_fallthru
          _
        // Predicated region
        $region41: #{tpu_custom_call.1} parent=11 // pred_check
          %p516 = pneg %p298
        $region42: #{tpu_custom_call.1} parent=11 // pred_check_branch
          %518 = sbr.rel (%p516) target = $region44
        $region43: #{tpu_custom_call.1} parent=11 // pred_region
          _
        $region44: #{tpu_custom_call.1} parent=11 // pred_fallthru
          _
        // Predicated region
        $region45: #{tpu_custom_call.1} parent=11 // pred_check
          %p519 = pneg %p319
        $region46: #{tpu_custom_call.1} parent=11 // pred_check_branch
          %521 = sbr.rel (%p519) target = $region48
        $region47: #{tpu_custom_call.1} parent=11 // pred_region
          _
        $region48: #{tpu_custom_call.1} parent=11 // pred_fallthru
          _
        // Predicated region
        $region49: #{tpu_custom_call.1} parent=11 // pred_check
          %p522 = pneg %p340
        $region50: #{tpu_custom_call.1} parent=11 // pred_check_branch
          %524 = sbr.rel (%p522) target = $region52
        $region51: #{tpu_custom_call.1} parent=11 // pred_region
          _
        $region52: #{tpu_custom_call.1} parent=11 // pred_fallthru
          _
        // Predicated region
        $region53: #{tpu_custom_call.1} parent=11 // pred_check
          %p525 = pneg %p361
        $region54: #{tpu_custom_call.1} parent=11 // pred_check_branch
          %527 = sbr.rel (%p525) target = $region56
        $region55: #{tpu_custom_call.1} parent=11 // pred_region
          %529 = vsyncadd [#allocation12], 0
          %s530 = sshll.u32 %s13, 4
          %s531 = int_to_ptr.hbm [resolvable:$true] %s530
          %s532 = sshll.u32 [#allocation11], 4
          %s533 = int_to_ptr.vmem [resolvable:$true] %s532
          %538 = dma.hbm_to_vmem [thread:$0]  %s531, 512, %s533, [#allocation12], 128, 128, 8
        $region56: #{tpu_custom_call.1} parent=11 // pred_fallthru
          _
        // Predicated region
        $region57: #{tpu_custom_call.1} parent=11 // pred_check
          %p539 = pneg %p382
        $region58: #{tpu_custom_call.1} parent=11 // pred_check_branch
          %541 = sbr.rel (%p539) target = $region60
        $region59: #{tpu_custom_call.1} parent=11 // pred_region
          _
        $region60: #{tpu_custom_call.1} parent=11 // pred_fallthru
          _
        // Predicated region
        $region61: #{tpu_custom_call.1} parent=11 // pred_check
          %p542 = pneg %p403
        $region62: #{tpu_custom_call.1} parent=11 // pred_check_branch
          %544 = sbr.rel (%p542) target = $region64
        $region63: #{tpu_custom_call.1} parent=11 // pred_region
          _
        $region64: #{tpu_custom_call.1} parent=11 // pred_fallthru
          _
        // Predicated region
        $region65: #{tpu_custom_call.1} parent=11 // pred_check
          %p545 = pneg %p424
        $region66: #{tpu_custom_call.1} parent=11 // pred_check_branch
          %547 = sbr.rel (%p545) target = $region68
        $region67: #{tpu_custom_call.1} parent=11 // pred_region
          _
        $region68: #{tpu_custom_call.1} parent=11 // pred_fallthru
          _
      $region12: #{tpu_custom_call.1} parent=5 // pred_fallthru
        _
      %p548 = scmp.lt.s32.totalorder %s38, 2
      // Predicated region
      $region69: #{tpu_custom_call.1} parent=5 // pred_check
        %p549 = pneg %p548
      $region70: #{tpu_custom_call.1} parent=5 // pred_check_branch
        %551 = sbr.rel (%p549) target = $region72
      $region71: #{tpu_custom_call.1} parent=5 // pred_region
        // Predicated region
        $region73: #{tpu_custom_call.1} parent=71 // pred_check
          %p552 = pneg %p70
        $region74: #{tpu_custom_call.1} parent=71 // pred_check_branch
          %554 = sbr.rel (%p552) target = $region76
        $region75: #{tpu_custom_call.1} parent=71 // pred_region
          %s555 = sand.u32 %s60, 1
          %s556 = scalar_lea.sflag [#allocation6], %s555
          %s557 = sand.u32 %s60, 1
          %s558 = smul.addr %s557, 8
          %s559 = scalar_lea.vmem [#allocation5], %s558
          %561 = vsyncadd %s556, 0
          %s562 = smul.addr %s45, 8
          %s563 = scalar_lea.hbm %s0, %s562
          %s565 = sshll.u32 %s563, 4
          %s566 = int_to_ptr.hbm [resolvable:$true] %s565
          %s567 = sshll.u32 %s559, 4
          %s568 = int_to_ptr.vmem [resolvable:$true] %s567
          %570 = dma.hbm_to_vmem [thread:$0]  %s566, 128, %s568, %s556
        $region76: #{tpu_custom_call.1} parent=71 // pred_fallthru
          _
        // Predicated region
        $region77: #{tpu_custom_call.1} parent=71 // pred_check
          %p571 = pneg %p98
        $region78: #{tpu_custom_call.1} parent=71 // pred_check_branch
          %573 = sbr.rel (%p571) target = $region80
        $region79: #{tpu_custom_call.1} parent=71 // pred_region
          %s574 = sand.u32 %s38, 1
          %s575 = scalar_lea.sflag [#allocation9], %s574
          %s576 = sand.u32 %s88, 1
          %s577 = smul.addr %s576, 8
          %s578 = scalar_lea.vmem [#allocation8], %s577
          %580 = vsyncadd %s575, 0
          %s581 = sadd.s32 %s46, %s45
          %s582 = smul.addr %s581, 8
          %s583 = scalar_lea.hbm %s1, %s582
          %s585 = sshll.u32 %s583, 4
          %s586 = int_to_ptr.hbm [resolvable:$true] %s585
          %s587 = sshll.u32 %s578, 4
          %s588 = int_to_ptr.vmem [resolvable:$true] %s587
          %590 = dma.hbm_to_vmem [thread:$0]  %s586, 128, %s588, %s575
        $region80: #{tpu_custom_call.1} parent=71 // pred_fallthru
          _
        // Predicated region
        $region81: #{tpu_custom_call.1} parent=71 // pred_check
          %p591 = pneg %p124
        $region82: #{tpu_custom_call.1} parent=71 // pred_check_branch
          %593 = sbr.rel (%p591) target = $region84
        $region83: #{tpu_custom_call.1} parent=71 // pred_region
          %s594 = sand.u32 %s38, 1
          %s595 = scalar_lea.sflag [#allocation9], %s594
          %s596 = sand.u32 %s114, 1
          %s597 = scalar_lea.vmem [#allocation10], %s596
          %599 = vsyncadd %s595, 0
          %s600 = scalar_lea.hbm %s2, %s45
          %s602 = sshll.u32 %s600, 4
          %s603 = int_to_ptr.hbm [resolvable:$true] %s602
          %s604 = sshll.u32 %s597, 4
          %s605 = int_to_ptr.vmem [resolvable:$true] %s604
          %607 = dma.hbm_to_vmem [thread:$0]  %s603, 16, %s605, %s595
        $region84: #{tpu_custom_call.1} parent=71 // pred_fallthru
          _
      $region72: #{tpu_custom_call.1} parent=5 // pred_fallthru
        _
      %p608 = scmp.le.s32.totalorder 1, %s38
      %p609 = scmp.lt.s32.totalorder %s38, 3
      %p610 = pnand %p608, %p609
      %p611 = pneg %p610
      // Predicated region
      $region85: #{tpu_custom_call.1} parent=5 // pred_check
        _
      $region86: #{tpu_custom_call.1} parent=5 // pred_check_branch
        %613 = sbr.rel (%p610) target = $region88
      $region87: #{tpu_custom_call.1} parent=5 // pred_region
        %s614 = ssub.s32 %s38, 1
        %s615 = sand.u32 %s63, 1
        %s616 = scalar_lea.sflag [#allocation6], %s615
        %s617 = sand.u32 %s63, 1
        %s618 = smul.addr %s617, 8
        %s619 = scalar_lea.vmem [#allocation5], %s618
        // Predicated region
        $region89: #{tpu_custom_call.1} parent=87 // pred_check
          %p620 = pneg %p76
        $region90: #{tpu_custom_call.1} parent=87 // pred_check_branch
          %622 = sbr.rel (%p620) target = $region92
        $region91: #{tpu_custom_call.1} parent=87 // pred_region
          %624 = dma.done %s616, 128
        $region92: #{tpu_custom_call.1} parent=87 // pred_fallthru
          _
        %s625 = sand.u32 %s43, 1
        %s626 = scalar_lea.sflag [#allocation9], %s625
        %s627 = sand.u32 %s91, 1
        %s628 = smul.addr %s627, 8
        %s629 = scalar_lea.vmem [#allocation8], %s628
        // Predicated region
        $region93: #{tpu_custom_call.1} parent=87 // pred_check
          %p630 = pneg %p104
        $region94: #{tpu_custom_call.1} parent=87 // pred_check_branch
          %632 = sbr.rel (%p630) target = $region96
        $region95: #{tpu_custom_call.1} parent=87 // pred_region
          %634 = dma.done %s626, 128
        $region96: #{tpu_custom_call.1} parent=87 // pred_fallthru
          _
        %s635 = sand.u32 %s43, 1
        %s636 = scalar_lea.sflag [#allocation9], %s635
        %s637 = sand.u32 %s117, 1
        %s638 = scalar_lea.vmem [#allocation10], %s637
        // Predicated region
        $region97: #{tpu_custom_call.1} parent=87 // pred_check
          %p639 = pneg %p130
        $region98: #{tpu_custom_call.1} parent=87 // pred_check_branch
          %641 = sbr.rel (%p639) target = $region100
        $region99: #{tpu_custom_call.1} parent=87 // pred_region
          %643 = dma.done %s636, 16
        $region100: #{tpu_custom_call.1} parent=87 // pred_fallthru
          _
        // Predicated region
        $region101: #{tpu_custom_call.1} parent=87 // pred_check
          %p644 = pneg %p361
        $region102: #{tpu_custom_call.1} parent=87 // pred_check_branch
          %646 = sbr.rel (%p644) target = $region104
        $region103: #{tpu_custom_call.1} parent=87 // pred_region
          %648 = dma.done [#allocation12], 512
        $region104: #{tpu_custom_call.1} parent=87 // pred_fallthru
          _
        %s649 = sand.u32 %s63, 1
        %s650 = scalar_lea.sflag [#allocation6], %s649
        %s651 = sand.u32 %s63, 1
        %s652 = smul.addr %s651, 8
        %s653 = scalar_lea.vmem [#allocation5], %s652
        %p654 = pneg %p76
        %p655 = pneg %p73
        %s656 = sand.u32 %s43, 1
        %s657 = scalar_lea.sflag [#allocation9], %s656
        %s658 = sand.u32 %s91, 1
        %s659 = smul.addr %s658, 8
        %s660 = scalar_lea.vmem [#allocation8], %s659
        %p661 = pneg %p104
        %p662 = pneg %p101
        %s663 = sand.u32 %s43, 1
        %s664 = scalar_lea.sflag [#allocation9], %s663
        %s665 = sand.u32 %s117, 1
        %s666 = scalar_lea.vmem [#allocation10], %s665
        %p667 = pneg %p130
        %p668 = pneg %p127
        %p669 = pneg %p151
        %p670 = pneg %p148
        %p671 = pneg %p172
        %p672 = pneg %p169
        %p673 = pneg %p193
        %p674 = pneg %p190
        %p675 = pneg %p214
        %p676 = pneg %p211
        %p677 = pneg %p235
        %p678 = pneg %p232
        %p679 = pneg %p256
        %p680 = pneg %p253
        %p681 = pneg %p277
        %p682 = pneg %p274
        %p683 = pneg %p298
        %p684 = pneg %p295
        %p685 = pneg %p319
        %p686 = pneg %p316
        %p687 = pneg %p340
        %p688 = pneg %p337
        %p689 = pneg %p361
        %p690 = pneg %p358
        %p691 = pneg %p382
        %p692 = pneg %p379
        %p693 = pneg %p403
        %p694 = pneg %p400
        %p695 = pneg %p424
        %p696 = pneg %p421
        %p697 = pneg %p452
        %p698 = pneg %p449
        %s699 = sand.u32 %s439, 1
        %s700 = scalar_lea.sflag [#allocation7], %s699
        %s701 = sand.u32 %s439, 1
        %s702 = smul.addr %s701, 8
        %s703 = scalar_lea.vmem [#allocation13], %s702
        %p704 = pneg %p480
        %p705 = pneg %p477
        %s706 = sand.u32 %s467, 1
        %s707 = scalar_lea.sflag [#allocation15], %s706
        %s708 = sand.u32 %s467, 1
        %s709 = smul.addr %s708, 32
        %s710 = scalar_lea.vmem [#allocation14], %s709
        %p711 = scmp.eq.s32.totalorder %s48, 0
        // Predicated region
        $region105: #{tpu_custom_call.1} parent=87 // pred_check
          %p712 = pneg %p711
        $region106: #{tpu_custom_call.1} parent=87 // pred_check_branch
          %714 = sbr.rel (%p712) target = $region108
        $region107: #{tpu_custom_call.1} parent=87 // pred_region
          %v715 = vld [vmem:[%s619] sm:$0xff]
          %v716 = vld [vmem:[%s3] sm:$0x1]
          %v717 = vld [vmem:[%s4] sm:$0x1]
          %vm718 = vcmask 261120
          %v719 = vsel %vm718, %v715, 0.0
          %720 = vadd.xlane.f32.xlu0 %v719
          %v721 = vpop.xlane.xlu0 %720
          %v722 = vrcp.pop 32.0
          %v723 = vmul.f32 32.0, %v722
          %v724 = vsub.f32 1.0, %v723
          %v725 = vmul.f32 %v722, %v724
          %v726 = vadd.f32 %v722, %v725
          %vm727 = vweird.f32 %v722
          %v728 = vsel %vm727, %v722, %v726
          %v729 = vmul.f32 %v721, %v728
          %v730 = vsub.f32 %v715, %v729
          %v731 = vmul.f32 %v730, %v730
          %v732 = vsel %vm718, %v731, 0.0
          %733 = vadd.xlane.f32.xlu0 %v732
          %v734 = vpop.xlane.xlu0 %733
          %v735 = vmul.f32 %v734, %v728
          %v736 = vadd.f32 %v735, 1e-05
          %v737 = vrsqrt.pop %v736
          %v738 = vmul.f32 %v737, %v736
          %v739 = vmul.f32 %v738, %v737
          %v740 = vmul.f32 0.5, %v739
          %v741 = vsub.f32 1.5, %v740
          %v742 = vmul.f32 %v737, %v741
          %vm743 = vweird.f32 %v736
          %vm744 = vweird.f32 %v737
          %vm745 = vmor %vm743, %vm744
          %v746 = vsel %vm745, %v737, %v742
          %v747 = vmul.f32 %v730, %v746
          %v749 = vperm.slane %v716, 0
          %v751 = vmul.f32 %v747, %v749
          %v753 = vperm.slane %v717, 0
          %v755 = vadd.f32 %v751, %v753
          %v756 = vld [vmem:[%s7] sm:$0xff]
          %v757 = vld [vmem:[%s7 + $0x8] sm:$0xff]
          %v758 = vld [vmem:[%s7 + $0x10] sm:$0xff]
          %v759 = vld [vmem:[%s7 + $0x18] sm:$0xff]
          %v760 = vld [vmem:[%s8] sm:$0x1]
          %v762 = vperm.slane %v760, 0
          %v765 = vsel %vm718, %v755, 0
          %767 = vmatpush.msra.mxu0 0.0
          %768 = vmatpush.msra.mxu0 0.0
          %769 = vmatpush.msra.mxu0 0.0
          %770 = vmatpush.msra.mxu0 0.0
          %771 = vmatpush.msra.mxu0 0.0
          %772 = vmatpush.msra.mxu0 0.0
          %773 = vmatpush.msra.mxu0 0.0
          %774 = vmatpush.msra.mxu0 0.0
          %775 = vmatpush.msra.mxu0 0.0
          %776 = vmatpush.msra.mxu0 0.0
          %777 = vmatpush.msra.mxu0 0.0
          %778 = vmatpush.msra.mxu0 0.0
          %779 = vmatpush.msra.mxu0 %v759
          %780 = vmatpush.msra.mxu0 %v758
          %781 = vmatpush.msra.mxu0 %v757
          %782 = vmatpush.msra.mxu0 %v756
          %783 = vmatmul.f32.gmra.mxu0 %v765
          %v784 = vpop.f32.mrf.mxu0
          %v785 = vadd.f32 %v762, %v784
          %786 = vdwg.mxu0
          %787 = vst.msk [vmem:[#allocation2] sm:$0xff] %vm718, %v785
          %789 = vrot.lane.b32.xlu0 %v785, 96
          %v790 = vpop.permute.xlu0 %789
          %792 = vst.msk [vmem:[#allocation3] sm:$0xff] %vm718, %v790
        $region108: #{tpu_custom_call.1} parent=87 // pred_fallthru
          _
        %v793 = vld [vmem:[%s629] sm:$0xff]
        %v794 = vld [vmem:[%s3] sm:$0x1]
        %v795 = vld [vmem:[%s4] sm:$0x1]
        %vm796 = vcmask 261120
        %v797 = vsel %vm796, %v793, 0.0
        %798 = vadd.xlane.f32.xlu0 %v797
        %v799 = vpop.xlane.xlu0 %798
        %v800 = vrcp.pop 32.0
        %v801 = vmul.f32 32.0, %v800
        %v802 = vsub.f32 1.0, %v801
        %v803 = vmul.f32 %v800, %v802
        %v804 = vadd.f32 %v800, %v803
        %vm805 = vweird.f32 %v800
        %v806 = vsel %vm805, %v800, %v804
        %v807 = vmul.f32 %v799, %v806
        %v808 = vsub.f32 %v793, %v807
        %v809 = vmul.f32 %v808, %v808
        %v810 = vsel %vm796, %v809, 0.0
        %811 = vadd.xlane.f32.xlu0 %v810
        %v812 = vpop.xlane.xlu0 %811
        %v813 = vmul.f32 %v812, %v806
        %v814 = vadd.f32 %v813, 1e-05
        %v815 = vrsqrt.pop %v814
        %v816 = vmul.f32 %v815, %v814
        %v817 = vmul.f32 %v816, %v815
        %v818 = vmul.f32 0.5, %v817
        %v819 = vsub.f32 1.5, %v818
        %v820 = vmul.f32 %v815, %v819
        %vm821 = vweird.f32 %v814
        %vm822 = vweird.f32 %v815
        %vm823 = vmor %vm821, %vm822
        %v824 = vsel %vm823, %v815, %v820
        %v825 = vmul.f32 %v808, %v824
        %v827 = vperm.slane %v794, 0
        %v829 = vmul.f32 %v825, %v827
        %v831 = vperm.slane %v795, 0
        %v833 = vadd.f32 %v829, %v831
        %v834 = vld [vmem:[%s5] sm:$0xff]
        %v835 = vld [vmem:[%s5 + $0x8] sm:$0xff]
        %v836 = vld [vmem:[%s5 + $0x10] sm:$0xff]
        %v837 = vld [vmem:[%s5 + $0x18] sm:$0xff]
        %v838 = vld [vmem:[%s6] sm:$0x1]
        %v840 = vperm.slane %v838, 0
        %v843 = vsel %vm796, %v833, 0
        %845 = vmatpush.msra.mxu0 0.0
        %846 = vmatpush.msra.mxu0 0.0
        %847 = vmatpush.msra.mxu0 0.0
        %848 = vmatpush.msra.mxu0 0.0
        %849 = vmatpush.msra.mxu0 0.0
        %850 = vmatpush.msra.mxu0 0.0
        %851 = vmatpush.msra.mxu0 0.0
        %852 = vmatpush.msra.mxu0 0.0
        %853 = vmatpush.msra.mxu0 0.0
        %854 = vmatpush.msra.mxu0 0.0
        %855 = vmatpush.msra.mxu0 0.0
        %856 = vmatpush.msra.mxu0 0.0
        %857 = vmatpush.msra.mxu0 %v837
        %858 = vmatpush.msra.mxu0 %v836
        %859 = vmatpush.msra.mxu0 %v835
        %860 = vmatpush.msra.mxu0 %v834
        %861 = vmatmul.f32.gmra.mxu0 %v843
        %v862 = vpop.f32.mrf.mxu0
        %v863 = vadd.f32 %v840, %v862
        %864 = vdwg.mxu0
        %v865 = vmul.f32 %v863, 0.35355338
        %v866 = vld [vmem:[%s638] sm:$0x1]
        %v867 = vld [vmem:[#allocation2] sm:$0xff]
        %v869 = vperm.slane %v866, 0
        %vm871 = vcmask 64512
        %v873 = vsel %vm871, %v865, 0
        %v876 = vsel %vm871, %v867, 0
        %878 = vmatpush.xpose.msra.mxu0 0.0
        %879 = vmatpush.xpose.msra.mxu0 0.0
        %880 = vmatpush.xpose.msra.mxu0 0.0
        %881 = vmatpush.xpose.msra.mxu0 0.0
        %882 = vmatpush.xpose.msra.mxu0 0.0
        %883 = vmatpush.xpose.msra.mxu0 0.0
        %884 = vmatpush.xpose.msra.mxu0 0.0
        %885 = vmatpush.xpose.msra.mxu0 0.0
        %886 = vmatpush.xpose.msra.mxu0 0.0
        %887 = vmatpush.xpose.msra.mxu0 0.0
        %888 = vmatpush.xpose.msra.mxu0 0.0
        %889 = vmatpush.xpose.msra.mxu0 0.0
        %890 = vmatpush.xpose.msra.mxu0 0.0
        %891 = vmatpush.xpose.msra.mxu0 0.0
        %892 = vmatpush.xpose.msra.mxu0 0.0
        %893 = vmatpush.xpose.msra.mxu0 %v876
        %894 = vmatmul.f32.gmra.mxu0 %v873
        %v895 = vpop.f32.mrf.mxu0
        %v896 = vadd.f32 %v869, %v895
        %897 = vdwg.mxu0
        %v898 = vsel %vm871, %v896, -inf
        %899 = vmax.xlane.f32.xlu0 %v898
        %v900 = vpop.xlane.xlu0 %899
        %v901 = vsub.f32 %v896, %v900
        %v902 = vmul.f32 %v901, 1.442695
        %v903 = vpow.pop %v902
        %v904 = vsel %vm871, %v903, 0.0
        %905 = vadd.xlane.f32.xlu0 %v904
        %v906 = vpop.xlane.xlu0 %905
        %v907 = vrcp.pop %v906
        %v908 = vmul.f32 %v906, %v907
        %v909 = vsub.f32 1.0, %v908
        %v910 = vmul.f32 %v907, %v909
        %v911 = vadd.f32 %v907, %v910
        %vm912 = vweird.f32 %v906
        %vm913 = vweird.f32 %v907
        %vm914 = vmor %vm912, %vm913
        %v915 = vsel %vm914, %v907, %v911
        %v916 = vand.u32 2147483647, %v906
        %vm917 = vcmp.eq.f32.partialorder %v916, 8.507059e+37
        %v918 = vand.u32 %v906, 2147483648
        %v919 = vor.u32 1.1754944e-38, %v918
        %v920 = vsel %vm917, %v919, %v915
        %v921 = vmul.f32 1.0, %v920
        %v922 = vmul.f32 %v903, %v921
        %923 = vst.msk [vmem:[%s710] sm:$0xff] %vm871, %v922
        %v924 = vld [vmem:[#allocation3] sm:$0xff]
        %v926 = vsel %vm871, %v922, 0
        %928 = vmatpush.msra.mxu0 0.0
        %929 = vmatpush.msra.mxu0 0.0
        %930 = vmatpush.msra.mxu0 0.0
        %931 = vmatpush.msra.mxu0 0.0
        %932 = vmatpush.msra.mxu0 0.0
        %933 = vmatpush.msra.mxu0 0.0
        %934 = vmatpush.msra.mxu0 0.0
        %935 = vmatpush.msra.mxu0 0.0
        %936 = vmatpush.msra.mxu0 0.0
        %937 = vmatpush.msra.mxu0 0.0
        %938 = vmatpush.msra.mxu0 0.0
        %939 = vmatpush.msra.mxu0 0.0
        %940 = vmatpush.msra.mxu0 0.0
        %941 = vmatpush.msra.mxu0 0.0
        %942 = vmatpush.msra.mxu0 0.0
        %943 = vmatpush.msra.mxu0 %v924
        %944 = vmatmul.f32.gmra.mxu0 %v926
        %v945 = vpop.f32.mrf.mxu0
        %v946 = vadd.f32 0.0, %v945
        %947 = vdwg.mxu0
        %948 = vst.msk [vmem:[#allocation4] sm:$0xff] %vm871, %v946
        %v949 = vld [vmem:[#allocation2] sm:$0xff]
        %950 = vrot.lane.b32.xlu0 %v865, 120
        %v951 = vpop.permute.xlu0 %950
        %953 = vrot.lane.b32.xlu0 %v949, 120
        %v954 = vpop.permute.xlu0 %953
        %v955 = vsel %vm871, %v951, 0
        %v957 = vsel %vm871, %v954, 0
        %959 = vmatpush.xpose.msra.mxu0 0.0
        %960 = vmatpush.xpose.msra.mxu0 0.0
        %961 = vmatpush.xpose.msra.mxu0 0.0
        %962 = vmatpush.xpose.msra.mxu0 0.0
        %963 = vmatpush.xpose.msra.mxu0 0.0
        %964 = vmatpush.xpose.msra.mxu0 0.0
        %965 = vmatpush.xpose.msra.mxu0 0.0
        %966 = vmatpush.xpose.msra.mxu0 0.0
        %967 = vmatpush.xpose.msra.mxu0 0.0
        %968 = vmatpush.xpose.msra.mxu0 0.0
        %969 = vmatpush.xpose.msra.mxu0 0.0
        %970 = vmatpush.xpose.msra.mxu0 0.0
        %971 = vmatpush.xpose.msra.mxu0 0.0
        %972 = vmatpush.xpose.msra.mxu0 0.0
        %973 = vmatpush.xpose.msra.mxu0 0.0
        %974 = vmatpush.xpose.msra.mxu0 %v957
        %975 = vmatmul.f32.gmra.mxu0 %v955
        %v976 = vpop.f32.mrf.mxu0
        %v977 = vadd.f32 %v869, %v976
        %978 = vdwg.mxu0
        %v979 = vsel %vm871, %v977, -inf
        %980 = vmax.xlane.f32.xlu0 %v979
        %v981 = vpop.xlane.xlu0 %980
        %v982 = vsub.f32 %v977, %v981
        %v983 = vmul.f32 %v982, 1.442695
        %v984 = vpow.pop %v983
        %v985 = vsel %vm871, %v984, 0.0
        %986 = vadd.xlane.f32.xlu0 %v985
        %v987 = vpop.xlane.xlu0 %986
        %v988 = vrcp.pop %v987
        %v989 = vmul.f32 %v987, %v988
        %v990 = vsub.f32 1.0, %v989
        %v991 = vmul.f32 %v988, %v990
        %v992 = vadd.f32 %v988, %v991
        %vm993 = vweird.f32 %v987
        %vm994 = vweird.f32 %v988
        %vm995 = vmor %vm993, %vm994
        %v996 = vsel %vm995, %v988, %v992
        %v997 = vand.u32 2147483647, %v987
        %vm998 = vcmp.eq.f32.partialorder %v997, 8.507059e+37
        %v999 = vand.u32 %v987, 2147483648
        %v1000 = vor.u32 1.1754944e-38, %v999
        %v1001 = vsel %vm998, %v1000, %v996
        %v1002 = vmul.f32 1.0, %v1001
        %v1003 = vmul.f32 %v984, %v1002
        %s1004 = scalar_lea.vmem %s710, 8 [#allocation14]
        %1005 = vst.msk [vmem:[%s1004] sm:$0xff] %vm871, %v1003
        %v1006 = vld [vmem:[#allocation3] sm:$0xff]
        %1008 = vrot.lane.b32.xlu0 %v1006, 120
        %v1009 = vpop.permute.xlu0 %1008
        %v1012 = vsel %vm871, %v1003, 0
        %1014 = vmatpush.msra.mxu0 0.0
        %1015 = vmatpush.msra.mxu0 0.0
        %1016 = vmatpush.msra.mxu0 0.0
        %1017 = vmatpush.msra.mxu0 0.0
        %1018 = vmatpush.msra.mxu0 0.0
        %1019 = vmatpush.msra.mxu0 0.0
        %1020 = vmatpush.msra.mxu0 0.0
        %1021 = vmatpush.msra.mxu0 0.0
        %1022 = vmatpush.msra.mxu0 0.0
        %1023 = vmatpush.msra.mxu0 0.0
        %1024 = vmatpush.msra.mxu0 0.0
        %1025 = vmatpush.msra.mxu0 0.0
        %1026 = vmatpush.msra.mxu0 0.0
        %1027 = vmatpush.msra.mxu0 0.0
        %1028 = vmatpush.msra.mxu0 0.0
        %1029 = vmatpush.msra.mxu0 %v1009
        %1030 = vmatmul.f32.gmra.mxu0 %v1012
        %v1031 = vpop.f32.mrf.mxu0
        %v1032 = vadd.f32 0.0, %v1031
        %1033 = vdwg.mxu0
        %1035 = vrot.lane.b32.xlu0 %v1032, 8
        %v1036 = vpop.permute.xlu0 %1035
        %vm1038 = vcmask 130112
        %1039 = vst.msk [vmem:[#allocation4] sm:$0xff] %vm1038, %v1036
        %v1040 = vld [vmem:[#allocation2] sm:$0xff]
        %1041 = vrot.lane.b32.xlu0 %v865, 112
        %v1042 = vpop.permute.xlu0 %1041
        %1044 = vrot.lane.b32.xlu0 %v1040, 112
        %v1045 = vpop.permute.xlu0 %1044
        %v1046 = vsel %vm871, %v1042, 0
        %v1048 = vsel %vm871, %v1045, 0
        %1050 = vmatpush.xpose.msra.mxu0 0.0
        %1051 = vmatpush.xpose.msra.mxu0 0.0
        %1052 = vmatpush.xpose.msra.mxu0 0.0
        %1053 = vmatpush.xpose.msra.mxu0 0.0
        %1054 = vmatpush.xpose.msra.mxu0 0.0
        %1055 = vmatpush.xpose.msra.mxu0 0.0
        %1056 = vmatpush.xpose.msra.mxu0 0.0
        %1057 = vmatpush.xpose.msra.mxu0 0.0
        %1058 = vmatpush.xpose.msra.mxu0 0.0
        %1059 = vmatpush.xpose.msra.mxu0 0.0
        %1060 = vmatpush.xpose.msra.mxu0 0.0
        %1061 = vmatpush.xpose.msra.mxu0 0.0
        %1062 = vmatpush.xpose.msra.mxu0 0.0
        %1063 = vmatpush.xpose.msra.mxu0 0.0
        %1064 = vmatpush.xpose.msra.mxu0 0.0
        %1065 = vmatpush.xpose.msra.mxu0 %v1048
        %1066 = vmatmul.f32.gmra.mxu0 %v1046
        %v1067 = vpop.f32.mrf.mxu0
        %v1068 = vadd.f32 %v869, %v1067
        %1069 = vdwg.mxu0
        %v1070 = vsel %vm871, %v1068, -inf
        %1071 = vmax.xlane.f32.xlu0 %v1070
        %v1072 = vpop.xlane.xlu0 %1071
        %v1073 = vsub.f32 %v1068, %v1072
        %v1074 = vmul.f32 %v1073, 1.442695
        %v1075 = vpow.pop %v1074
        %v1076 = vsel %vm871, %v1075, 0.0
        %1077 = vadd.xlane.f32.xlu0 %v1076
        %v1078 = vpop.xlane.xlu0 %1077
        %v1079 = vrcp.pop %v1078
        %v1080 = vmul.f32 %v1078, %v1079
        %v1081 = vsub.f32 1.0, %v1080
        %v1082 = vmul.f32 %v1079, %v1081
        %v1083 = vadd.f32 %v1079, %v1082
        %vm1084 = vweird.f32 %v1078
        %vm1085 = vweird.f32 %v1079
        %vm1086 = vmor %vm1084, %vm1085
        %v1087 = vsel %vm1086, %v1079, %v1083
        %v1088 = vand.u32 2147483647, %v1078
        %vm1089 = vcmp.eq.f32.partialorder %v1088, 8.507059e+37
        %v1090 = vand.u32 %v1078, 2147483648
        %v1091 = vor.u32 1.1754944e-38, %v1090
        %v1092 = vsel %vm1089, %v1091, %v1087
        %v1093 = vmul.f32 1.0, %v1092
        %v1094 = vmul.f32 %v1075, %v1093
        %s1095 = scalar_lea.vmem %s710, 16 [#allocation14]
        %1096 = vst.msk [vmem:[%s1095] sm:$0xff] %vm871, %v1094
        %v1097 = vld [vmem:[#allocation3] sm:$0xff]
        %1099 = vrot.lane.b32.xlu0 %v1097, 112
        %v1100 = vpop.permute.xlu0 %1099
        %v1103 = vsel %vm871, %v1094, 0
        %1105 = vmatpush.msra.mxu0 0.0
        %1106 = vmatpush.msra.mxu0 0.0
        %1107 = vmatpush.msra.mxu0 0.0
        %1108 = vmatpush.msra.mxu0 0.0
        %1109 = vmatpush.msra.mxu0 0.0
        %1110 = vmatpush.msra.mxu0 0.0
        %1111 = vmatpush.msra.mxu0 0.0
        %1112 = vmatpush.msra.mxu0 0.0
        %1113 = vmatpush.msra.mxu0 0.0
        %1114 = vmatpush.msra.mxu0 0.0
        %1115 = vmatpush.msra.mxu0 0.0
        %1116 = vmatpush.msra.mxu0 0.0
        %1117 = vmatpush.msra.mxu0 0.0
        %1118 = vmatpush.msra.mxu0 0.0
        %1119 = vmatpush.msra.mxu0 0.0
        %1120 = vmatpush.msra.mxu0 %v1100
        %1121 = vmatmul.f32.gmra.mxu0 %v1103
        %v1122 = vpop.f32.mrf.mxu0
        %v1123 = vadd.f32 0.0, %v1122
        %1124 = vdwg.mxu0
        %1126 = vrot.lane.b32.xlu0 %v1123, 16
        %v1127 = vpop.permute.xlu0 %1126
        %vm1129 = vcmask 195712
        %1130 = vst.msk [vmem:[#allocation4] sm:$0xff] %vm1129, %v1127
        %v1131 = vld [vmem:[#allocation2] sm:$0xff]
        %1132 = vrot.lane.b32.xlu0 %v865, 104
        %v1133 = vpop.permute.xlu0 %1132
        %1135 = vrot.lane.b32.xlu0 %v1131, 104
        %v1136 = vpop.permute.xlu0 %1135
        %v1137 = vsel %vm871, %v1133, 0
        %v1139 = vsel %vm871, %v1136, 0
        %1141 = vmatpush.xpose.msra.mxu0 0.0
        %1142 = vmatpush.xpose.msra.mxu0 0.0
        %1143 = vmatpush.xpose.msra.mxu0 0.0
        %1144 = vmatpush.xpose.msra.mxu0 0.0
        %1145 = vmatpush.xpose.msra.mxu0 0.0
        %1146 = vmatpush.xpose.msra.mxu0 0.0
        %1147 = vmatpush.xpose.msra.mxu0 0.0
        %1148 = vmatpush.xpose.msra.mxu0 0.0
        %1149 = vmatpush.xpose.msra.mxu0 0.0
        %1150 = vmatpush.xpose.msra.mxu0 0.0
        %1151 = vmatpush.xpose.msra.mxu0 0.0
        %1152 = vmatpush.xpose.msra.mxu0 0.0
        %1153 = vmatpush.xpose.msra.mxu0 0.0
        %1154 = vmatpush.xpose.msra.mxu0 0.0
        %1155 = vmatpush.xpose.msra.mxu0 0.0
        %1156 = vmatpush.xpose.msra.mxu0 %v1139
        %1157 = vmatmul.f32.gmra.mxu0 %v1137
        %v1158 = vpop.f32.mrf.mxu0
        %v1159 = vadd.f32 %v869, %v1158
        %1160 = vdwg.mxu0
        %v1161 = vsel %vm871, %v1159, -inf
        %1162 = vmax.xlane.f32.xlu0 %v1161
        %v1163 = vpop.xlane.xlu0 %1162
        %v1164 = vsub.f32 %v1159, %v1163
        %v1165 = vmul.f32 %v1164, 1.442695
        %v1166 = vpow.pop %v1165
        %v1167 = vsel %vm871, %v1166, 0.0
        %1168 = vadd.xlane.f32.xlu0 %v1167
        %v1169 = vpop.xlane.xlu0 %1168
        %v1170 = vrcp.pop %v1169
        %v1171 = vmul.f32 %v1169, %v1170
        %v1172 = vsub.f32 1.0, %v1171
        %v1173 = vmul.f32 %v1170, %v1172
        %v1174 = vadd.f32 %v1170, %v1173
        %vm1175 = vweird.f32 %v1169
        %vm1176 = vweird.f32 %v1170
        %vm1177 = vmor %vm1175, %vm1176
        %v1178 = vsel %vm1177, %v1170, %v1174
        %v1179 = vand.u32 2147483647, %v1169
        %vm1180 = vcmp.eq.f32.partialorder %v1179, 8.507059e+37
        %v1181 = vand.u32 %v1169, 2147483648
        %v1182 = vor.u32 1.1754944e-38, %v1181
        %v1183 = vsel %vm1180, %v1182, %v1178
        %v1184 = vmul.f32 1.0, %v1183
        %v1185 = vmul.f32 %v1166, %v1184
        %s1186 = scalar_lea.vmem %s710, 24 [#allocation14]
        %1187 = vst.msk [vmem:[%s1186] sm:$0xff] %vm871, %v1185
        %v1188 = vld [vmem:[#allocation3] sm:$0xff]
        %1190 = vrot.lane.b32.xlu0 %v1188, 104
        %v1191 = vpop.permute.xlu0 %1190
        %v1194 = vsel %vm871, %v1185, 0
        %1196 = vmatpush.msra.mxu0 0.0
        %1197 = vmatpush.msra.mxu0 0.0
        %1198 = vmatpush.msra.mxu0 0.0
        %1199 = vmatpush.msra.mxu0 0.0
        %1200 = vmatpush.msra.mxu0 0.0
        %1201 = vmatpush.msra.mxu0 0.0
        %1202 = vmatpush.msra.mxu0 0.0
        %1203 = vmatpush.msra.mxu0 0.0
        %1204 = vmatpush.msra.mxu0 0.0
        %1205 = vmatpush.msra.mxu0 0.0
        %1206 = vmatpush.msra.mxu0 0.0
        %1207 = vmatpush.msra.mxu0 0.0
        %1208 = vmatpush.msra.mxu0 0.0
        %1209 = vmatpush.msra.mxu0 0.0
        %1210 = vmatpush.msra.mxu0 0.0
        %1211 = vmatpush.msra.mxu0 %v1191
        %1212 = vmatmul.f32.gmra.mxu0 %v1194
        %v1213 = vpop.f32.mrf.mxu0
        %v1214 = vadd.f32 0.0, %v1213
        %1215 = vdwg.mxu0
        %1217 = vrot.lane.b32.xlu0 %v1214, 24
        %v1218 = vpop.permute.xlu0 %1217
        %vm1220 = vcmask 261312
        %1221 = vst.msk [vmem:[#allocation4] sm:$0xff] %vm1220, %v1218
        %v1222 = vld [vmem:[#allocation4] sm:$0xff]
        %v1223 = vld [vmem:[%s9] sm:$0xff]
        %v1224 = vld [vmem:[%s9 + $0x8] sm:$0xff]
        %v1225 = vld [vmem:[%s9 + $0x10] sm:$0xff]
        %v1226 = vld [vmem:[%s9 + $0x18] sm:$0xff]
        %v1227 = vld [vmem:[%s10] sm:$0x1]
        %v1229 = vperm.slane %v1227, 0
        %v1232 = vsel %vm796, %v1222, 0
        %1234 = vmatpush.msra.mxu0 0.0
        %1235 = vmatpush.msra.mxu0 0.0
        %1236 = vmatpush.msra.mxu0 0.0
        %1237 = vmatpush.msra.mxu0 0.0
        %1238 = vmatpush.msra.mxu0 0.0
        %1239 = vmatpush.msra.mxu0 0.0
        %1240 = vmatpush.msra.mxu0 0.0
        %1241 = vmatpush.msra.mxu0 0.0
        %1242 = vmatpush.msra.mxu0 0.0
        %1243 = vmatpush.msra.mxu0 0.0
        %1244 = vmatpush.msra.mxu0 0.0
        %1245 = vmatpush.msra.mxu0 0.0
        %1246 = vmatpush.msra.mxu0 %v1226
        %1247 = vmatpush.msra.mxu0 %v1225
        %1248 = vmatpush.msra.mxu0 %v1224
        %1249 = vmatpush.msra.mxu0 %v1223
        %1250 = vmatmul.f32.gmra.mxu0 %v1232
        %v1251 = vpop.f32.mrf.mxu0
        %v1252 = vadd.f32 %v1229, %v1251
        %1253 = vdwg.mxu0
        %v1254 = vadd.f32 %v1252, %v793
        %v1255 = vld [vmem:[%s11] sm:$0x1]
        %v1256 = vld [vmem:[%s12] sm:$0x1]
        %v1257 = vsel %vm796, %v1254, 0.0
        %1258 = vadd.xlane.f32.xlu0 %v1257
        %v1259 = vpop.xlane.xlu0 %1258
        %v1260 = vmul.f32 %v1259, %v806
        %v1261 = vsub.f32 %v1254, %v1260
        %v1262 = vmul.f32 %v1261, %v1261
        %v1263 = vsel %vm796, %v1262, 0.0
        %1264 = vadd.xlane.f32.xlu0 %v1263
        %v1265 = vpop.xlane.xlu0 %1264
        %v1266 = vmul.f32 %v1265, %v806
        %v1267 = vadd.f32 %v1266, 1e-05
        %v1268 = vrsqrt.pop %v1267
        %v1269 = vmul.f32 %v1268, %v1267
        %v1270 = vmul.f32 %v1269, %v1268
        %v1271 = vmul.f32 0.5, %v1270
        %v1272 = vsub.f32 1.5, %v1271
        %v1273 = vmul.f32 %v1268, %v1272
        %vm1274 = vweird.f32 %v1267
        %vm1275 = vweird.f32 %v1268
        %vm1276 = vmor %vm1274, %vm1275
        %v1277 = vsel %vm1276, %v1268, %v1273
        %v1278 = vmul.f32 %v1261, %v1277
        %v1280 = vperm.slane %v1255, 0
        %v1282 = vmul.f32 %v1278, %v1280
        %v1284 = vperm.slane %v1256, 0
        %v1286 = vadd.f32 %v1282, %v1284
        %v1287 = vld [vmem:[#allocation11] sm:$0xff]
        %v1288 = vld [vmem:[#allocation11 + $0x8] sm:$0xff]
        %v1289 = vld [vmem:[#allocation11 + $0x10] sm:$0xff]
        %v1290 = vld [vmem:[#allocation11 + $0x18] sm:$0xff]
        %v1291 = vld [vmem:[%s14] sm:$0x1]
        %v1293 = vperm.slane %v1291, 0
        %v1296 = vsel %vm796, %v1286, 0
        %1298 = vmatpush.msra.mxu0 0.0
        %1299 = vmatpush.msra.mxu0 0.0
        %1300 = vmatpush.msra.mxu0 0.0
        %1301 = vmatpush.msra.mxu0 0.0
        %1302 = vmatpush.msra.mxu0 0.0
        %1303 = vmatpush.msra.mxu0 0.0
        %1304 = vmatpush.msra.mxu0 0.0
        %1305 = vmatpush.msra.mxu0 0.0
        %1306 = vmatpush.msra.mxu0 0.0
        %1307 = vmatpush.msra.mxu0 0.0
        %1308 = vmatpush.msra.mxu0 0.0
        %1309 = vmatpush.msra.mxu0 0.0
        %1310 = vmatpush.msra.mxu0 %v1290
        %1311 = vmatpush.msra.mxu0 %v1289
        %1312 = vmatpush.msra.mxu0 %v1288
        %1313 = vmatpush.msra.mxu0 %v1287
        %1314 = vmatmul.f32.gmra.mxu0 %v1296
        %v1315 = vpop.f32.mrf.mxu0
        %v1316 = vadd.f32 %v1293, %v1315
        %1317 = vdwg.mxu0
        %v1318 = vmax.f32 %v1316, 0.0
        %v1319 = vld [vmem:[%s15] sm:$0xff]
        %v1320 = vld [vmem:[%s15 + $0x8] sm:$0xff]
        %v1321 = vld [vmem:[%s15 + $0x10] sm:$0xff]
        %v1322 = vld [vmem:[%s15 + $0x18] sm:$0xff]
        %v1323 = vld [vmem:[%s15 + $0x20] sm:$0xff]
        %v1324 = vld [vmem:[%s15 + $0x28] sm:$0xff]
        %v1325 = vld [vmem:[%s15 + $0x30] sm:$0xff]
        %v1326 = vld [vmem:[%s15 + $0x38] sm:$0xff]
        %v1327 = vld [vmem:[%s16] sm:$0x1]
        %v1329 = vperm.slane %v1327, 0
        %vm1331 = vcmask 523264
        %v1333 = vsel %vm1331, %v1318, 0
        %1335 = vmatpush.msra.mxu0 0.0
        %1336 = vmatpush.msra.mxu0 0.0
        %1337 = vmatpush.msra.mxu0 0.0
        %1338 = vmatpush.msra.mxu0 0.0
        %1339 = vmatpush.msra.mxu0 0.0
        %1340 = vmatpush.msra.mxu0 0.0
        %1341 = vmatpush.msra.mxu0 0.0
        %1342 = vmatpush.msra.mxu0 0.0
        %1343 = vmatpush.msra.mxu0 %v1326
        %1344 = vmatpush.msra.mxu0 %v1325
        %1345 = vmatpush.msra.mxu0 %v1324
        %1346 = vmatpush.msra.mxu0 %v1323
        %1347 = vmatpush.msra.mxu0 %v1322
        %1348 = vmatpush.msra.mxu0 %v1321
        %1349 = vmatpush.msra.mxu0 %v1320
        %1350 = vmatpush.msra.mxu0 %v1319
        %1351 = vmatmul.f32.gmra.mxu0 %v1333
        %v1352 = vpop.f32.mrf.mxu0
        %v1353 = vadd.f32 %v1329, %v1352
        %1354 = vdwg.mxu0
        %v1355 = vadd.f32 %v1353, %v1254
        %1356 = vst.msk [vmem:[%s703] sm:$0xff] %vm796, %v1355
        %s1357 = sand.u32 %s439, 1
        %s1358 = scalar_lea.sflag [#allocation7], %s1357
        %s1359 = sand.u32 %s439, 1
        %s1360 = smul.addr %s1359, 8
        %s1361 = scalar_lea.vmem [#allocation13], %s1360
        %s1362 = sand.u32 %s467, 1
        %s1363 = scalar_lea.sflag [#allocation15], %s1362
        %s1364 = sand.u32 %s467, 1
        %s1365 = smul.addr %s1364, 32
        %s1366 = scalar_lea.vmem [#allocation14], %s1365
        // Predicated region
        $region109: #{tpu_custom_call.1} parent=87 // pred_check
          %p1367 = pneg %p449
        $region110: #{tpu_custom_call.1} parent=87 // pred_check_branch
          %1369 = sbr.rel (%p1367) target = $region112
        $region111: #{tpu_custom_call.1} parent=87 // pred_region
          %1371 = vsyncadd %s1358, 0
          %s1372 = sadd.s32 %s48, %s47
          %s1373 = smul.addr %s1372, 8
          %s1374 = scalar_lea.hbm %s17, %s1373
          %s1376 = sshll.u32 %s1361, 4
          %s1377 = int_to_ptr.vmem [resolvable:$true] %s1376
          %s1378 = sshll.u32 %s1374, 4
          %s1379 = int_to_ptr.hbm [resolvable:$true] %s1378
          %1381 = dma.vmem_to_hbm [thread:$0]  %s1377, 128, %s1379, %s1358
        $region112: #{tpu_custom_call.1} parent=87 // pred_fallthru
          _
        // Predicated region
        $region113: #{tpu_custom_call.1} parent=87 // pred_check
          %p1382 = pneg %p477
        $region114: #{tpu_custom_call.1} parent=87 // pred_check_branch
          %1384 = sbr.rel (%p1382) target = $region116
        $region115: #{tpu_custom_call.1} parent=87 // pred_region
          %1386 = vsyncadd %s1363, 0
          %s1387 = smul.addr %s47, 4
          %s1388 = sadd.s32 %s48, %s1387
          %s1389 = smul.addr %s1388, 8
          %s1390 = scalar_lea.hbm %s18, %s1389
          %s1391 = sshll.u32 %s1366, 4
          %s1392 = int_to_ptr.vmem [resolvable:$true] %s1391
          %s1393 = sshll.u32 %s1390, 4
          %s1394 = int_to_ptr.hbm [resolvable:$true] %s1393
          %1399 = dma.vmem_to_hbm [thread:$0]  %s1392, 512, %s1394, %s1363, 128, 128, 8
        $region116: #{tpu_custom_call.1} parent=87 // pred_fallthru
          _
      $region88: #{tpu_custom_call.1} parent=5 // pred_fallthru
        _
      %p1400 = scmp.le.s32.totalorder 2, %s38
      // Predicated region
      $region117: #{tpu_custom_call.1} parent=5 // pred_check
        %p1401 = pneg %p1400
      $region118: #{tpu_custom_call.1} parent=5 // pred_check_branch
        %1403 = sbr.rel (%p1401) target = $region120
      $region119: #{tpu_custom_call.1} parent=5 // pred_region
        %s1404 = ssub.s32 %s38, 2
        // Predicated region
        $region121: #{tpu_custom_call.1} parent=119 // pred_check
          %p1405 = pneg %p455
        $region122: #{tpu_custom_call.1} parent=119 // pred_check_branch
          %1407 = sbr.rel (%p1405) target = $region124
        $region123: #{tpu_custom_call.1} parent=119 // pred_region
          %s1408 = sand.u32 %s440, 1
          %s1409 = scalar_lea.sflag [#allocation7], %s1408
          %s1410 = sand.u32 %s440, 1
          %s1411 = smul.addr %s1410, 8
          %s1412 = scalar_lea.vmem [#allocation13], %s1411
          %1414 = dma.done %s1409, 128
        $region124: #{tpu_custom_call.1} parent=119 // pred_fallthru
          _
        // Predicated region
        $region125: #{tpu_custom_call.1} parent=119 // pred_check
          %p1415 = pneg %p483
        $region126: #{tpu_custom_call.1} parent=119 // pred_check_branch
          %1417 = sbr.rel (%p1415) target = $region128
        $region127: #{tpu_custom_call.1} parent=119 // pred_region
          %s1418 = sand.u32 %s468, 1
          %s1419 = scalar_lea.sflag [#allocation15], %s1418
          %s1420 = sand.u32 %s468, 1
          %s1421 = smul.addr %s1420, 32
          %s1422 = scalar_lea.vmem [#allocation14], %s1421
          %1424 = dma.done %s1419, 512
        $region128: #{tpu_custom_call.1} parent=119 // pred_fallthru
          _
      $region120: #{tpu_custom_call.1} parent=5 // pred_fallthru
        _
    $region6: #{tpu_custom_call.1} parent=1 // loop_footer
      %s42 = sadd.s32 1, %s38
    $region7: #{tpu_custom_call.1} parent=1 // loop_footer_branch
      %37 = sbr.rel target = $region3
    $region8: #{tpu_custom_call.1} parent=1 // loop_exit
      _
    %1425 = vsyncpa [#allocation6], 1
    %s1426 = scalar_lea.sflag [#allocation6], 1
    %1427 = vsyncpa %s1426, 1
    %1428 = vsyncpa [#allocation9], 1
    %s1429 = scalar_lea.sflag [#allocation9], 1
    %1430 = vsyncpa %s1429, 1
    %1431 = vsyncpa [#allocation12], 1
    %1432 = vsyncpa [#allocation7], 1
    %s1433 = scalar_lea.sflag [#allocation7], 1
    %1434 = vsyncpa %s1433, 1
    %1435 = vsyncpa [#allocation15], 1
    %s1436 = scalar_lea.sflag [#allocation15], 1
    %1437 = vsyncpa %s1436, 1

// kernel: tpu_custom_call.1
$region0: #{tpu_custom_call.1}
  #allocation0 [shape = 'u32[]', space=smem, size = 0x4, offset = 0x4, fixed_abs, tag = 'smem constant byte address 0x4 - core index']
  #allocation1 [shape = 'u32[72,128]{1,0:T(1,128)}', space=vmem, size = 0x9000, scoped, tag = 'internal scratch']
  #allocation2 [shape = 'f32[8,32]{1,0:T(8,128)}', space=vmem, size = 0x1000, scoped, tag = 'scratch operand']
  #allocation3 [shape = 'f32[8,32]{1,0:T(8,128)}', space=vmem, size = 0x1000, scoped, tag = 'scratch operand']
  #allocation4 [shape = 'f32[8,32]{1,0:T(8,128)}', space=vmem, size = 0x1000, scoped, tag = 'scratch operand']
  %s0 = inlined_call_operand.hbm [shape: f32[2,8,32], index: 0, kind: input, shape index: {}]
  %s1 = inlined_call_operand.hbm [shape: f32[2,8,32], index: 1, kind: input, shape index: {}]
  %s2 = inlined_call_operand.hbm [shape: f32[2,1,1,8], index: 2, kind: input, shape index: {}]
  %s3 = inlined_call_operand.vmem [shape: f32[1,32], index: 3, kind: input, shape index: {}]
  %s4 = inlined_call_operand.vmem [shape: f32[1,32], index: 4, kind: input, shape index: {}]
  %s5 = inlined_call_operand.vmem [shape: f32[32,32], index: 5, kind: input, shape index: {}]
  %s6 = inlined_call_operand.vmem [shape: f32[1,32], index: 6, kind: input, shape index: {}]
  %s7 = inlined_call_operand.vmem [shape: f32[32,64], index: 7, kind: input, shape index: {}]
  %s8 = inlined_call_operand.vmem [shape: f32[1,64], index: 8, kind: input, shape index: {}]
  %s9 = inlined_call_operand.vmem [shape: f32[32,32], index: 9, kind: input, shape index: {}]
  %s10 = inlined_call_operand.vmem [shape: f32[1,32], index: 10, kind: input, shape index: {}]
  %s11 = inlined_call_operand.vmem [shape: f32[1,32], index: 11, kind: input, shape index: {}]
  %s12 = inlined_call_operand.vmem [shape: f32[1,32], index: 12, kind: input, shape index: {}]
  %s13 = inlined_call_operand.hbm [shape: f32[32,64], index: 13, kind: input, shape index: {}]
  %s14 = inlined_call_operand.vmem [shape: f32[1,64], index: 14, kind: input, shape index: {}]
  %s15 = inlined_call_operand.vmem [shape: f32[64,32], index: 15, kind: input, shape index: {}]
  %s16 = inlined_call_operand.vmem [shape: f32[1,32], index: 16, kind: input, shape index: {}]
  %s17 = inlined_call_operand.hbm [shape: f32[2,8,32], index: 17, kind: output, shape index: {0}]
  %s18 = inlined_call_operand.hbm [shape: f32[2,4,8,8], index: 18, kind: output, shape index: {1}]
  %19 = xla_tuple %s17, %s18
  %s20 = sld [smem:[#allocation0]]
  $region129: #{tpu_custom_call.1} parent=0
    _
  %s22 = ssub.s32 1, %s20
  %s23 = scalar_select 0, %s22, %s20
  $region1: #{tpu_custom_call.1} parent=0
    #allocation5 [shape = 'u8[8192]{0}', space=vmem, size = 0x2000, scoped, tag = 'input window, operand 0']
    #allocation6 [shape = 's32[2]{0}', space=sflag, size = 0x8, scoped, tag = 'scoped memory for tpu_custom_call.1']
    #allocation7 [shape = 's32[2]{0}', space=sflag, size = 0x8, scoped, tag = 'scoped memory for tpu_custom_call.1']
    #allocation8 [shape = 'u8[8192]{0}', space=vmem, size = 0x2000, scoped, tag = 'input window, operand 1']
    #allocation9 [shape = 's32[2]{0}', space=sflag, size = 0x8, scoped, tag = 'scoped memory for tpu_custom_call.1']
    #allocation10 [shape = 'u8[1024]{0}', space=vmem, size = 0x400, scoped, tag = 'input window, operand 2']
    #allocation11 [shape = 'u8[16384]{0}', space=vmem, size = 0x4000, scoped, tag = 'input window, operand 13, single buffered']
    #allocation12 [shape = 's32[1]{0}', space=sflag, size = 0x4, scoped, tag = 'scoped memory for tpu_custom_call.1']
    #allocation13 [shape = 'u8[8192]{0}', space=vmem, size = 0x2000, scoped, tag = 'output window, operand 0']
    #allocation14 [shape = 'u8[32768]{0}', space=vmem, size = 0x8000, scoped, tag = 'output window, operand 1']
    #allocation15 [shape = 's32[2]{0}', space=sflag, size = 0x8, scoped, tag = 'scoped memory for tpu_custom_call.1']
    %24 = vsyncpa [#allocation6], 0
    %s25 = scalar_lea.sflag [#allocation6], 1
    %26 = vsyncpa %s25, 0
    %27 = vsyncpa [#allocation9], 0
    %s28 = scalar_lea.sflag [#allocation9], 1
    %29 = vsyncpa %s28, 0
    %30 = vsyncpa [#allocation12], 0
    %31 = vsyncpa [#allocation7], 0
    %s32 = scalar_lea.sflag [#allocation7], 1
    %33 = vsyncpa %s32, 0
    %34 = vsyncpa [#allocation15], 0
    %s35 = scalar_lea.sflag [#allocation15], 1
    %36 = vsyncpa %s35, 0
    loop: start=0, step=1, limit=4
    $region2: #{tpu_custom_call.1} parent=1 // loop_pre_header
      _
    $region3: #{tpu_custom_call.1} parent=1 // loop_header
      %s38 = sphi 0, %s42
      %p39 = scmp.ge.s32.totalorder %s38, 4
      %s45 = sphi 0, %s57
      %s46 = sphi 0, %s53
      %s47 = sphi 0, %s45
      %s48 = sphi 0, %s46
      %s49 = sphi 0, %s47
      %s50 = sphi 0, %s48
      %s60 = sphi 0, %s62
      %s63 = sphi 0, %s60
      %s64 = sphi 0, %s63
      %s80 = sphi 0, %s64
      %s88 = sphi 0, %s90
      %s91 = sphi 0, %s88
      %s92 = sphi 0, %s91
      %s108 = sphi 0, %s92
      %s114 = sphi 0, %s116
      %s117 = sphi 0, %s114
      %s118 = sphi 0, %s117
      %s134 = sphi 0, %s118
      %s138 = sphi 0, %s138
      %s140 = sphi 0, %s138
      %s141 = sphi 0, %s140
      %s155 = sphi 0, %s141
      %s159 = sphi 0, %s159
      %s161 = sphi 0, %s159
      %s162 = sphi 0, %s161
      %s176 = sphi 0, %s162
      %s180 = sphi 0, %s180
      %s182 = sphi 0, %s180
      %s183 = sphi 0, %s182
      %s197 = sphi 0, %s183
      %s201 = sphi 0, %s201
      %s203 = sphi 0, %s201
      %s204 = sphi 0, %s203
      %s218 = sphi 0, %s204
      %s222 = sphi 0, %s222
      %s224 = sphi 0, %s222
      %s225 = sphi 0, %s224
      %s239 = sphi 0, %s225
      %s243 = sphi 0, %s243
      %s245 = sphi 0, %s243
      %s246 = sphi 0, %s245
      %s260 = sphi 0, %s246
      %s264 = sphi 0, %s264
      %s266 = sphi 0, %s264
      %s267 = sphi 0, %s266
      %s281 = sphi 0, %s267
      %s285 = sphi 0, %s285
      %s287 = sphi 0, %s285
      %s288 = sphi 0, %s287
      %s302 = sphi 0, %s288
      %s306 = sphi 0, %s306
      %s308 = sphi 0, %s306
      %s309 = sphi 0, %s308
      %s323 = sphi 0, %s309
      %s327 = sphi 0, %s327
      %s329 = sphi 0, %s327
      %s330 = sphi 0, %s329
      %s344 = sphi 0, %s330
      %s348 = sphi 0, %s348
      %s350 = sphi 0, %s348
      %s351 = sphi 0, %s350
      %s365 = sphi 0, %s351
      %s369 = sphi 0, %s369
      %s371 = sphi 0, %s369
      %s372 = sphi 0, %s371
      %s386 = sphi 0, %s372
      %s390 = sphi 0, %s390
      %s392 = sphi 0, %s390
      %s393 = sphi 0, %s392
      %s407 = sphi 0, %s393
      %s411 = sphi 0, %s411
      %s413 = sphi 0, %s411
      %s414 = sphi 0, %s413
      %s428 = sphi 0, %s414
      %s436 = sphi 0, %s438
      %s439 = sphi 0, %s436
      %s440 = sphi 0, %s439
      %s456 = sphi 0, %s440
      %s464 = sphi 0, %s466
      %s467 = sphi 0, %s464
      %s468 = sphi 0, %s467
      %s484 = sphi 0, %s468
    $region4: #{tpu_custom_call.1} parent=1 // loop_header_branch
      %41 = sbr.rel (%p39) target = $region8
    $region5: #{tpu_custom_call.1} parent=1 // loop_body
      %s43 = ssub.s32 %s38, 1
      %s44 = ssub.s32 %s38, 2
      %s51 = sadd.s32 1, %s46
      %p52 = scmp.ge.s32.totalorder %s51, 1
      %s53 = scalar_select %p52, 0, %s51
      %s54 = sadd.s32 1, %s45
      %s55 = scalar_select %p52, %s54, %s45
      %p56 = scmp.ge.s32.totalorder %s55, 2
      %s57 = scalar_select %p56, 0, %s55
      %s58 = ssub.s32 %s45, %s57
      %p59 = scmp.eq.s32.totalorder %s58, 0
      %s61 = sadd.s32 %s60, 1
      %s62 = scalar_select %p59, %s60, %s61
      %p65 = pneg %p59
      %p66 = scmp.eq.s32.totalorder %s38, 1
      %p67 = por %p65, %p66
      %p68 = scmp.ne.s32.totalorder %s60, %s63
      %p69 = scmp.eq.s32.totalorder %s38, 0
      %p70 = por %p68, %p69
      %p71 = scmp.ne.s32.totalorder %s60, %s63
      %p72 = scmp.eq.s32.totalorder %s43, 1
      %p73 = por %p71, %p72
      %p74 = scmp.ne.s32.totalorder %s63, %s64
      %p75 = scmp.eq.s32.totalorder %s43, 0
      %p76 = por %p74, %p75
      %p77 = scmp.ne.s32.totalorder %s63, %s64
      %p78 = scmp.eq.s32.totalorder %s44, 1
      %p79 = por %p77, %p78
      %p81 = scmp.ne.s32.totalorder %s64, %s80
      %p82 = scmp.eq.s32.totalorder %s44, 0
      %p83 = por %p81, %p82
      %s84 = ssub.s32 %s45, %s57
      %s85 = ssub.s32 %s46, %s53
      %s86 = sor.u32 %s84, %s85
      %p87 = scmp.eq.s32.totalorder %s86, 0
      %s89 = sadd.s32 %s88, 1
      %s90 = scalar_select %p87, %s88, %s89
      %p93 = pneg %p87
      %p94 = scmp.eq.s32.totalorder %s38, 1
      %p95 = por %p93, %p94
      %p96 = scmp.ne.s32.totalorder %s88, %s91
      %p97 = scmp.eq.s32.totalorder %s38, 0
      %p98 = por %p96, %p97
      %p99 = scmp.ne.s32.totalorder %s88, %s91
      %p100 = scmp.eq.s32.totalorder %s43, 1
      %p101 = por %p99, %p100
      %p102 = scmp.ne.s32.totalorder %s91, %s92
      %p103 = scmp.eq.s32.totalorder %s43, 0
      %p104 = por %p102, %p103
      %p105 = scmp.ne.s32.totalorder %s91, %s92
      %p106 = scmp.eq.s32.totalorder %s44, 1
      %p107 = por %p105, %p106
      %p109 = scmp.ne.s32.totalorder %s92, %s108
      %p110 = scmp.eq.s32.totalorder %s44, 0
      %p111 = por %p109, %p110
      %s112 = ssub.s32 %s45, %s57
      %p113 = scmp.eq.s32.totalorder %s112, 0
      %s115 = sadd.s32 %s114, 1
      %s116 = scalar_select %p113, %s114, %s115
      %p119 = pneg %p113
      %p120 = scmp.eq.s32.totalorder %s38, 1
      %p121 = por %p119, %p120
      %p122 = scmp.ne.s32.totalorder %s114, %s117
      %p123 = scmp.eq.s32.totalorder %s38, 0
      %p124 = por %p122, %p123
      %p125 = scmp.ne.s32.totalorder %s114, %s117
      %p126 = scmp.eq.s32.totalorder %s43, 1
      %p127 = por %p125, %p126
      %p128 = scmp.ne.s32.totalorder %s117, %s118
      %p129 = scmp.eq.s32.totalorder %s43, 0
      %p130 = por %p128, %p129
      %p131 = scmp.ne.s32.totalorder %s117, %s118
      %p132 = scmp.eq.s32.totalorder %s44, 1
      %p133 = por %p131, %p132
      %p135 = scmp.ne.s32.totalorder %s118, %s134
      %p136 = scmp.eq.s32.totalorder %s44, 0
      %p137 = por %p135, %p136
      %s139 = sadd.s32 %s138, 1
      %p142 = scmp.eq.s32.totalorder %s38, 1
      %p143 = scmp.ne.s32.totalorder %s138, %s140
      %p144 = scmp.eq.s32.totalorder %s38, 0
      %p145 = por %p143, %p144
      %p146 = scmp.ne.s32.totalorder %s138, %s140
      %p147 = scmp.eq.s32.totalorder %s43, 1
      %p148 = por %p146, %p147
      %p149 = scmp.ne.s32.totalorder %s140, %s141
      %p150 = scmp.eq.s32.totalorder %s43, 0
      %p151 = por %p149, %p150
      %p152 = scmp.ne.s32.totalorder %s140, %s141
      %p153 = scmp.eq.s32.totalorder %s44, 1
      %p154 = por %p152, %p153
      %p156 = scmp.ne.s32.totalorder %s141, %s155
      %p157 = scmp.eq.s32.totalorder %s44, 0
      %p158 = por %p156, %p157
      %s160 = sadd.s32 %s159, 1
      %p163 = scmp.eq.s32.totalorder %s38, 1
      %p164 = scmp.ne.s32.totalorder %s159, %s161
      %p165 = scmp.eq.s32.totalorder %s38, 0
      %p166 = por %p164, %p165
      %p167 = scmp.ne.s32.totalorder %s159, %s161
      %p168 = scmp.eq.s32.totalorder %s43, 1
      %p169 = por %p167, %p168
      %p170 = scmp.ne.s32.totalorder %s161, %s162
      %p171 = scmp.eq.s32.totalorder %s43, 0
      %p172 = por %p170, %p171
      %p173 = scmp.ne.s32.totalorder %s161, %s162
      %p174 = scmp.eq.s32.totalorder %s44, 1
      %p175 = por %p173, %p174
      %p177 = scmp.ne.s32.totalorder %s162, %s176
      %p178 = scmp.eq.s32.totalorder %s44, 0
      %p179 = por %p177, %p178
      %s181 = sadd.s32 %s180, 1
      %p184 = scmp.eq.s32.totalorder %s38, 1
      %p185 = scmp.ne.s32.totalorder %s180, %s182
      %p186 = scmp.eq.s32.totalorder %s38, 0
      %p187 = por %p185, %p186
      %p188 = scmp.ne.s32.totalorder %s180, %s182
      %p189 = scmp.eq.s32.totalorder %s43, 1
      %p190 = por %p188, %p189
      %p191 = scmp.ne.s32.totalorder %s182, %s183
      %p192 = scmp.eq.s32.totalorder %s43, 0
      %p193 = por %p191, %p192
      %p194 = scmp.ne.s32.totalorder %s182, %s183
      %p195 = scmp.eq.s32.totalorder %s44, 1
      %p196 = por %p194, %p195
      %p198 = scmp.ne.s32.totalorder %s183, %s197
      %p199 = scmp.eq.s32.totalorder %s44, 0
      %p200 = por %p198, %p199
      %s202 = sadd.s32 %s201, 1
      %p205 = scmp.eq.s32.totalorder %s38, 1
      %p206 = scmp.ne.s32.totalorder %s201, %s203
      %p207 = scmp.eq.s32.totalorder %s38, 0
      %p208 = por %p206, %p207
      %p209 = scmp.ne.s32.totalorder %s201, %s203
      %p210 = scmp.eq.s32.totalorder %s43, 1
      %p211 = por %p209, %p210
      %p212 = scmp.ne.s32.totalorder %s203, %s204
      %p213 = scmp.eq.s32.totalorder %s43, 0
      %p214 = por %p212, %p213
      %p215 = scmp.ne.s32.totalorder %s203, %s204
      %p216 = scmp.eq.s32.totalorder %s44, 1
      %p217 = por %p215, %p216
      %p219 = scmp.ne.s32.totalorder %s204, %s218
      %p220 = scmp.eq.s32.totalorder %s44, 0
      %p221 = por %p219, %p220
      %s223 = sadd.s32 %s222, 1
      %p226 = scmp.eq.s32.totalorder %s38, 1
      %p227 = scmp.ne.s32.totalorder %s222, %s224
      %p228 = scmp.eq.s32.totalorder %s38, 0
      %p229 = por %p227, %p228
      %p230 = scmp.ne.s32.totalorder %s222, %s224
      %p231 = scmp.eq.s32.totalorder %s43, 1
      %p232 = por %p230, %p231
      %p233 = scmp.ne.s32.totalorder %s224, %s225
      %p234 = scmp.eq.s32.totalorder %s43, 0
      %p235 = por %p233, %p234
      %p236 = scmp.ne.s32.totalorder %s224, %s225
      %p237 = scmp.eq.s32.totalorder %s44, 1
      %p238 = por %p236, %p237
      %p240 = scmp.ne.s32.totalorder %s225, %s239
      %p241 = scmp.eq.s32.totalorder %s44, 0
      %p242 = por %p240, %p241
      %s244 = sadd.s32 %s243, 1
      %p247 = scmp.eq.s32.totalorder %s38, 1
      %p248 = scmp.ne.s32.totalorder %s243, %s245
      %p249 = scmp.eq.s32.totalorder %s38, 0
      %p250 = por %p248, %p249
      %p251 = scmp.ne.s32.totalorder %s243, %s245
      %p252 = scmp.eq.s32.totalorder %s43, 1
      %p253 = por %p251, %p252
      %p254 = scmp.ne.s32.totalorder %s245, %s246
      %p255 = scmp.eq.s32.totalorder %s43, 0
      %p256 = por %p254, %p255
      %p257 = scmp.ne.s32.totalorder %s245, %s246
      %p258 = scmp.eq.s32.totalorder %s44, 1
      %p259 = por %p257, %p258
      %p261 = scmp.ne.s32.totalorder %s246, %s260
      %p262 = scmp.eq.s32.totalorder %s44, 0
      %p263 = por %p261, %p262
      %s265 = sadd.s32 %s264, 1
      %p268 = scmp.eq.s32.totalorder %s38, 1
      %p269 = scmp.ne.s32.totalorder %s264, %s266
      %p270 = scmp.eq.s32.totalorder %s38, 0
      %p271 = por %p269, %p270
      %p272 = scmp.ne.s32.totalorder %s264, %s266
      %p273 = scmp.eq.s32.totalorder %s43, 1
      %p274 = por %p272, %p273
      %p275 = scmp.ne.s32.totalorder %s266, %s267
      %p276 = scmp.eq.s32.totalorder %s43, 0
      %p277 = por %p275, %p276
      %p278 = scmp.ne.s32.totalorder %s266, %s267
      %p279 = scmp.eq.s32.totalorder %s44, 1
      %p280 = por %p278, %p279
      %p282 = scmp.ne.s32.totalorder %s267, %s281
      %p283 = scmp.eq.s32.totalorder %s44, 0
      %p284 = por %p282, %p283
      %s286 = sadd.s32 %s285, 1
      %p289 = scmp.eq.s32.totalorder %s38, 1
      %p290 = scmp.ne.s32.totalorder %s285, %s287
      %p291 = scmp.eq.s32.totalorder %s38, 0
      %p292 = por %p290, %p291
      %p293 = scmp.ne.s32.totalorder %s285, %s287
      %p294 = scmp.eq.s32.totalorder %s43, 1
      %p295 = por %p293, %p294
      %p296 = scmp.ne.s32.totalorder %s287, %s288
      %p297 = scmp.eq.s32.totalorder %s43, 0
      %p298 = por %p296, %p297
      %p299 = scmp.ne.s32.totalorder %s287, %s288
      %p300 = scmp.eq.s32.totalorder %s44, 1
      %p301 = por %p299, %p300
      %p303 = scmp.ne.s32.totalorder %s288, %s302
      %p304 = scmp.eq.s32.totalorder %s44, 0
      %p305 = por %p303, %p304
      %s307 = sadd.s32 %s306, 1
      %p310 = scmp.eq.s32.totalorder %s38, 1
      %p311 = scmp.ne.s32.totalorder %s306, %s308
      %p312 = scmp.eq.s32.totalorder %s38, 0
      %p313 = por %p311, %p312
      %p314 = scmp.ne.s32.totalorder %s306, %s308
      %p315 = scmp.eq.s32.totalorder %s43, 1
      %p316 = por %p314, %p315
      %p317 = scmp.ne.s32.totalorder %s308, %s309
      %p318 = scmp.eq.s32.totalorder %s43, 0
      %p319 = por %p317, %p318
      %p320 = scmp.ne.s32.totalorder %s308, %s309
      %p321 = scmp.eq.s32.totalorder %s44, 1
      %p322 = por %p320, %p321
      %p324 = scmp.ne.s32.totalorder %s309, %s323
      %p325 = scmp.eq.s32.totalorder %s44, 0
      %p326 = por %p324, %p325
      %s328 = sadd.s32 %s327, 1
      %p331 = scmp.eq.s32.totalorder %s38, 1
      %p332 = scmp.ne.s32.totalorder %s327, %s329
      %p333 = scmp.eq.s32.totalorder %s38, 0
      %p334 = por %p332, %p333
      %p335 = scmp.ne.s32.totalorder %s327, %s329
      %p336 = scmp.eq.s32.totalorder %s43, 1
      %p337 = por %p335, %p336
      %p338 = scmp.ne.s32.totalorder %s329, %s330
      %p339 = scmp.eq.s32.totalorder %s43, 0
      %p340 = por %p338, %p339
      %p341 = scmp.ne.s32.totalorder %s329, %s330
      %p342 = scmp.eq.s32.totalorder %s44, 1
      %p343 = por %p341, %p342
      %p345 = scmp.ne.s32.totalorder %s330, %s344
      %p346 = scmp.eq.s32.totalorder %s44, 0
      %p347 = por %p345, %p346
      %s349 = sadd.s32 %s348, 1
      %p352 = scmp.eq.s32.totalorder %s38, 1
      %p353 = scmp.ne.s32.totalorder %s348, %s350
      %p354 = scmp.eq.s32.totalorder %s38, 0
      %p355 = por %p353, %p354
      %p356 = scmp.ne.s32.totalorder %s348, %s350
      %p357 = scmp.eq.s32.totalorder %s43, 1
      %p358 = por %p356, %p357
      %p359 = scmp.ne.s32.totalorder %s350, %s351
      %p360 = scmp.eq.s32.totalorder %s43, 0
      %p361 = por %p359, %p360
      %p362 = scmp.ne.s32.totalorder %s350, %s351
      %p363 = scmp.eq.s32.totalorder %s44, 1
      %p364 = por %p362, %p363
      %p366 = scmp.ne.s32.totalorder %s351, %s365
      %p367 = scmp.eq.s32.totalorder %s44, 0
      %p368 = por %p366, %p367
      %s370 = sadd.s32 %s369, 1
      %p373 = scmp.eq.s32.totalorder %s38, 1
      %p374 = scmp.ne.s32.totalorder %s369, %s371
      %p375 = scmp.eq.s32.totalorder %s38, 0
      %p376 = por %p374, %p375
      %p377 = scmp.ne.s32.totalorder %s369, %s371
      %p378 = scmp.eq.s32.totalorder %s43, 1
      %p379 = por %p377, %p378
      %p380 = scmp.ne.s32.totalorder %s371, %s372
      %p381 = scmp.eq.s32.totalorder %s43, 0
      %p382 = por %p380, %p381
      %p383 = scmp.ne.s32.totalorder %s371, %s372
      %p384 = scmp.eq.s32.totalorder %s44, 1
      %p385 = por %p383, %p384
      %p387 = scmp.ne.s32.totalorder %s372, %s386
      %p388 = scmp.eq.s32.totalorder %s44, 0
      %p389 = por %p387, %p388
      %s391 = sadd.s32 %s390, 1
      %p394 = scmp.eq.s32.totalorder %s38, 1
      %p395 = scmp.ne.s32.totalorder %s390, %s392
      %p396 = scmp.eq.s32.totalorder %s38, 0
      %p397 = por %p395, %p396
      %p398 = scmp.ne.s32.totalorder %s390, %s392
      %p399 = scmp.eq.s32.totalorder %s43, 1
      %p400 = por %p398, %p399
      %p401 = scmp.ne.s32.totalorder %s392, %s393
      %p402 = scmp.eq.s32.totalorder %s43, 0
      %p403 = por %p401, %p402
      %p404 = scmp.ne.s32.totalorder %s392, %s393
      %p405 = scmp.eq.s32.totalorder %s44, 1
      %p406 = por %p404, %p405
      %p408 = scmp.ne.s32.totalorder %s393, %s407
      %p409 = scmp.eq.s32.totalorder %s44, 0
      %p410 = por %p408, %p409
      %s412 = sadd.s32 %s411, 1
      %p415 = scmp.eq.s32.totalorder %s38, 1
      %p416 = scmp.ne.s32.totalorder %s411, %s413
      %p417 = scmp.eq.s32.totalorder %s38, 0
      %p418 = por %p416, %p417
      %p419 = scmp.ne.s32.totalorder %s411, %s413
      %p420 = scmp.eq.s32.totalorder %s43, 1
      %p421 = por %p419, %p420
      %p422 = scmp.ne.s32.totalorder %s413, %s414
      %p423 = scmp.eq.s32.totalorder %s43, 0
      %p424 = por %p422, %p423
      %p425 = scmp.ne.s32.totalorder %s413, %s414
      %p426 = scmp.eq.s32.totalorder %s44, 1
      %p427 = por %p425, %p426
      %p429 = scmp.ne.s32.totalorder %s414, %s428
      %p430 = scmp.eq.s32.totalorder %s44, 0
      %p431 = por %p429, %p430
      %s432 = ssub.s32 %s45, %s57
      %s433 = ssub.s32 %s46, %s53
      %s434 = sor.u32 %s432, %s433
      %p435 = scmp.eq.s32.totalorder %s434, 0
      %s437 = sadd.s32 %s436, 1
      %s438 = scalar_select %p435, %s436, %s437
      %p441 = pneg %p435
      %p442 = scmp.eq.s32.totalorder %s38, 1
      %p443 = por %p441, %p442
      %p444 = scmp.ne.s32.totalorder %s436, %s439
      %p445 = scmp.eq.s32.totalorder %s38, 0
      %p446 = por %p444, %p445
      %p447 = scmp.ne.s32.totalorder %s436, %s439
      %p448 = scmp.eq.s32.totalorder %s43, 1
      %p449 = por %p447, %p448
      %p450 = scmp.ne.s32.totalorder %s439, %s440
      %p451 = scmp.eq.s32.totalorder %s43, 0
      %p452 = por %p450, %p451
      %p453 = scmp.ne.s32.totalorder %s439, %s440
      %p454 = scmp.eq.s32.totalorder %s44, 1
      %p455 = por %p453, %p454
      %p457 = scmp.ne.s32.totalorder %s440, %s456
      %p458 = scmp.eq.s32.totalorder %s44, 0
      %p459 = por %p457, %p458
      %s460 = ssub.s32 %s45, %s57
      %s461 = ssub.s32 %s46, %s53
      %s462 = sor.u32 %s460, %s461
      %p463 = scmp.eq.s32.totalorder %s462, 0
      %s465 = sadd.s32 %s464, 1
      %s466 = scalar_select %p463, %s464, %s465
      %p469 = pneg %p463
      %p470 = scmp.eq.s32.totalorder %s38, 1
      %p471 = por %p469, %p470
      %p472 = scmp.ne.s32.totalorder %s464, %s467
      %p473 = scmp.eq.s32.totalorder %s38, 0
      %p474 = por %p472, %p473
      %p475 = scmp.ne.s32.totalorder %s464, %s467
      %p476 = scmp.eq.s32.totalorder %s43, 1
      %p477 = por %p475, %p476
      %p478 = scmp.ne.s32.totalorder %s467, %s468
      %p479 = scmp.eq.s32.totalorder %s43, 0
      %p480 = por %p478, %p479
      %p481 = scmp.ne.s32.totalorder %s467, %s468
      %p482 = scmp.eq.s32.totalorder %s44, 1
      %p483 = por %p481, %p482
      %p485 = scmp.ne.s32.totalorder %s468, %s484
      %p486 = scmp.eq.s32.totalorder %s44, 0
      %p487 = por %p485, %p486
      %p488 = scmp.le.s32.totalorder 1, %s38
      %p489 = scmp.lt.s32.totalorder %s38, 3
      %p490 = pnand %p488, %p489
      %p491 = pneg %p490
      // Predicated region
      $region9: #{tpu_custom_call.1} parent=5 // pred_check
        _
      $region10: #{tpu_custom_call.1} parent=5 // pred_check_branch
        %493 = sbr.rel (%p490) target = $region12
      $region11: #{tpu_custom_call.1} parent=5 // pred_region
        %s494 = ssub.s32 %s38, 1
        // Predicated region
        $region13: #{tpu_custom_call.1} parent=11 // pred_check
          %p495 = pneg %p151
        $region14: #{tpu_custom_call.1} parent=11 // pred_check_branch
          %497 = sbr.rel (%p495) target = $region16
        $region15: #{tpu_custom_call.1} parent=11 // pred_region
          _
        $region16: #{tpu_custom_call.1} parent=11 // pred_fallthru
          _
        // Predicated region
        $region17: #{tpu_custom_call.1} parent=11 // pred_check
          %p498 = pneg %p172
        $region18: #{tpu_custom_call.1} parent=11 // pred_check_branch
          %500 = sbr.rel (%p498) target = $region20
        $region19: #{tpu_custom_call.1} parent=11 // pred_region
          _
        $region20: #{tpu_custom_call.1} parent=11 // pred_fallthru
          _
        // Predicated region
        $region21: #{tpu_custom_call.1} parent=11 // pred_check
          %p501 = pneg %p193
        $region22: #{tpu_custom_call.1} parent=11 // pred_check_branch
          %503 = sbr.rel (%p501) target = $region24
        $region23: #{tpu_custom_call.1} parent=11 // pred_region
          _
        $region24: #{tpu_custom_call.1} parent=11 // pred_fallthru
          _
        // Predicated region
        $region25: #{tpu_custom_call.1} parent=11 // pred_check
          %p504 = pneg %p214
        $region26: #{tpu_custom_call.1} parent=11 // pred_check_branch
          %506 = sbr.rel (%p504) target = $region28
        $region27: #{tpu_custom_call.1} parent=11 // pred_region
          _
        $region28: #{tpu_custom_call.1} parent=11 // pred_fallthru
          _
        // Predicated region
        $region29: #{tpu_custom_call.1} parent=11 // pred_check
          %p507 = pneg %p235
        $region30: #{tpu_custom_call.1} parent=11 // pred_check_branch
          %509 = sbr.rel (%p507) target = $region32
        $region31: #{tpu_custom_call.1} parent=11 // pred_region
          _
        $region32: #{tpu_custom_call.1} parent=11 // pred_fallthru
          _
        // Predicated region
        $region33: #{tpu_custom_call.1} parent=11 // pred_check
          %p510 = pneg %p256
        $region34: #{tpu_custom_call.1} parent=11 // pred_check_branch
          %512 = sbr.rel (%p510) target = $region36
        $region35: #{tpu_custom_call.1} parent=11 // pred_region
          _
        $region36: #{tpu_custom_call.1} parent=11 // pred_fallthru
          _
        // Predicated region
        $region37: #{tpu_custom_call.1} parent=11 // pred_check
          %p513 = pneg %p277
        $region38: #{tpu_custom_call.1} parent=11 // pred_check_branch
          %515 = sbr.rel (%p513) target = $region40
        $region39: #{tpu_custom_call.1} parent=11 // pred_region
          _
        $region40: #{tpu_custom_call.1} parent=11 // pred_fallthru
          _
        // Predicated region
        $region41: #{tpu_custom_call.1} parent=11 // pred_check
          %p516 = pneg %p298
        $region42: #{tpu_custom_call.1} parent=11 // pred_check_branch
          %518 = sbr.rel (%p516) target = $region44
        $region43: #{tpu_custom_call.1} parent=11 // pred_region
          _
        $region44: #{tpu_custom_call.1} parent=11 // pred_fallthru
          _
        // Predicated region
        $region45: #{tpu_custom_call.1} parent=11 // pred_check
          %p519 = pneg %p319
        $region46: #{tpu_custom_call.1} parent=11 // pred_check_branch
          %521 = sbr.rel (%p519) target = $region48
        $region47: #{tpu_custom_call.1} parent=11 // pred_region
          _
        $region48: #{tpu_custom_call.1} parent=11 // pred_fallthru
          _
        // Predicated region
        $region49: #{tpu_custom_call.1} parent=11 // pred_check
          %p522 = pneg %p340
        $region50: #{tpu_custom_call.1} parent=11 // pred_check_branch
          %524 = sbr.rel (%p522) target = $region52
        $region51: #{tpu_custom_call.1} parent=11 // pred_region
          _
        $region52: #{tpu_custom_call.1} parent=11 // pred_fallthru
          _
        // Predicated region
        $region53: #{tpu_custom_call.1} parent=11 // pred_check
          %p525 = pneg %p361
        $region54: #{tpu_custom_call.1} parent=11 // pred_check_branch
          %527 = sbr.rel (%p525) target = $region56
        $region55: #{tpu_custom_call.1} parent=11 // pred_region
          %529 = vsyncadd [#allocation12], 0
          %s530 = sshll.u32 %s13, 4
          %s531 = int_to_ptr.hbm [resolvable:$true] %s530
          %s532 = sshll.u32 [#allocation11], 4
          %s533 = int_to_ptr.vmem [resolvable:$true] %s532
          %538 = dma.hbm_to_vmem [thread:$0]  %s531, 512, %s533, [#allocation12], 128, 128, 8
        $region56: #{tpu_custom_call.1} parent=11 // pred_fallthru
          _
        // Predicated region
        $region57: #{tpu_custom_call.1} parent=11 // pred_check
          %p539 = pneg %p382
        $region58: #{tpu_custom_call.1} parent=11 // pred_check_branch
          %541 = sbr.rel (%p539) target = $region60
        $region59: #{tpu_custom_call.1} parent=11 // pred_region
          _
        $region60: #{tpu_custom_call.1} parent=11 // pred_fallthru
          _
        // Predicated region
        $region61: #{tpu_custom_call.1} parent=11 // pred_check
          %p542 = pneg %p403
        $region62: #{tpu_custom_call.1} parent=11 // pred_check_branch
          %544 = sbr.rel (%p542) target = $region64
        $region63: #{tpu_custom_call.1} parent=11 // pred_region
          _
        $region64: #{tpu_custom_call.1} parent=11 // pred_fallthru
          _
        // Predicated region
        $region65: #{tpu_custom_call.1} parent=11 // pred_check
          %p545 = pneg %p424
        $region66: #{tpu_custom_call.1} parent=11 // pred_check_branch
          %547 = sbr.rel (%p545) target = $region68
        $region67: #{tpu_custom_call.1} parent=11 // pred_region
          _
        $region68: #{tpu_custom_call.1} parent=11 // pred_fallthru
          _
      $region12: #{tpu_custom_call.1} parent=5 // pred_fallthru
        _
      %p548 = scmp.lt.s32.totalorder %s38, 2
      // Predicated region
      $region69: #{tpu_custom_call.1} parent=5 // pred_check
        %p549 = pneg %p548
      $region70: #{tpu_custom_call.1} parent=5 // pred_check_branch
        %551 = sbr.rel (%p549) target = $region72
      $region71: #{tpu_custom_call.1} parent=5 // pred_region
        // Predicated region
        $region73: #{tpu_custom_call.1} parent=71 // pred_check
          %p552 = pneg %p70
        $region74: #{tpu_custom_call.1} parent=71 // pred_check_branch
          %554 = sbr.rel (%p552) target = $region76
        $region75: #{tpu_custom_call.1} parent=71 // pred_region
          %s555 = sand.u32 %s60, 1
          %s556 = scalar_lea.sflag [#allocation6], %s555
          %s557 = sand.u32 %s60, 1
          %s558 = smul.addr %s557, 8
          %s559 = scalar_lea.vmem [#allocation5], %s558
          %561 = vsyncadd %s556, 0
          %s562 = smul.addr %s45, 8
          %s563 = scalar_lea.hbm %s0, %s562
          %s565 = sshll.u32 %s563, 4
          %s566 = int_to_ptr.hbm [resolvable:$true] %s565
          %s567 = sshll.u32 %s559, 4
          %s568 = int_to_ptr.vmem [resolvable:$true] %s567
          %570 = dma.hbm_to_vmem [thread:$0]  %s566, 128, %s568, %s556
        $region76: #{tpu_custom_call.1} parent=71 // pred_fallthru
          _
        // Predicated region
        $region77: #{tpu_custom_call.1} parent=71 // pred_check
          %p571 = pneg %p98
        $region78: #{tpu_custom_call.1} parent=71 // pred_check_branch
          %573 = sbr.rel (%p571) target = $region80
        $region79: #{tpu_custom_call.1} parent=71 // pred_region
          %s574 = sand.u32 %s38, 1
          %s575 = scalar_lea.sflag [#allocation9], %s574
          %s576 = sand.u32 %s88, 1
          %s577 = smul.addr %s576, 8
          %s578 = scalar_lea.vmem [#allocation8], %s577
          %580 = vsyncadd %s575, 0
          %s581 = sadd.s32 %s46, %s45
          %s582 = smul.addr %s581, 8
          %s583 = scalar_lea.hbm %s1, %s582
          %s585 = sshll.u32 %s583, 4
          %s586 = int_to_ptr.hbm [resolvable:$true] %s585
          %s587 = sshll.u32 %s578, 4
          %s588 = int_to_ptr.vmem [resolvable:$true] %s587
          %590 = dma.hbm_to_vmem [thread:$0]  %s586, 128, %s588, %s575
        $region80: #{tpu_custom_call.1} parent=71 // pred_fallthru
          _
        // Predicated region
        $region81: #{tpu_custom_call.1} parent=71 // pred_check
          %p591 = pneg %p124
        $region82: #{tpu_custom_call.1} parent=71 // pred_check_branch
          %593 = sbr.rel (%p591) target = $region84
        $region83: #{tpu_custom_call.1} parent=71 // pred_region
          %s594 = sand.u32 %s38, 1
          %s595 = scalar_lea.sflag [#allocation9], %s594
          %s596 = sand.u32 %s114, 1
          %s597 = scalar_lea.vmem [#allocation10], %s596
          %599 = vsyncadd %s595, 0
          %s600 = scalar_lea.hbm %s2, %s45
          %s602 = sshll.u32 %s600, 4
          %s603 = int_to_ptr.hbm [resolvable:$true] %s602
          %s604 = sshll.u32 %s597, 4
          %s605 = int_to_ptr.vmem [resolvable:$true] %s604
          %607 = dma.hbm_to_vmem [thread:$0]  %s603, 16, %s605, %s595
        $region84: #{tpu_custom_call.1} parent=71 // pred_fallthru
          _
      $region72: #{tpu_custom_call.1} parent=5 // pred_fallthru
        _
      %p608 = scmp.le.s32.totalorder 1, %s38
      %p609 = scmp.lt.s32.totalorder %s38, 3
      %p610 = pnand %p608, %p609
      %p611 = pneg %p610
      // Predicated region
      $region85: #{tpu_custom_call.1} parent=5 // pred_check
        _
      $region86: #{tpu_custom_call.1} parent=5 // pred_check_branch
        %613 = sbr.rel (%p610) target = $region88
      $region87: #{tpu_custom_call.1} parent=5 // pred_region
        %s614 = ssub.s32 %s38, 1
        %s615 = sand.u32 %s63, 1
        %s616 = scalar_lea.sflag [#allocation6], %s615
        %s617 = sand.u32 %s63, 1
        %s618 = smul.addr %s617, 8
        %s619 = scalar_lea.vmem [#allocation5], %s618
        // Predicated region
        $region89: #{tpu_custom_call.1} parent=87 // pred_check
          %p620 = pneg %p76
        $region90: #{tpu_custom_call.1} parent=87 // pred_check_branch
          %622 = sbr.rel (%p620) target = $region92
        $region91: #{tpu_custom_call.1} parent=87 // pred_region
          %624 = dma.done %s616, 128
        $region92: #{tpu_custom_call.1} parent=87 // pred_fallthru
          _
        %s625 = sand.u32 %s43, 1
        %s626 = scalar_lea.sflag [#allocation9], %s625
        %s627 = sand.u32 %s91, 1
        %s628 = smul.addr %s627, 8
        %s629 = scalar_lea.vmem [#allocation8], %s628
        // Predicated region
        $region93: #{tpu_custom_call.1} parent=87 // pred_check
          %p630 = pneg %p104
        $region94: #{tpu_custom_call.1} parent=87 // pred_check_branch
          %632 = sbr.rel (%p630) target = $region96
        $region95: #{tpu_custom_call.1} parent=87 // pred_region
          %634 = dma.done %s626, 128
        $region96: #{tpu_custom_call.1} parent=87 // pred_fallthru
          _
        %s635 = sand.u32 %s43, 1
        %s636 = scalar_lea.sflag [#allocation9], %s635
        %s637 = sand.u32 %s117, 1
        %s638 = scalar_lea.vmem [#allocation10], %s637
        // Predicated region
        $region97: #{tpu_custom_call.1} parent=87 // pred_check
          %p639 = pneg %p130
        $region98: #{tpu_custom_call.1} parent=87 // pred_check_branch
          %641 = sbr.rel (%p639) target = $region100
        $region99: #{tpu_custom_call.1} parent=87 // pred_region
          %643 = dma.done %s636, 16
        $region100: #{tpu_custom_call.1} parent=87 // pred_fallthru
          _
        // Predicated region
        $region101: #{tpu_custom_call.1} parent=87 // pred_check
          %p644 = pneg %p361
        $region102: #{tpu_custom_call.1} parent=87 // pred_check_branch
          %646 = sbr.rel (%p644) target = $region104
        $region103: #{tpu_custom_call.1} parent=87 // pred_region
          %648 = dma.done [#allocation12], 512
        $region104: #{tpu_custom_call.1} parent=87 // pred_fallthru
          _
        %s649 = sand.u32 %s63, 1
        %s650 = scalar_lea.sflag [#allocation6], %s649
        %s651 = sand.u32 %s63, 1
        %s652 = smul.addr %s651, 8
        %s653 = scalar_lea.vmem [#allocation5], %s652
        %p654 = pneg %p76
        %p655 = pneg %p73
        %s656 = sand.u32 %s43, 1
        %s657 = scalar_lea.sflag [#allocation9], %s656
        %s658 = sand.u32 %s91, 1
        %s659 = smul.addr %s658, 8
        %s660 = scalar_lea.vmem [#allocation8], %s659
        %p661 = pneg %p104
        %p662 = pneg %p101
        %s663 = sand.u32 %s43, 1
        %s664 = scalar_lea.sflag [#allocation9], %s663
        %s665 = sand.u32 %s117, 1
        %s666 = scalar_lea.vmem [#allocation10], %s665
        %p667 = pneg %p130
        %p668 = pneg %p127
        %p669 = pneg %p151
        %p670 = pneg %p148
        %p671 = pneg %p172
        %p672 = pneg %p169
        %p673 = pneg %p193
        %p674 = pneg %p190
        %p675 = pneg %p214
        %p676 = pneg %p211
        %p677 = pneg %p235
        %p678 = pneg %p232
        %p679 = pneg %p256
        %p680 = pneg %p253
        %p681 = pneg %p277
        %p682 = pneg %p274
        %p683 = pneg %p298
        %p684 = pneg %p295
        %p685 = pneg %p319
        %p686 = pneg %p316
        %p687 = pneg %p340
        %p688 = pneg %p337
        %p689 = pneg %p361
        %p690 = pneg %p358
        %p691 = pneg %p382
        %p692 = pneg %p379
        %p693 = pneg %p403
        %p694 = pneg %p400
        %p695 = pneg %p424
        %p696 = pneg %p421
        %p697 = pneg %p452
        %p698 = pneg %p449
        %s699 = sand.u32 %s439, 1
        %s700 = scalar_lea.sflag [#allocation7], %s699
        %s701 = sand.u32 %s439, 1
        %s702 = smul.addr %s701, 8
        %s703 = scalar_lea.vmem [#allocation13], %s702
        %p704 = pneg %p480
        %p705 = pneg %p477
        %s706 = sand.u32 %s467, 1
        %s707 = scalar_lea.sflag [#allocation15], %s706
        %s708 = sand.u32 %s467, 1
        %s709 = smul.addr %s708, 32
        %s710 = scalar_lea.vmem [#allocation14], %s709
        %p711 = scmp.eq.s32.totalorder %s48, 0
        // Predicated region
        $region105: #{tpu_custom_call.1} parent=87 // pred_check
          %p712 = pneg %p711
        $region106: #{tpu_custom_call.1} parent=87 // pred_check_branch
          %714 = sbr.rel (%p712) target = $region108
        $region107: #{tpu_custom_call.1} parent=87 // pred_region
          %v715 = vld [vmem:[%s619] sm:$0xff]
          %v716 = vld [vmem:[%s3] sm:$0x1]
          %v717 = vld [vmem:[%s4] sm:$0x1]
          %vm718 = vcmask 261120
          %v719 = vsel %vm718, %v715, 0.0
          %720 = vadd.xlane.f32.xlu0 %v719
          %v721 = vpop.xlane.xlu0 %720
          %v722 = vrcp.pop 32.0
          %v723 = vmul.f32 32.0, %v722
          %v724 = vsub.f32 1.0, %v723
          %v725 = vmul.f32 %v722, %v724
          %v726 = vadd.f32 %v722, %v725
          %vm727 = vweird.f32 %v722
          %v728 = vsel %vm727, %v722, %v726
          %v729 = vmul.f32 %v721, %v728
          %v730 = vsub.f32 %v715, %v729
          %v731 = vmul.f32 %v730, %v730
          %v732 = vsel %vm718, %v731, 0.0
          %733 = vadd.xlane.f32.xlu0 %v732
          %v734 = vpop.xlane.xlu0 %733
          %v735 = vmul.f32 %v734, %v728
          %v736 = vadd.f32 %v735, 1e-05
          %v737 = vrsqrt.pop %v736
          %v738 = vmul.f32 %v737, %v736
          %v739 = vmul.f32 %v738, %v737
          %v740 = vmul.f32 0.5, %v739
          %v741 = vsub.f32 1.5, %v740
          %v742 = vmul.f32 %v737, %v741
          %vm743 = vweird.f32 %v736
          %vm744 = vweird.f32 %v737
          %vm745 = vmor %vm743, %vm744
          %v746 = vsel %vm745, %v737, %v742
          %v747 = vmul.f32 %v730, %v746
          %v749 = vperm.slane %v716, 0
          %v751 = vmul.f32 %v747, %v749
          %v753 = vperm.slane %v717, 0
          %v755 = vadd.f32 %v751, %v753
          %v756 = vld [vmem:[%s7] sm:$0xff]
          %v757 = vld [vmem:[%s7 + $0x8] sm:$0xff]
          %v758 = vld [vmem:[%s7 + $0x10] sm:$0xff]
          %v759 = vld [vmem:[%s7 + $0x18] sm:$0xff]
          %v760 = vld [vmem:[%s8] sm:$0x1]
          %v762 = vperm.slane %v760, 0
          %v765 = vsel %vm718, %v755, 0
          %767 = vmatpush.msra.mxu0 0.0
          %768 = vmatpush.msra.mxu0 0.0
          %769 = vmatpush.msra.mxu0 0.0
          %770 = vmatpush.msra.mxu0 0.0
          %771 = vmatpush.msra.mxu0 0.0
          %772 = vmatpush.msra.mxu0 0.0
          %773 = vmatpush.msra.mxu0 0.0
          %774 = vmatpush.msra.mxu0 0.0
          %775 = vmatpush.msra.mxu0 0.0
          %776 = vmatpush.msra.mxu0 0.0
          %777 = vmatpush.msra.mxu0 0.0
          %778 = vmatpush.msra.mxu0 0.0
          %779 = vmatpush.msra.mxu0 %v759
          %780 = vmatpush.msra.mxu0 %v758
          %781 = vmatpush.msra.mxu0 %v757
          %782 = vmatpush.msra.mxu0 %v756
          %783 = vmatmul.f32.gmra.mxu0 %v765
          %v784 = vpop.f32.mrf.mxu0
          %v785 = vadd.f32 %v762, %v784
          %786 = vdwg.mxu0
          %787 = vst.msk [vmem:[#allocation2] sm:$0xff] %vm718, %v785
          %789 = vrot.lane.b32.xlu0 %v785, 96
          %v790 = vpop.permute.xlu0 %789
          %792 = vst.msk [vmem:[#allocation3] sm:$0xff] %vm718, %v790
        $region108: #{tpu_custom_call.1} parent=87 // pred_fallthru
          _
        %v793 = vld [vmem:[%s629] sm:$0xff]
        %v794 = vld [vmem:[%s3] sm:$0x1]
        %v795 = vld [vmem:[%s4] sm:$0x1]
        %vm796 = vcmask 261120
        %v797 = vsel %vm796, %v793, 0.0
        %798 = vadd.xlane.f32.xlu0 %v797
        %v799 = vpop.xlane.xlu0 %798
        %v800 = vrcp.pop 32.0
        %v801 = vmul.f32 32.0, %v800
        %v802 = vsub.f32 1.0, %v801
        %v803 = vmul.f32 %v800, %v802
        %v804 = vadd.f32 %v800, %v803
        %vm805 = vweird.f32 %v800
        %v806 = vsel %vm805, %v800, %v804
        %v807 = vmul.f32 %v799, %v806
        %v808 = vsub.f32 %v793, %v807
        %v809 = vmul.f32 %v808, %v808
        %v810 = vsel %vm796, %v809, 0.0
        %811 = vadd.xlane.f32.xlu0 %v810
        %v812 = vpop.xlane.xlu0 %811
        %v813 = vmul.f32 %v812, %v806
        %v814 = vadd.f32 %v813, 1e-05
        %v815 = vrsqrt.pop %v814
        %v816 = vmul.f32 %v815, %v814
        %v817 = vmul.f32 %v816, %v815
        %v818 = vmul.f32 0.5, %v817
        %v819 = vsub.f32 1.5, %v818
        %v820 = vmul.f32 %v815, %v819
        %vm821 = vweird.f32 %v814
        %vm822 = vweird.f32 %v815
        %vm823 = vmor %vm821, %vm822
        %v824 = vsel %vm823, %v815, %v820
        %v825 = vmul.f32 %v808, %v824
        %v827 = vperm.slane %v794, 0
        %v829 = vmul.f32 %v825, %v827
        %v831 = vperm.slane %v795, 0
        %v833 = vadd.f32 %v829, %v831
        %v834 = vld [vmem:[%s5] sm:$0xff]
        %v835 = vld [vmem:[%s5 + $0x8] sm:$0xff]
        %v836 = vld [vmem:[%s5 + $0x10] sm:$0xff]
        %v837 = vld [vmem:[%s5 + $0x18] sm:$0xff]
        %v838 = vld [vmem:[%s6] sm:$0x1]
        %v840 = vperm.slane %v838, 0
        %v843 = vsel %vm796, %v833, 0
        %845 = vmatpush.msra.mxu0 0.0
        %846 = vmatpush.msra.mxu0 0.0
        %847 = vmatpush.msra.mxu0 0.0
        %848 = vmatpush.msra.mxu0 0.0
        %849 = vmatpush.msra.mxu0 0.0
        %850 = vmatpush.msra.mxu0 0.0
        %851 = vmatpush.msra.mxu0 0.0
        %852 = vmatpush.msra.mxu0 0.0
        %853 = vmatpush.msra.mxu0 0.0
        %854 = vmatpush.msra.mxu0 0.0
        %855 = vmatpush.msra.mxu0 0.0
        %856 = vmatpush.msra.mxu0 0.0
        %857 = vmatpush.msra.mxu0 %v837
        %858 = vmatpush.msra.mxu0 %v836
        %859 = vmatpush.msra.mxu0 %v835
        %860 = vmatpush.msra.mxu0 %v834
        %861 = vmatmul.f32.gmra.mxu0 %v843
        %v862 = vpop.f32.mrf.mxu0
        %v863 = vadd.f32 %v840, %v862
        %864 = vdwg.mxu0
        %v865 = vmul.f32 %v863, 0.35355338
        %v866 = vld [vmem:[%s638] sm:$0x1]
        %v867 = vld [vmem:[#allocation2] sm:$0xff]
        %v869 = vperm.slane %v866, 0
        %vm871 = vcmask 64512
        %v873 = vsel %vm871, %v865, 0
        %v876 = vsel %vm871, %v867, 0
        %878 = vmatpush.xpose.msra.mxu0 0.0
        %879 = vmatpush.xpose.msra.mxu0 0.0
        %880 = vmatpush.xpose.msra.mxu0 0.0
        %881 = vmatpush.xpose.msra.mxu0 0.0
        %882 = vmatpush.xpose.msra.mxu0 0.0
        %883 = vmatpush.xpose.msra.mxu0 0.0
        %884 = vmatpush.xpose.msra.mxu0 0.0
        %885 = vmatpush.xpose.msra.mxu0 0.0
        %886 = vmatpush.xpose.msra.mxu0 0.0
        %887 = vmatpush.xpose.msra.mxu0 0.0
        %888 = vmatpush.xpose.msra.mxu0 0.0
        %889 = vmatpush.xpose.msra.mxu0 0.0
        %890 = vmatpush.xpose.msra.mxu0 0.0
        %891 = vmatpush.xpose.msra.mxu0 0.0
        %892 = vmatpush.xpose.msra.mxu0 0.0
        %893 = vmatpush.xpose.msra.mxu0 %v876
        %894 = vmatmul.f32.gmra.mxu0 %v873
        %v895 = vpop.f32.mrf.mxu0
        %v896 = vadd.f32 %v869, %v895
        %897 = vdwg.mxu0
        %v898 = vsel %vm871, %v896, -inf
        %899 = vmax.xlane.f32.xlu0 %v898
        %v900 = vpop.xlane.xlu0 %899
        %v901 = vsub.f32 %v896, %v900
        %v902 = vmul.f32 %v901, 1.442695
        %v903 = vpow.pop %v902
        %v904 = vsel %vm871, %v903, 0.0
        %905 = vadd.xlane.f32.xlu0 %v904
        %v906 = vpop.xlane.xlu0 %905
        %v907 = vrcp.pop %v906
        %v908 = vmul.f32 %v906, %v907
        %v909 = vsub.f32 1.0, %v908
        %v910 = vmul.f32 %v907, %v909
        %v911 = vadd.f32 %v907, %v910
        %vm912 = vweird.f32 %v906
        %vm913 = vweird.f32 %v907
        %vm914 = vmor %vm912, %vm913
        %v915 = vsel %vm914, %v907, %v911
        %v916 = vand.u32 2147483647, %v906
        %vm917 = vcmp.eq.f32.partialorder %v916, 8.507059e+37
        %v918 = vand.u32 %v906, 2147483648
        %v919 = vor.u32 1.1754944e-38, %v918
        %v920 = vsel %vm917, %v919, %v915
        %v921 = vmul.f32 1.0, %v920
        %v922 = vmul.f32 %v903, %v921
        %923 = vst.msk [vmem:[%s710] sm:$0xff] %vm871, %v922
        %v924 = vld [vmem:[#allocation3] sm:$0xff]
        %v926 = vsel %vm871, %v922, 0
        %928 = vmatpush.msra.mxu0 0.0
        %929 = vmatpush.msra.mxu0 0.0
        %930 = vmatpush.msra.mxu0 0.0
        %931 = vmatpush.msra.mxu0 0.0
        %932 = vmatpush.msra.mxu0 0.0
        %933 = vmatpush.msra.mxu0 0.0
        %934 = vmatpush.msra.mxu0 0.0
        %935 = vmatpush.msra.mxu0 0.0
        %936 = vmatpush.msra.mxu0 0.0
        %937 = vmatpush.msra.mxu0 0.0
        %938 = vmatpush.msra.mxu0 0.0
        %939 = vmatpush.msra.mxu0 0.0
        %940 = vmatpush.msra.mxu0 0.0
        %941 = vmatpush.msra.mxu0 0.0
        %942 = vmatpush.msra.mxu0 0.0
        %943 = vmatpush.msra.mxu0 %v924
        %944 = vmatmul.f32.gmra.mxu0 %v926
        %v945 = vpop.f32.mrf.mxu0
        %v946 = vadd.f32 0.0, %v945
        %947 = vdwg.mxu0
        %948 = vst.msk [vmem:[#allocation4] sm:$0xff] %vm871, %v946
        %v949 = vld [vmem:[#allocation2] sm:$0xff]
        %950 = vrot.lane.b32.xlu0 %v865, 120
        %v951 = vpop.permute.xlu0 %950
        %953 = vrot.lane.b32.xlu0 %v949, 120
        %v954 = vpop.permute.xlu0 %953
        %v955 = vsel %vm871, %v951, 0
        %v957 = vsel %vm871, %v954, 0
        %959 = vmatpush.xpose.msra.mxu0 0.0
        %960 = vmatpush.xpose.msra.mxu0 0.0
        %961 = vmatpush.xpose.msra.mxu0 0.0
        %962 = vmatpush.xpose.msra.mxu0 0.0
        %963 = vmatpush.xpose.msra.mxu0 0.0
        %964 = vmatpush.xpose.msra.mxu0 0.0
        %965 = vmatpush.xpose.msra.mxu0 0.0
        %966 = vmatpush.xpose.msra.mxu0 0.0
        %967 = vmatpush.xpose.msra.mxu0 0.0
        %968 = vmatpush.xpose.msra.mxu0 0.0
        %969 = vmatpush.xpose.msra.mxu0 0.0
        %970 = vmatpush.xpose.msra.mxu0 0.0
        %971 = vmatpush.xpose.msra.mxu0 0.0
        %972 = vmatpush.xpose.msra.mxu0 0.0
        %973 = vmatpush.xpose.msra.mxu0 0.0
        %974 = vmatpush.xpose.msra.mxu0 %v957
        %975 = vmatmul.f32.gmra.mxu0 %v955
        %v976 = vpop.f32.mrf.mxu0
        %v977 = vadd.f32 %v869, %v976
        %978 = vdwg.mxu0
        %v979 = vsel %vm871, %v977, -inf
        %980 = vmax.xlane.f32.xlu0 %v979
        %v981 = vpop.xlane.xlu0 %980
        %v982 = vsub.f32 %v977, %v981
        %v983 = vmul.f32 %v982, 1.442695
        %v984 = vpow.pop %v983
        %v985 = vsel %vm871, %v984, 0.0
        %986 = vadd.xlane.f32.xlu0 %v985
        %v987 = vpop.xlane.xlu0 %986
        %v988 = vrcp.pop %v987
        %v989 = vmul.f32 %v987, %v988
        %v990 = vsub.f32 1.0, %v989
        %v991 = vmul.f32 %v988, %v990
        %v992 = vadd.f32 %v988, %v991
        %vm993 = vweird.f32 %v987
        %vm994 = vweird.f32 %v988
        %vm995 = vmor %vm993, %vm994
        %v996 = vsel %vm995, %v988, %v992
        %v997 = vand.u32 2147483647, %v987
        %vm998 = vcmp.eq.f32.partialorder %v997, 8.507059e+37
        %v999 = vand.u32 %v987, 2147483648
        %v1000 = vor.u32 1.1754944e-38, %v999
        %v1001 = vsel %vm998, %v1000, %v996
        %v1002 = vmul.f32 1.0, %v1001
        %v1003 = vmul.f32 %v984, %v1002
        %s1004 = scalar_lea.vmem %s710, 8 [#allocation14]
        %1005 = vst.msk [vmem:[%s1004] sm:$0xff] %vm871, %v1003
        %v1006 = vld [vmem:[#allocation3] sm:$0xff]
        %1008 = vrot.lane.b32.xlu0 %v1006, 120
        %v1009 = vpop.permute.xlu0 %1008
        %v1012 = vsel %vm871, %v1003, 0
        %1014 = vmatpush.msra.mxu0 0.0
        %1015 = vmatpush.msra.mxu0 0.0
        %1016 = vmatpush.msra.mxu0 0.0
        %1017 = vmatpush.msra.mxu0 0.0
        %1018 = vmatpush.msra.mxu0 0.0
        %1019 = vmatpush.msra.mxu0 0.0
        %1020 = vmatpush.msra.mxu0 0.0
        %1021 = vmatpush.msra.mxu0 0.0
        %1022 = vmatpush.msra.mxu0 0.0
        %1023 = vmatpush.msra.mxu0 0.0
        %1024 = vmatpush.msra.mxu0 0.0
        %1025 = vmatpush.msra.mxu0 0.0
        %1026 = vmatpush.msra.mxu0 0.0
        %1027 = vmatpush.msra.mxu0 0.0
        %1028 = vmatpush.msra.mxu0 0.0
        %1029 = vmatpush.msra.mxu0 %v1009
        %1030 = vmatmul.f32.gmra.mxu0 %v1012
        %v1031 = vpop.f32.mrf.mxu0
        %v1032 = vadd.f32 0.0, %v1031
        %1033 = vdwg.mxu0
        %1035 = vrot.lane.b32.xlu0 %v1032, 8
        %v1036 = vpop.permute.xlu0 %1035
        %vm1038 = vcmask 130112
        %1039 = vst.msk [vmem:[#allocation4] sm:$0xff] %vm1038, %v1036
        %v1040 = vld [vmem:[#allocation2] sm:$0xff]
        %1041 = vrot.lane.b32.xlu0 %v865, 112
        %v1042 = vpop.permute.xlu0 %1041
        %1044 = vrot.lane.b32.xlu0 %v1040, 112
        %v1045 = vpop.permute.xlu0 %1044
        %v1046 = vsel %vm871, %v1042, 0
        %v1048 = vsel %vm871, %v1045, 0
        %1050 = vmatpush.xpose.msra.mxu0 0.0
        %1051 = vmatpush.xpose.msra.mxu0 0.0
        %1052 = vmatpush.xpose.msra.mxu0 0.0
        %1053 = vmatpush.xpose.msra.mxu0 0.0
        %1054 = vmatpush.xpose.msra.mxu0 0.0
        %1055 = vmatpush.xpose.msra.mxu0 0.0
        %1056 = vmatpush.xpose.msra.mxu0 0.0
        %1057 = vmatpush.xpose.msra.mxu0 0.0
        %1058 = vmatpush.xpose.msra.mxu0 0.0
        %1059 = vmatpush.xpose.msra.mxu0 0.0
        %1060 = vmatpush.xpose.msra.mxu0 0.0
        %1061 = vmatpush.xpose.msra.mxu0 0.0
        %1062 = vmatpush.xpose.msra.mxu0 0.0
        %1063 = vmatpush.xpose.msra.mxu0 0.0
        %1064 = vmatpush.xpose.msra.mxu0 0.0
        %1065 = vmatpush.xpose.msra.mxu0 %v1048
        %1066 = vmatmul.f32.gmra.mxu0 %v1046
        %v1067 = vpop.f32.mrf.mxu0
        %v1068 = vadd.f32 %v869, %v1067
        %1069 = vdwg.mxu0
        %v1070 = vsel %vm871, %v1068, -inf
        %1071 = vmax.xlane.f32.xlu0 %v1070
        %v1072 = vpop.xlane.xlu0 %1071
        %v1073 = vsub.f32 %v1068, %v1072
        %v1074 = vmul.f32 %v1073, 1.442695
        %v1075 = vpow.pop %v1074
        %v1076 = vsel %vm871, %v1075, 0.0
        %1077 = vadd.xlane.f32.xlu0 %v1076
        %v1078 = vpop.xlane.xlu0 %1077
        %v1079 = vrcp.pop %v1078
        %v1080 = vmul.f32 %v1078, %v1079
        %v1081 = vsub.f32 1.0, %v1080
        %v1082 = vmul.f32 %v1079, %v1081
        %v1083 = vadd.f32 %v1079, %v1082
        %vm1084 = vweird.f32 %v1078
        %vm1085 = vweird.f32 %v1079
        %vm1086 = vmor %vm1084, %vm1085
        %v1087 = vsel %vm1086, %v1079, %v1083
        %v1088 = vand.u32 2147483647, %v1078
        %vm1089 = vcmp.eq.f32.partialorder %v1088, 8.507059e+37
        %v1090 = vand.u32 %v1078, 2147483648
        %v1091 = vor.u32 1.1754944e-38, %v1090
        %v1092 = vsel %vm1089, %v1091, %v1087
        %v1093 = vmul.f32 1.0, %v1092
        %v1094 = vmul.f32 %v1075, %v1093
        %s1095 = scalar_lea.vmem %s710, 16 [#allocation14]
        %1096 = vst.msk [vmem:[%s1095] sm:$0xff] %vm871, %v1094
        %v1097 = vld [vmem:[#allocation3] sm:$0xff]
        %1099 = vrot.lane.b32.xlu0 %v1097, 112
        %v1100 = vpop.permute.xlu0 %1099
        %v1103 = vsel %vm871, %v1094, 0
        %1105 = vmatpush.msra.mxu0 0.0
        %1106 = vmatpush.msra.mxu0 0.0
        %1107 = vmatpush.msra.mxu0 0.0
        %1108 = vmatpush.msra.mxu0 0.0
        %1109 = vmatpush.msra.mxu0 0.0
        %1110 = vmatpush.msra.mxu0 0.0
        %1111 = vmatpush.msra.mxu0 0.0
        %1112 = vmatpush.msra.mxu0 0.0
        %1113 = vmatpush.msra.mxu0 0.0
        %1114 = vmatpush.msra.mxu0 0.0
        %1115 = vmatpush.msra.mxu0 0.0
        %1116 = vmatpush.msra.mxu0 0.0
        %1117 = vmatpush.msra.mxu0 0.0
        %1118 = vmatpush.msra.mxu0 0.0
        %1119 = vmatpush.msra.mxu0 0.0
        %1120 = vmatpush.msra.mxu0 %v1100
        %1121 = vmatmul.f32.gmra.mxu0 %v1103
        %v1122 = vpop.f32.mrf.mxu0
        %v1123 = vadd.f32 0.0, %v1122
        %1124 = vdwg.mxu0
        %1126 = vrot.lane.b32.xlu0 %v1123, 16
        %v1127 = vpop.permute.xlu0 %1126
        %vm1129 = vcmask 195712
        %1130 = vst.msk [vmem:[#allocation4] sm:$0xff] %vm1129, %v1127
        %v1131 = vld [vmem:[#allocation2] sm:$0xff]
        %1132 = vrot.lane.b32.xlu0 %v865, 104
        %v1133 = vpop.permute.xlu0 %1132
        %1135 = vrot.lane.b32.xlu0 %v1131, 104
        %v1136 = vpop.permute.xlu0 %1135
        %v1137 = vsel %vm871, %v1133, 0
        %v1139 = vsel %vm871, %v1136, 0
        %1141 = vmatpush.xpose.msra.mxu0 0.0
        %1142 = vmatpush.xpose.msra.mxu0 0.0
        %1143 = vmatpush.xpose.msra.mxu0 0.0
        %1144 = vmatpush.xpose.msra.mxu0 0.0
        %1145 = vmatpush.xpose.msra.mxu0 0.0
        %1146 = vmatpush.xpose.msra.mxu0 0.0
        %1147 = vmatpush.xpose.msra.mxu0 0.0
        %1148 = vmatpush.xpose.msra.mxu0 0.0
        %1149 = vmatpush.xpose.msra.mxu0 0.0
        %1150 = vmatpush.xpose.msra.mxu0 0.0
        %1151 = vmatpush.xpose.msra.mxu0 0.0
        %1152 = vmatpush.xpose.msra.mxu0 0.0
        %1153 = vmatpush.xpose.msra.mxu0 0.0
        %1154 = vmatpush.xpose.msra.mxu0 0.0
        %1155 = vmatpush.xpose.msra.mxu0 0.0
        %1156 = vmatpush.xpose.msra.mxu0 %v1139
        %1157 = vmatmul.f32.gmra.mxu0 %v1137
        %v1158 = vpop.f32.mrf.mxu0
        %v1159 = vadd.f32 %v869, %v1158
        %1160 = vdwg.mxu0
        %v1161 = vsel %vm871, %v1159, -inf
        %1162 = vmax.xlane.f32.xlu0 %v1161
        %v1163 = vpop.xlane.xlu0 %1162
        %v1164 = vsub.f32 %v1159, %v1163
        %v1165 = vmul.f32 %v1164, 1.442695
        %v1166 = vpow.pop %v1165
        %v1167 = vsel %vm871, %v1166, 0.0
        %1168 = vadd.xlane.f32.xlu0 %v1167
        %v1169 = vpop.xlane.xlu0 %1168
        %v1170 = vrcp.pop %v1169
        %v1171 = vmul.f32 %v1169, %v1170
        %v1172 = vsub.f32 1.0, %v1171
        %v1173 = vmul.f32 %v1170, %v1172
        %v1174 = vadd.f32 %v1170, %v1173
        %vm1175 = vweird.f32 %v1169
        %vm1176 = vweird.f32 %v1170
        %vm1177 = vmor %vm1175, %vm1176
        %v1178 = vsel %vm1177, %v1170, %v1174
        %v1179 = vand.u32 2147483647, %v1169
        %vm1180 = vcmp.eq.f32.partialorder %v1179, 8.507059e+37
        %v1181 = vand.u32 %v1169, 2147483648
        %v1182 = vor.u32 1.1754944e-38, %v1181
        %v1183 = vsel %vm1180, %v1182, %v1178
        %v1184 = vmul.f32 1.0, %v1183
        %v1185 = vmul.f32 %v1166, %v1184
        %s1186 = scalar_lea.vmem %s710, 24 [#allocation14]
        %1187 = vst.msk [vmem:[%s1186] sm:$0xff] %vm871, %v1185
        %v1188 = vld [vmem:[#allocation3] sm:$0xff]
        %1190 = vrot.lane.b32.xlu0 %v1188, 104
        %v1191 = vpop.permute.xlu0 %1190
        %v1194 = vsel %vm871, %v1185, 0
        %1196 = vmatpush.msra.mxu0 0.0
        %1197 = vmatpush.msra.mxu0 0.0
        %1198 = vmatpush.msra.mxu0 0.0
        %1199 = vmatpush.msra.mxu0 0.0
        %1200 = vmatpush.msra.mxu0 0.0
        %1201 = vmatpush.msra.mxu0 0.0
        %1202 = vmatpush.msra.mxu0 0.0
        %1203 = vmatpush.msra.mxu0 0.0
        %1204 = vmatpush.msra.mxu0 0.0
        %1205 = vmatpush.msra.mxu0 0.0
        %1206 = vmatpush.msra.mxu0 0.0
        %1207 = vmatpush.msra.mxu0 0.0
        %1208 = vmatpush.msra.mxu0 0.0
        %1209 = vmatpush.msra.mxu0 0.0
        %1210 = vmatpush.msra.mxu0 0.0
        %1211 = vmatpush.msra.mxu0 %v1191
        %1212 = vmatmul.f32.gmra.mxu0 %v1194
        %v1213 = vpop.f32.mrf.mxu0
        %v1214 = vadd.f32 0.0, %v1213
        %1215 = vdwg.mxu0
        %1217 = vrot.lane.b32.xlu0 %v1214, 24
        %v1218 = vpop.permute.xlu0 %1217
        %vm1220 = vcmask 261312
        %1221 = vst.msk [vmem:[#allocation4] sm:$0xff] %vm1220, %v1218
        %v1222 = vld [vmem:[#allocation4] sm:$0xff]
        %v1223 = vld [vmem:[%s9] sm:$0xff]
        %v1224 = vld [vmem:[%s9 + $0x8] sm:$0xff]
        %v1225 = vld [vmem:[%s9 + $0x10] sm:$0xff]
        %v1226 = vld [vmem:[%s9 + $0x18] sm:$0xff]
        %v1227 = vld [vmem:[%s10] sm:$0x1]
        %v1229 = vperm.slane %v1227, 0
        %v1232 = vsel %vm796, %v1222, 0
        %1234 = vmatpush.msra.mxu0 0.0
        %1235 = vmatpush.msra.mxu0 0.0
        %1236 = vmatpush.msra.mxu0 0.0
        %1237 = vmatpush.msra.mxu0 0.0
        %1238 = vmatpush.msra.mxu0 0.0
        %1239 = vmatpush.msra.mxu0 0.0
        %1240 = vmatpush.msra.mxu0 0.0
        %1241 = vmatpush.msra.mxu0 0.0
        %1242 = vmatpush.msra.mxu0 0.0
        %1243 = vmatpush.msra.mxu0 0.0
        %1244 = vmatpush.msra.mxu0 0.0
        %1245 = vmatpush.msra.mxu0 0.0
        %1246 = vmatpush.msra.mxu0 %v1226
        %1247 = vmatpush.msra.mxu0 %v1225
        %1248 = vmatpush.msra.mxu0 %v1224
        %1249 = vmatpush.msra.mxu0 %v1223
        %1250 = vmatmul.f32.gmra.mxu0 %v1232
        %v1251 = vpop.f32.mrf.mxu0
        %v1252 = vadd.f32 %v1229, %v1251
        %1253 = vdwg.mxu0
        %v1254 = vadd.f32 %v1252, %v793
        %v1255 = vld [vmem:[%s11] sm:$0x1]
        %v1256 = vld [vmem:[%s12] sm:$0x1]
        %v1257 = vsel %vm796, %v1254, 0.0
        %1258 = vadd.xlane.f32.xlu0 %v1257
        %v1259 = vpop.xlane.xlu0 %1258
        %v1260 = vmul.f32 %v1259, %v806
        %v1261 = vsub.f32 %v1254, %v1260
        %v1262 = vmul.f32 %v1261, %v1261
        %v1263 = vsel %vm796, %v1262, 0.0
        %1264 = vadd.xlane.f32.xlu0 %v1263
        %v1265 = vpop.xlane.xlu0 %1264
        %v1266 = vmul.f32 %v1265, %v806
        %v1267 = vadd.f32 %v1266, 1e-05
        %v1268 = vrsqrt.pop %v1267
        %v1269 = vmul.f32 %v1268, %v1267
        %v1270 = vmul.f32 %v1269, %v1268
        %v1271 = vmul.f32 0.5, %v1270
        %v1272 = vsub.f32 1.5, %v1271
        %v1273 = vmul.f32 %v1268, %v1272
        %vm1274 = vweird.f32 %v1267
        %vm1275 = vweird.f32 %v1268
        %vm1276 = vmor %vm1274, %vm1275
        %v1277 = vsel %vm1276, %v1268, %v1273
        %v1278 = vmul.f32 %v1261, %v1277
        %v1280 = vperm.slane %v1255, 0
        %v1282 = vmul.f32 %v1278, %v1280
        %v1284 = vperm.slane %v1256, 0
        %v1286 = vadd.f32 %v1282, %v1284
        %v1287 = vld [vmem:[#allocation11] sm:$0xff]
        %v1288 = vld [vmem:[#allocation11 + $0x8] sm:$0xff]
        %v1289 = vld [vmem:[#allocation11 + $0x10] sm:$0xff]
        %v1290 = vld [vmem:[#allocation11 + $0x18] sm:$0xff]
        %v1291 = vld [vmem:[%s14] sm:$0x1]
        %v1293 = vperm.slane %v1291, 0
        %v1296 = vsel %vm796, %v1286, 0
        %1298 = vmatpush.msra.mxu0 0.0
        %1299 = vmatpush.msra.mxu0 0.0
        %1300 = vmatpush.msra.mxu0 0.0
        %1301 = vmatpush.msra.mxu0 0.0
        %1302 = vmatpush.msra.mxu0 0.0
        %1303 = vmatpush.msra.mxu0 0.0
        %1304 = vmatpush.msra.mxu0 0.0
        %1305 = vmatpush.msra.mxu0 0.0
        %1306 = vmatpush.msra.mxu0 0.0
        %1307 = vmatpush.msra.mxu0 0.0
        %1308 = vmatpush.msra.mxu0 0.0
        %1309 = vmatpush.msra.mxu0 0.0
        %1310 = vmatpush.msra.mxu0 %v1290
        %1311 = vmatpush.msra.mxu0 %v1289
        %1312 = vmatpush.msra.mxu0 %v1288
        %1313 = vmatpush.msra.mxu0 %v1287
        %1314 = vmatmul.f32.gmra.mxu0 %v1296
        %v1315 = vpop.f32.mrf.mxu0
        %v1316 = vadd.f32 %v1293, %v1315
        %1317 = vdwg.mxu0
        %v1318 = vmax.f32 %v1316, 0.0
        %v1319 = vld [vmem:[%s15] sm:$0xff]
        %v1320 = vld [vmem:[%s15 + $0x8] sm:$0xff]
        %v1321 = vld [vmem:[%s15 + $0x10] sm:$0xff]
        %v1322 = vld [vmem:[%s15 + $0x18] sm:$0xff]
        %v1323 = vld [vmem:[%s15 + $0x20] sm:$0xff]
        %v1324 = vld [vmem:[%s15 + $0x28] sm:$0xff]
        %v1325 = vld [vmem:[%s15 + $0x30] sm:$0xff]
        %v1326 = vld [vmem:[%s15 + $0x38] sm:$0xff]
        %v1327 = vld [vmem:[%s16] sm:$0x1]
        %v1329 = vperm.slane %v1327, 0
        %vm1331 = vcmask 523264
        %v1333 = vsel %vm1331, %v1318, 0
        %1335 = vmatpush.msra.mxu0 0.0
        %1336 = vmatpush.msra.mxu0 0.0
        %1337 = vmatpush.msra.mxu0 0.0
        %1338 = vmatpush.msra.mxu0 0.0
        %1339 = vmatpush.msra.mxu0 0.0
        %1340 = vmatpush.msra.mxu0 0.0
        %1341 = vmatpush.msra.mxu0 0.0
        %1342 = vmatpush.msra.mxu0 0.0
        %1343 = vmatpush.msra.mxu0 %v1326
        %1344 = vmatpush.msra.mxu0 %v1325
        %1345 = vmatpush.msra.mxu0 %v1324
        %1346 = vmatpush.msra.mxu0 %v1323
        %1347 = vmatpush.msra.mxu0 %v1322
        %1348 = vmatpush.msra.mxu0 %v1321
        %1349 = vmatpush.msra.mxu0 %v1320
        %1350 = vmatpush.msra.mxu0 %v1319
        %1351 = vmatmul.f32.gmra.mxu0 %v1333
        %v1352 = vpop.f32.mrf.mxu0
        %v1353 = vadd.f32 %v1329, %v1352
        %1354 = vdwg.mxu0
        %v1355 = vadd.f32 %v1353, %v1254
        %1356 = vst.msk [vmem:[%s703] sm:$0xff] %vm796, %v1355
        %s1357 = sand.u32 %s439, 1
        %s1358 = scalar_lea.sflag [#allocation7], %s1357
        %s1359 = sand.u32 %s439, 1
        %s1360 = smul.addr %s1359, 8
        %s1361 = scalar_lea.vmem [#allocation13], %s1360
        %s1362 = sand.u32 %s467, 1
        %s1363 = scalar_lea.sflag [#allocation15], %s1362
        %s1364 = sand.u32 %s467, 1
        %s1365 = smul.addr %s1364, 32
        %s1366 = scalar_lea.vmem [#allocation14], %s1365
        // Predicated region
        $region109: #{tpu_custom_call.1} parent=87 // pred_check
          %p1367 = pneg %p449
        $region110: #{tpu_custom_call.1} parent=87 // pred_check_branch
          %1369 = sbr.rel (%p1367) target = $region112
        $region111: #{tpu_custom_call.1} parent=87 // pred_region
          %1371 = vsyncadd %s1358, 0
          %s1372 = sadd.s32 %s48, %s47
          %s1373 = smul.addr %s1372, 8
          %s1374 = scalar_lea.hbm %s17, %s1373
          %s1376 = sshll.u32 %s1361, 4
          %s1377 = int_to_ptr.vmem [resolvable:$true] %s1376
          %s1378 = sshll.u32 %s1374, 4
          %s1379 = int_to_ptr.hbm [resolvable:$true] %s1378
          %1381 = dma.vmem_to_hbm [thread:$0]  %s1377, 128, %s1379, %s1358
        $region112: #{tpu_custom_call.1} parent=87 // pred_fallthru
          _
        // Predicated region
        $region113: #{tpu_custom_call.1} parent=87 // pred_check
          %p1382 = pneg %p477
        $region114: #{tpu_custom_call.1} parent=87 // pred_check_branch
          %1384 = sbr.rel (%p1382) target = $region116
        $region115: #{tpu_custom_call.1} parent=87 // pred_region
          %1386 = vsyncadd %s1363, 0
          %s1387 = smul.addr %s47, 4
          %s1388 = sadd.s32 %s48, %s1387
          %s1389 = smul.addr %s1388, 8
          %s1390 = scalar_lea.hbm %s18, %s1389
          %s1391 = sshll.u32 %s1366, 4
          %s1392 = int_to_ptr.vmem [resolvable:$true] %s1391
          %s1393 = sshll.u32 %s1390, 4
          %s1394 = int_to_ptr.hbm [resolvable:$true] %s1393
          %1399 = dma.vmem_to_hbm [thread:$0]  %s1392, 512, %s1394, %s1363, 128, 128, 8
        $region116: #{tpu_custom_call.1} parent=87 // pred_fallthru
          _
      $region88: #{tpu_custom_call.1} parent=5 // pred_fallthru
        _
      %p1400 = scmp.le.s32.totalorder 2, %s38
      // Predicated region
      $region117: #{tpu_custom_call.1} parent=5 // pred_check
        %p1401 = pneg %p1400
      $region118: #{tpu_custom_call.1} parent=5 // pred_check_branch
        %1403 = sbr.rel (%p1401) target = $region120
      $region119: #{tpu_custom_call.1} parent=5 // pred_region
        %s1404 = ssub.s32 %s38, 2
        // Predicated region
        $region121: #{tpu_custom_call.1} parent=119 // pred_check
          %p1405 = pneg %p455
        $region122: #{tpu_custom_call.1} parent=119 // pred_check_branch
          %1407 = sbr.rel (%p1405) target = $region124
        $region123: #{tpu_custom_call.1} parent=119 // pred_region
          %s1408 = sand.u32 %s440, 1
          %s1409 = scalar_lea.sflag [#allocation7], %s1408
          %s1410 = sand.u32 %s440, 1
          %s1411 = smul.addr %s1410, 8
          %s1412 = scalar_lea.vmem [#allocation13], %s1411
          %1414 = dma.done %s1409, 128
        $region124: #{tpu_custom_call.1} parent=119 // pred_fallthru
          _
        // Predicated region
        $region125: #{tpu_custom_call.1} parent=119 // pred_check
          %p1415 = pneg %p483
        $region126: #{tpu_custom_call.1} parent=119 // pred_check_branch
          %1417 = sbr.rel (%p1415) target = $region128
        $region127: #{tpu_custom_call.1} parent=119 // pred_region
          %s1418 = sand.u32 %s468, 1
          %s1419 = scalar_lea.sflag [#allocation15], %s1418
          %s1420 = sand.u32 %s468, 1
          %s1421 = smul.addr %s1420, 32
          %s1422 = scalar_lea.vmem [#allocation14], %s1421
          %1424 = dma.done %s1419, 512
        $region128: #{tpu_custom_call.1} parent=119 // pred_fallthru
          _
      $region120: #{tpu_custom_call.1} parent=5 // pred_fallthru
        _
    $region6: #{tpu_custom_call.1} parent=1 // loop_footer
      %s42 = sadd.s32 1, %s38
    $region7: #{tpu_custom_call.1} parent=1 // loop_footer_branch
      %37 = sbr.rel target = $region3
    $region8: #{tpu_custom_call.1} parent=1 // loop_exit
      _
    %1425 = vsyncpa [#allocation6], 1
    %s1426 = scalar_lea.sflag [#allocation6], 1
    %1427 = vsyncpa %s1426, 1
    %1428 = vsyncpa [#allocation9], 1
    %s1429 = scalar_lea.sflag [#allocation9], 1
    %1430 = vsyncpa %s1429, 1
    %1431 = vsyncpa [#allocation12], 1
    %1432 = vsyncpa [#allocation7], 1
    %s1433 = scalar_lea.sflag [#allocation7], 1
    %1434 = vsyncpa %s1433, 1
    %1435 = vsyncpa [#allocation15], 1
    %s1436 = scalar_lea.sflag [#allocation15], 1
    %1437 = vsyncpa %s1436, 1

</llo_original>
